<compile_context>
chip_gen: v7x
topology: tpu7x:2x2x1
jax: 0.10.0
libtpu: 0.0.40
codegen_flags: <defaults>
</compile_context>

<pallas_src>
import math

import jax
import jax.numpy as jnp
from jax.experimental import pallas as pl
from jax.experimental.pallas import tpu as pltpu

# ---- model hyper-parameters (small, consistent with args) ----
B = 2            # train_batch_size
S = 16           # max_seq_length
H = 64           # hidden_size
N_HEADS = 2      # n_heads
HEAD_DIM = H // N_HEADS
INNER = 128      # inner_size
N_LAYERS = 2     # n_layers
LN_EPS = 1e-12   # layer_norm_eps
INIT_RANGE = 0.02

BS = B * S                      # 32 activation rows
BHS = B * N_HEADS * S           # 64 head-stacked attention rows (row = h*B*S + b*S + s)
NEG_BIG = -1e9                  # off-block mask value (exp underflows to exactly 0 in f32)

# bias / LayerNorm slab layout: one 128-lane row per vector (all slices start at lane 0)
# rows 0..5: bq_h0, bq_h1, bk_h0, bk_h1, bv_h0, bv_h1   (lanes 0:HEAD_DIM, bq pre-scaled)
ROW_BO, ROW_G1, ROW_BE1, ROW_B1, ROW_B2, ROW_G2, ROW_BE2 = 6, 7, 8, 9, 10, 11, 12
NVEC = 16


def _layernorm(x, gamma, beta):
    # one-pass statistics: var = E[x^2] - mu^2 (single extra cross-lane reduction)
    mu = jnp.mean(x, axis=-1, keepdims=True)
    var = jnp.maximum(jnp.mean(x * x, axis=-1, keepdims=True) - mu * mu, 0.0)
    return (x - mu) * jax.lax.rsqrt(var + LN_EPS) * gamma + beta


def _gelu(x):
    # TODO(synk): RecBole ACT2FN['gelu'] is the exact erf-GELU; the tanh approximation
    # is used here for guaranteed Mosaic lowering of the transcendental.
    c = math.sqrt(2.0 / math.pi)
    return 0.5 * x * (1.0 + jnp.tanh(c * (x + 0.044715 * x * x * x)))


# ---------------- Pallas kernel: full encoder (all layers, whole batch) in one invocation ----------------
def encoder_kernel(x_ref, mask_ref, wqkv_ref, wo_ref, w1_ref, w2_ref, vec_ref, o_ref):
    """
    x_ref    : (B*S, H)              activations (row = b*S + s)
    mask_ref : (BHS, BHS)            block-diagonal additive mask (row = h*B*S + b*S + s)
    wqkv_ref : (L, 6, H, HEAD_DIM)   per-head weights [q0,q1,k0,k1,v0,v1]; 1/sqrt(d) folded into q
    wo_ref   : (L, NH, HEAD_DIM, H)  per-head slices of the output projection
    w1_ref   : (L, H, INNER)
    w2_ref   : (L, INNER, H)
    vec_ref  : (L, NVEC, 128)        bias / LayerNorm vectors, one per 128-lane row
    o_ref    : (B*S, H)
    """
    x = x_ref[...]                          # (BS, H) f32
    mask = mask_ref[...]                    # layer-invariant: hoisted out of the layer loop

    for l in range(N_LAYERS):               # static unroll over layers
        vrow = vec_ref[l]                   # (NVEC, 128)

        def proj(idx):
            w = wqkv_ref[l, idx]                              # (H, HEAD_DIM) free view
            b = vrow[idx:idx + 1, :HEAD_DIM]                  # (1, HEAD_DIM), lane-0 aligned
            return jnp.dot(x, w, preferred_element_type=jnp.float32) + b

        # head-stacked Q/K/V, rows ordered (head, batch, seq): sublane concat only.
        q = jnp.concatenate([proj(0), proj(1)], axis=0)       # (BHS, HEAD_DIM)
        k = jnp.concatenate([proj(2), proj(3)], axis=0)
        v = jnp.concatenate([proj(4), proj(5)], axis=0)

        # One block-diagonal attention for all (batch, head) pairs.
        # dot_general contracts the last dims of both operands (no kh.T transpose);
        # the 1/sqrt(d) scale is already folded into Wq/bq at pack time.
        scores = jax.lax.dot_general(q, k, (((1,), (1,)), ((), ())),
                                     preferred_element_type=jnp.float32) + mask
        scores = scores - jnp.max(scores, axis=-1, keepdims=True)
        p = jnp.exp(scores)
        p = p * pl.reciprocal(jnp.sum(p, axis=-1, keepdims=True), approx=True)
        ctx = jnp.dot(p, v, preferred_element_type=jnp.float32)   # (BHS, HEAD_DIM)

        # Output projection accumulated per head (sublane row-slices, no lane concat).
        attn = jnp.dot(ctx[0:BS], wo_ref[l, 0], preferred_element_type=jnp.float32)
        attn = attn + jnp.dot(ctx[BS:2 * BS], wo_ref[l, 1], preferred_element_type=jnp.float32)
        attn = attn + vrow[ROW_BO:ROW_BO + 1, :H]
        h1 = _layernorm(attn + x, vrow[ROW_G1:ROW_G1 + 1, :H], vrow[ROW_BE1:ROW_BE1 + 1, :H])

        # Feed-forward.
        ff = _gelu(jnp.dot(h1, w1_ref[l], preferred_element_type=jnp.float32)
                   + vrow[ROW_B1:ROW_B1 + 1, :INNER])
        ff = jnp.dot(ff, w2_ref[l], preferred_element_type=jnp.float32) + vrow[ROW_B2:ROW_B2 + 1, :H]
        x = _layernorm(ff + h1, vrow[ROW_G2:ROW_G2 + 1, :H], vrow[ROW_BE2:ROW_BE2 + 1, :H])

    o_ref[...] = x.astype(o_ref.dtype)


def _cost_estimate():
    mm = lambda m, k, n: 2 * m * k * n
    per_layer_flops = (6 * mm(BS, H, HEAD_DIM) + mm(BHS, HEAD_DIM, BHS)
                       + mm(BHS, BHS, HEAD_DIM) + 2 * mm(BS, HEAD_DIM, H)
                       + mm(BS, H, INNER) + mm(BS, INNER, H)
                       + 20 * BS * H + 6 * BS * INNER + 4 * BHS * BHS)
    per_layer_trans = BHS * BHS + BS * INNER + BHS + 4 * BS      # exp, gelu-tanh, recip, rsqrt
    bytes_accessed = 4 * (2 * BS * H + BHS * BHS + N_LAYERS * (
        6 * H * HEAD_DIM + N_HEADS * HEAD_DIM * H + H * INNER + INNER * H + NVEC * 128))
    return pl.CostEstimate(flops=int(N_LAYERS * per_layer_flops),
                           transcendentals=int(N_LAYERS * per_layer_trans),
                           bytes_accessed=int(bytes_accessed))


def _block_diag_mask(mask_bss):
    """(B, S, S) additive mask -> (BHS, BHS) block-diagonal mask, rows ordered (h, b, s)."""
    big = jnp.full((BHS, BHS), NEG_BIG, jnp.float32)
    for h in range(N_HEADS):
        for b in range(B):
            r0 = h * B * S + b * S
            big = big.at[r0:r0 + S, r0:r0 + S].set(mask_bss[b].astype(jnp.float32))
    return big


@jax.jit
def cadirec_forward(seq_emb, extended_attention_mask, packed_params):
    """CaDiRec.forward: run rec_trm_encoder and return the last encoded layer."""
    wqkv, wo, w1, w2, vec = packed_params
    x2d = seq_emb.reshape(BS, H)                              # free row-major reshape
    mask_big = _block_diag_mask(extended_attention_mask)      # built once in the wrapper

    vmem = pl.BlockSpec(memory_space=pltpu.MemorySpace.VMEM)
    out = pl.pallas_call(
        encoder_kernel,
        out_shape=jax.ShapeDtypeStruct((BS, H), seq_emb.dtype),
        in_specs=[vmem] * 7,
        out_specs=vmem,
        cost_estimate=_cost_estimate(),
    )(x2d, mask_big, wqkv, wo, w1, w2, vec)

    return out.reshape(B, S, H)


# ---------------- parameter packing (host-side, once) ----------------
def pack_params(params):
    inv_sqrt_d = 1.0 / math.sqrt(HEAD_DIM)
    wqkv_l, wo_l, w1_l, w2_l, vec_l = [], [], [], [], []
    for (wq, bq, wk, bk, wv, bv, wo, bo, g1, be1, w1, b1, w2, b2, g2, be2) in params:
        wq_s, bq_s = wq * inv_sqrt_d, bq * inv_sqrt_d         # fold 1/sqrt(d) at pack time

        heads_w, heads_b = [], []
        for wmat, bvec in ((wq_s, bq_s), (wk, bk), (wv, bv)): # order: q0,q1,k0,k1,v0,v1
            for h in range(N_HEADS):
                heads_w.append(wmat[:, h * HEAD_DIM:(h + 1) * HEAD_DIM])
                heads_b.append(bvec[0, h * HEAD_DIM:(h + 1) * HEAD_DIM])
        wqkv_l.append(jnp.stack(heads_w, axis=0))             # (6, H, HEAD_DIM)
        wo_l.append(jnp.stack([wo[h * HEAD_DIM:(h + 1) * HEAD_DIM, :]
                               for h in range(N_HEADS)], axis=0))  # (NH, HEAD_DIM, H)
        w1_l.append(w1)
        w2_l.append(w2)

        vrow = jnp.zeros((NVEC, 128), jnp.float32)
        for i, bh in enumerate(heads_b):
            vrow = vrow.at[i, :HEAD_DIM].set(bh)
        for row, val, width in ((ROW_BO, bo, H), (ROW_G1, g1, H), (ROW_BE1, be1, H),
                                (ROW_B1, b1, INNER), (ROW_B2, b2, H),
                                (ROW_G2, g2, H), (ROW_BE2, be2, H)):
            vrow = vrow.at[row, :width].set(val.reshape(-1))
        vec_l.append(vrow)

    return (jnp.stack(wqkv_l, 0),   # (L, 6, H, HEAD_DIM)
            jnp.stack(wo_l, 0),     # (L, NH, HEAD_DIM, H)
            jnp.stack(w1_l, 0),     # (L, H, INNER)
            jnp.stack(w2_l, 0),     # (L, INNER, H)
            jnp.stack(vec_l, 0))    # (L, NVEC, 128)


# ---------------- pure-JAX reference (same math) for correctness check ----------------
def _ref_layer(x, mask, p):
    wq, bq, wk, bk, wv, bv, wo, bo, g1, be1, w1, b1, w2, b2, g2, be2 = p
    q = x @ wq + bq
    k = x @ wk + bk
    v = x @ wv + bv

    def split_heads(t):
        return t.reshape(B, S, N_HEADS, HEAD_DIM).transpose(0, 2, 1, 3)

    qh, kh, vh = split_heads(q), split_heads(k), split_heads(v)
    s = jnp.einsum('bhqd,bhkd->bhqk', qh, kh) / math.sqrt(HEAD_DIM) + mask[:, None]
    pattn = jax.nn.softmax(s, axis=-1)
    ctx = jnp.einsum('bhqk,bhkd->bhqd', pattn, vh).transpose(0, 2, 1, 3).reshape(B, S, H)
    attn_out = ctx @ wo + bo
    h1 = _layernorm(attn_out + x, g1, be1)
    ff = _gelu(h1 @ w1 + b1)
    ff = ff @ w2 + b2
    return _layernorm(ff + h1, g2, be2)


def ref_forward(seq_emb, mask, params):
    h = seq_emb
    for p in params:
        h = _ref_layer(h, mask, p)
    return h


# ------------- deterministic parameter init (matches _init_weights: N(0, 0.02), zero bias, LN w=1 b=0) -------------
def init_params(key):
    def lin(k, din, dout):
        w = (jax.random.normal(k, (dout, din), jnp.float32) * INIT_RANGE).T  # store as [in, out]
        b = jnp.zeros((1, dout), jnp.float32)
        return w, b

    layers = []
    for l in range(N_LAYERS):
        ks = jax.random.split(jax.random.fold_in(key, l), 6)
        wq, bq = lin(ks[0], H, H)
        wk, bk = lin(ks[1], H, H)
        wv, bv = lin(ks[2], H, H)
        wo, bo = lin(ks[3], H, H)
        g1, be1 = jnp.ones((1, H), jnp.float32), jnp.zeros((1, H), jnp.float32)
        w1, b1 = lin(ks[4], H, INNER)
        w2, b2 = lin(ks[5], INNER, H)
        g2, be2 = jnp.ones((1, H), jnp.float32), jnp.zeros((1, H), jnp.float32)
        layers.append((wq, bq, wk, bk, wv, bv, wo, bo, g1, be1, w1, b1, w2, b2, g2, be2))
    return layers


if __name__ == "__main__":
    key = jax.random.PRNGKey(0)
    k_par, k_emb, k_ids = jax.random.split(key, 3)

    params = init_params(k_par)
    packed = pack_params(params)

    # seq_emb as produced upstream by add_position_embedding (deterministic random activations)
    seq_emb = jax.random.normal(k_emb, (B, S, H), jnp.float32) * 0.02

    # extended attention mask exactly as get_extended_attention_mask builds it:
    # pad-mask * causal lower-triangular, then (1 - m) * -10000 -> [B, 1, S, S]; head axis squeezed.
    item_seq = jax.random.randint(k_ids, (B, S), 1, 100)
    item_seq = item_seq.at[:, :3].set(0)                       # left padding
    pad = (item_seq > 0).astype(jnp.float32)                   # (B, S)
    causal = jnp.tril(jnp.ones((S, S), jnp.float32))           # (S, S)
    ext = pad[:, None, None, :] * causal[None, None, :, :]     # (B, 1, S, S)
    ext_mask = (1.0 - ext) * -10000.0
    mask_bss = ext_mask[:, 0]                                  # (B, S, S) for the kernel

    out = cadirec_forward(seq_emb, mask_bss, packed)
    out = jax.block_until_ready(out)

    ref = ref_forward(seq_emb, mask_bss, params)
    max_err = float(jnp.max(jnp.abs(out - ref)))
    assert out.shape == (B, S, H)
    assert max_err < 5e-4, f"mismatch vs reference: {max_err}"

    print("KERNEL_OK")
</pallas_src>

<mosaic_0001>
module attributes {stable_mosaic.version = 11 : i64} {
  func.func @encoder_kernel(%arg0: memref<32x64xf32, #tpu.memory_space<vmem>>, %arg1: memref<64x64xf32, #tpu.memory_space<vmem>>, %arg2: memref<2x6x64x32xf32, #tpu.memory_space<vmem>>, %arg3: memref<2x2x32x64xf32, #tpu.memory_space<vmem>>, %arg4: memref<2x64x128xf32, #tpu.memory_space<vmem>>, %arg5: memref<2x128x64xf32, #tpu.memory_space<vmem>>, %arg6: memref<2x16x128xf32, #tpu.memory_space<vmem>>, %arg7: memref<32x64xf32, #tpu.memory_space<vmem>>) attributes {dimension_semantics = [], scalar_prefetch = 0 : i64, scratch_operands = 0 : i64, tpu.core_type = #tpu.core_type<tc>} {
    %c0 = arith.constant 0 : index
    %c0_0 = arith.constant 0 : index
    %0 = vector.load %arg0[%c0, %c0_0] : memref<32x64xf32, #tpu.memory_space<vmem>>, vector<32x64xf32>
    %c0_1 = arith.constant 0 : index
    %c0_2 = arith.constant 0 : index
    %1 = vector.load %arg1[%c0_1, %c0_2] : memref<64x64xf32, #tpu.memory_space<vmem>>, vector<64x64xf32>
    %c0_3 = arith.constant 0 : index
    %c0_4 = arith.constant 0 : index
    %c0_5 = arith.constant 0 : index
    %2 = vector.load %arg6[%c0_3, %c0_4, %c0_5] : memref<2x16x128xf32, #tpu.memory_space<vmem>>, vector<1x16x128xf32>
    %3 = vector.shape_cast %2 : vector<1x16x128xf32> to vector<16x128xf32>
    %c0_6 = arith.constant 0 : index
    %c0_7 = arith.constant 0 : index
    %c0_8 = arith.constant 0 : index
    %c0_9 = arith.constant 0 : index
    %4 = vector.load %arg2[%c0_6, %c0_7, %c0_8, %c0_9] : memref<2x6x64x32xf32, #tpu.memory_space<vmem>>, vector<1x1x64x32xf32>
    %5 = vector.shape_cast %4 : vector<1x1x64x32xf32> to vector<64x32xf32>
    %6 = vector.extract_strided_slice %3 {offsets = [0, 0], sizes = [1, 32], strides = [1, 1]} : vector<16x128xf32> to vector<1x32xf32>
    %cst = arith.constant dense<0.000000e+00> : vector<32x32xf32>
    %7 = tpu.matmul %0, %5, %cst {dimension_numbers = #tpu.dot_dimension_numbers<[1], [0], [0], [1], [0, 0, 1, 1], [], []>} : vector<32x64xf32>, vector<64x32xf32>, vector<32x32xf32> -> vector<32x32xf32>
    %8 = vector.broadcast %6 : vector<1x32xf32> to vector<32x32xf32>
    %9 = arith.addf %7, %8 : vector<32x32xf32>
    %c0_10 = arith.constant 0 : index
    %c1 = arith.constant 1 : index
    %c0_11 = arith.constant 0 : index
    %c0_12 = arith.constant 0 : index
    %10 = vector.load %arg2[%c0_10, %c1, %c0_11, %c0_12] : memref<2x6x64x32xf32, #tpu.memory_space<vmem>>, vector<1x1x64x32xf32>
    %11 = vector.shape_cast %10 : vector<1x1x64x32xf32> to vector<64x32xf32>
    %12 = vector.extract_strided_slice %3 {offsets = [1, 0], sizes = [1, 32], strides = [1, 1]} : vector<16x128xf32> to vector<1x32xf32>
    %cst_13 = arith.constant dense<0.000000e+00> : vector<32x32xf32>
    %13 = tpu.matmul %0, %11, %cst_13 {dimension_numbers = #tpu.dot_dimension_numbers<[1], [0], [0], [1], [0, 0, 1, 1], [], []>} : vector<32x64xf32>, vector<64x32xf32>, vector<32x32xf32> -> vector<32x32xf32>
    %14 = vector.broadcast %12 : vector<1x32xf32> to vector<32x32xf32>
    %15 = arith.addf %13, %14 : vector<32x32xf32>
    %16 = tpu.concatenate %9, %15 in 0 : vector<32x32xf32>, vector<32x32xf32> -> vector<64x32xf32>
    %c0_14 = arith.constant 0 : index
    %c2 = arith.constant 2 : index
    %c0_15 = arith.constant 0 : index
    %c0_16 = arith.constant 0 : index
    %17 = vector.load %arg2[%c0_14, %c2, %c0_15, %c0_16] : memref<2x6x64x32xf32, #tpu.memory_space<vmem>>, vector<1x1x64x32xf32>
    %18 = vector.shape_cast %17 : vector<1x1x64x32xf32> to vector<64x32xf32>
    %19 = vector.extract_strided_slice %3 {offsets = [2, 0], sizes = [1, 32], strides = [1, 1]} : vector<16x128xf32> to vector<1x32xf32>
    %cst_17 = arith.constant dense<0.000000e+00> : vector<32x32xf32>
    %20 = tpu.matmul %0, %18, %cst_17 {dimension_numbers = #tpu.dot_dimension_numbers<[1], [0], [0], [1], [0, 0, 1, 1], [], []>} : vector<32x64xf32>, vector<64x32xf32>, vector<32x32xf32> -> vector<32x32xf32>
    %21 = vector.broadcast %19 : vector<1x32xf32> to vector<32x32xf32>
    %22 = arith.addf %20, %21 : vector<32x32xf32>
    %c0_18 = arith.constant 0 : index
    %c3 = arith.constant 3 : index
    %c0_19 = arith.constant 0 : index
    %c0_20 = arith.constant 0 : index
    %23 = vector.load %arg2[%c0_18, %c3, %c0_19, %c0_20] : memref<2x6x64x32xf32, #tpu.memory_space<vmem>>, vector<1x1x64x32xf32>
    %24 = vector.shape_cast %23 : vector<1x1x64x32xf32> to vector<64x32xf32>
    %25 = vector.extract_strided_slice %3 {offsets = [3, 0], sizes = [1, 32], strides = [1, 1]} : vector<16x128xf32> to vector<1x32xf32>
    %cst_21 = arith.constant dense<0.000000e+00> : vector<32x32xf32>
    %26 = tpu.matmul %0, %24, %cst_21 {dimension_numbers = #tpu.dot_dimension_numbers<[1], [0], [0], [1], [0, 0, 1, 1], [], []>} : vector<32x64xf32>, vector<64x32xf32>, vector<32x32xf32> -> vector<32x32xf32>
    %27 = vector.broadcast %25 : vector<1x32xf32> to vector<32x32xf32>
    %28 = arith.addf %26, %27 : vector<32x32xf32>
    %29 = tpu.concatenate %22, %28 in 0 : vector<32x32xf32>, vector<32x32xf32> -> vector<64x32xf32>
    %c0_22 = arith.constant 0 : index
    %c4 = arith.constant 4 : index
    %c0_23 = arith.constant 0 : index
    %c0_24 = arith.constant 0 : index
    %30 = vector.load %arg2[%c0_22, %c4, %c0_23, %c0_24] : memref<2x6x64x32xf32, #tpu.memory_space<vmem>>, vector<1x1x64x32xf32>
    %31 = vector.shape_cast %30 : vector<1x1x64x32xf32> to vector<64x32xf32>
    %32 = vector.extract_strided_slice %3 {offsets = [4, 0], sizes = [1, 32], strides = [1, 1]} : vector<16x128xf32> to vector<1x32xf32>
    %cst_25 = arith.constant dense<0.000000e+00> : vector<32x32xf32>
    %33 = tpu.matmul %0, %31, %cst_25 {dimension_numbers = #tpu.dot_dimension_numbers<[1], [0], [0], [1], [0, 0, 1, 1], [], []>} : vector<32x64xf32>, vector<64x32xf32>, vector<32x32xf32> -> vector<32x32xf32>
    %34 = vector.broadcast %32 : vector<1x32xf32> to vector<32x32xf32>
    %35 = arith.addf %33, %34 : vector<32x32xf32>
    %c0_26 = arith.constant 0 : index
    %c5 = arith.constant 5 : index
    %c0_27 = arith.constant 0 : index
    %c0_28 = arith.constant 0 : index
    %36 = vector.load %arg2[%c0_26, %c5, %c0_27, %c0_28] : memref<2x6x64x32xf32, #tpu.memory_space<vmem>>, vector<1x1x64x32xf32>
    %37 = vector.shape_cast %36 : vector<1x1x64x32xf32> to vector<64x32xf32>
    %38 = vector.extract_strided_slice %3 {offsets = [5, 0], sizes = [1, 32], strides = [1, 1]} : vector<16x128xf32> to vector<1x32xf32>
    %cst_29 = arith.constant dense<0.000000e+00> : vector<32x32xf32>
    %39 = tpu.matmul %0, %37, %cst_29 {dimension_numbers = #tpu.dot_dimension_numbers<[1], [0], [0], [1], [0, 0, 1, 1], [], []>} : vector<32x64xf32>, vector<64x32xf32>, vector<32x32xf32> -> vector<32x32xf32>
    %40 = vector.broadcast %38 : vector<1x32xf32> to vector<32x32xf32>
    %41 = arith.addf %39, %40 : vector<32x32xf32>
    %42 = tpu.concatenate %35, %41 in 0 : vector<32x32xf32>, vector<32x32xf32> -> vector<64x32xf32>
    %cst_30 = arith.constant dense<0.000000e+00> : vector<64x64xf32>
    %43 = tpu.matmul %16, %29, %cst_30 {dimension_numbers = #tpu.dot_dimension_numbers<[1], [1], [0], [0], [0, 0, 1, 0], [], []>} : vector<64x32xf32>, vector<64x32xf32>, vector<64x64xf32> -> vector<64x64xf32>
    %44 = arith.addf %43, %1 : vector<64x64xf32>
    %cst_31 = arith.constant dense<0xFF800000> : vector<64xf32>
    %45 = vector.multi_reduction <maximumf>, %44, %cst_31 [1] : vector<64x64xf32> to vector<64xf32>
    %46 = vector.shape_cast %45 : vector<64xf32> to vector<64x1xf32>
    %47 = vector.broadcast %46 : vector<64x1xf32> to vector<64x64xf32>
    %48 = arith.subf %44, %47 : vector<64x64xf32>
    %49 = math.exp %48 : vector<64x64xf32>
    %cst_32 = arith.constant dense<0.000000e+00> : vector<64xf32>
    %50 = vector.multi_reduction <add>, %49, %cst_32 [1] : vector<64x64xf32> to vector<64xf32>
    %51 = vector.shape_cast %50 : vector<64xf32> to vector<64x1xf32>
    %52 = tpu.reciprocal %51 {approx = true} : vector<64x1xf32> -> vector<64x1xf32>
    %53 = vector.broadcast %52 : vector<64x1xf32> to vector<64x64xf32>
    %54 = arith.mulf %49, %53 : vector<64x64xf32>
    %cst_33 = arith.constant dense<0.000000e+00> : vector<64x32xf32>
    %55 = tpu.matmul %54, %42, %cst_33 {dimension_numbers = #tpu.dot_dimension_numbers<[1], [0], [0], [1], [0, 0, 1, 1], [], []>} : vector<64x64xf32>, vector<64x32xf32>, vector<64x32xf32> -> vector<64x32xf32>
    %56 = vector.extract_strided_slice %55 {offsets = [0, 0], sizes = [32, 32], strides = [1, 1]} : vector<64x32xf32> to vector<32x32xf32>
    %c0_34 = arith.constant 0 : index
    %c0_35 = arith.constant 0 : index
    %c0_36 = arith.constant 0 : index
    %c0_37 = arith.constant 0 : index
    %57 = vector.load %arg3[%c0_34, %c0_35, %c0_36, %c0_37] : memref<2x2x32x64xf32, #tpu.memory_space<vmem>>, vector<1x1x32x64xf32>
    %58 = vector.shape_cast %57 : vector<1x1x32x64xf32> to vector<32x64xf32>
    %cst_38 = arith.constant dense<0.000000e+00> : vector<32x64xf32>
    %59 = tpu.matmul %56, %58, %cst_38 {dimension_numbers = #tpu.dot_dimension_numbers<[1], [0], [0], [1], [0, 0, 1, 1], [], []>} : vector<32x32xf32>, vector<32x64xf32>, vector<32x64xf32> -> vector<32x64xf32>
    %60 = vector.extract_strided_slice %55 {offsets = [32, 0], sizes = [32, 32], strides = [1, 1]} : vector<64x32xf32> to vector<32x32xf32>
    %c0_39 = arith.constant 0 : index
    %c1_40 = arith.constant 1 : index
    %c0_41 = arith.constant 0 : index
    %c0_42 = arith.constant 0 : index
    %61 = vector.load %arg3[%c0_39, %c1_40, %c0_41, %c0_42] : memref<2x2x32x64xf32, #tpu.memory_space<vmem>>, vector<1x1x32x64xf32>
    %62 = vector.shape_cast %61 : vector<1x1x32x64xf32> to vector<32x64xf32>
    %cst_43 = arith.constant dense<0.000000e+00> : vector<32x64xf32>
    %63 = tpu.matmul %60, %62, %cst_43 {dimension_numbers = #tpu.dot_dimension_numbers<[1], [0], [0], [1], [0, 0, 1, 1], [], []>} : vector<32x32xf32>, vector<32x64xf32>, vector<32x64xf32> -> vector<32x64xf32>
    %64 = arith.addf %59, %63 : vector<32x64xf32>
    %65 = vector.extract_strided_slice %3 {offsets = [6, 0], sizes = [1, 64], strides = [1, 1]} : vector<16x128xf32> to vector<1x64xf32>
    %66 = vector.broadcast %65 : vector<1x64xf32> to vector<32x64xf32>
    %67 = arith.addf %64, %66 : vector<32x64xf32>
    %68 = arith.addf %67, %0 : vector<32x64xf32>
    %69 = vector.extract_strided_slice %3 {offsets = [7, 0], sizes = [1, 64], strides = [1, 1]} : vector<16x128xf32> to vector<1x64xf32>
    %70 = vector.extract_strided_slice %3 {offsets = [8, 0], sizes = [1, 64], strides = [1, 1]} : vector<16x128xf32> to vector<1x64xf32>
    %cst_44 = arith.constant dense<0.000000e+00> : vector<32xf32>
    %71 = vector.multi_reduction <add>, %68, %cst_44 [1] : vector<32x64xf32> to vector<32xf32>
    %72 = vector.shape_cast %71 : vector<32xf32> to vector<32x1xf32>
    %cst_45 = arith.constant 6.400000e+01 : f32
    %73 = vector.broadcast %cst_45 : f32 to vector<32x1xf32>
    %74 = arith.divf %72, %73 : vector<32x1xf32>
    %75 = arith.mulf %68, %68 : vector<32x64xf32>
    %cst_46 = arith.constant dense<0.000000e+00> : vector<32xf32>
    %76 = vector.multi_reduction <add>, %75, %cst_46 [1] : vector<32x64xf32> to vector<32xf32>
    %77 = vector.shape_cast %76 : vector<32xf32> to vector<32x1xf32>
    %cst_47 = arith.constant 6.400000e+01 : f32
    %78 = vector.broadcast %cst_47 : f32 to vector<32x1xf32>
    %79 = arith.divf %77, %78 : vector<32x1xf32>
    %80 = arith.mulf %74, %74 : vector<32x1xf32>
    %81 = arith.subf %79, %80 : vector<32x1xf32>
    %cst_48 = arith.constant 0.000000e+00 : f32
    %82 = vector.broadcast %cst_48 : f32 to vector<32x1xf32>
    %83 = arith.maximumf %81, %82 : vector<32x1xf32>
    %84 = vector.broadcast %74 : vector<32x1xf32> to vector<32x64xf32>
    %85 = arith.subf %68, %84 : vector<32x64xf32>
    %cst_49 = arith.constant 9.99999996E-13 : f32
    %86 = vector.broadcast %cst_49 : f32 to vector<32x1xf32>
    %87 = arith.addf %83, %86 : vector<32x1xf32>
    %88 = math.rsqrt %87 : vector<32x1xf32>
    %89 = vector.broadcast %88 : vector<32x1xf32> to vector<32x64xf32>
    %90 = arith.mulf %85, %89 : vector<32x64xf32>
    %91 = vector.broadcast %69 : vector<1x64xf32> to vector<32x64xf32>
    %92 = arith.mulf %90, %91 : vector<32x64xf32>
    %93 = vector.broadcast %70 : vector<1x64xf32> to vector<32x64xf32>
    %94 = arith.addf %92, %93 : vector<32x64xf32>
    %c0_50 = arith.constant 0 : index
    %c0_51 = arith.constant 0 : index
    %c0_52 = arith.constant 0 : index
    %95 = vector.load %arg4[%c0_50, %c0_51, %c0_52] : memref<2x64x128xf32, #tpu.memory_space<vmem>>, vector<1x64x128xf32>
    %96 = vector.shape_cast %95 : vector<1x64x128xf32> to vector<64x128xf32>
    %cst_53 = arith.constant dense<0.000000e+00> : vector<32x128xf32>
    %97 = tpu.matmul %94, %96, %cst_53 {dimension_numbers = #tpu.dot_dimension_numbers<[1], [0], [0], [1], [0, 0, 1, 1], [], []>} : vector<32x64xf32>, vector<64x128xf32>, vector<32x128xf32> -> vector<32x128xf32>
    %98 = vector.extract_strided_slice %3 {offsets = [9, 0], sizes = [1, 128], strides = [1, 1]} : vector<16x128xf32> to vector<1x128xf32>
    %99 = vector.broadcast %98 : vector<1x128xf32> to vector<32x128xf32>
    %100 = arith.addf %97, %99 : vector<32x128xf32>
    %cst_54 = arith.constant 5.000000e-01 : f32
    %101 = vector.broadcast %cst_54 : f32 to vector<32x128xf32>
    %102 = arith.mulf %101, %100 : vector<32x128xf32>
    %cst_55 = arith.constant 4.471500e-02 : f32
    %103 = vector.broadcast %cst_55 : f32 to vector<32x128xf32>
    %104 = arith.mulf %103, %100 : vector<32x128xf32>
    %105 = arith.mulf %104, %100 : vector<32x128xf32>
    %106 = arith.mulf %105, %100 : vector<32x128xf32>
    %107 = arith.addf %100, %106 : vector<32x128xf32>
    %cst_56 = arith.constant 0.797884583 : f32
    %108 = vector.broadcast %cst_56 : f32 to vector<32x128xf32>
    %109 = arith.mulf %108, %107 : vector<32x128xf32>
    %110 = math.tanh %109 : vector<32x128xf32>
    %cst_57 = arith.constant 1.000000e+00 : f32
    %111 = vector.broadcast %cst_57 : f32 to vector<32x128xf32>
    %112 = arith.addf %111, %110 : vector<32x128xf32>
    %113 = arith.mulf %102, %112 : vector<32x128xf32>
    %c0_58 = arith.constant 0 : index
    %c0_59 = arith.constant 0 : index
    %c0_60 = arith.constant 0 : index
    %114 = vector.load %arg5[%c0_58, %c0_59, %c0_60] : memref<2x128x64xf32, #tpu.memory_space<vmem>>, vector<1x128x64xf32>
    %115 = vector.shape_cast %114 : vector<1x128x64xf32> to vector<128x64xf32>
    %cst_61 = arith.constant dense<0.000000e+00> : vector<32x64xf32>
    %116 = tpu.matmul %113, %115, %cst_61 {dimension_numbers = #tpu.dot_dimension_numbers<[1], [0], [0], [1], [0, 0, 1, 1], [], []>} : vector<32x128xf32>, vector<128x64xf32>, vector<32x64xf32> -> vector<32x64xf32>
    %117 = vector.extract_strided_slice %3 {offsets = [10, 0], sizes = [1, 64], strides = [1, 1]} : vector<16x128xf32> to vector<1x64xf32>
    %118 = vector.broadcast %117 : vector<1x64xf32> to vector<32x64xf32>
    %119 = arith.addf %116, %118 : vector<32x64xf32>
    %120 = arith.addf %119, %94 : vector<32x64xf32>
    %121 = vector.extract_strided_slice %3 {offsets = [11, 0], sizes = [1, 64], strides = [1, 1]} : vector<16x128xf32> to vector<1x64xf32>
    %122 = vector.extract_strided_slice %3 {offsets = [12, 0], sizes = [1, 64], strides = [1, 1]} : vector<16x128xf32> to vector<1x64xf32>
    %cst_62 = arith.constant dense<0.000000e+00> : vector<32xf32>
    %123 = vector.multi_reduction <add>, %120, %cst_62 [1] : vector<32x64xf32> to vector<32xf32>
    %124 = vector.shape_cast %123 : vector<32xf32> to vector<32x1xf32>
    %cst_63 = arith.constant 6.400000e+01 : f32
    %125 = vector.broadcast %cst_63 : f32 to vector<32x1xf32>
    %126 = arith.divf %124, %125 : vector<32x1xf32>
    %127 = arith.mulf %120, %120 : vector<32x64xf32>
    %cst_64 = arith.constant dense<0.000000e+00> : vector<32xf32>
    %128 = vector.multi_reduction <add>, %127, %cst_64 [1] : vector<32x64xf32> to vector<32xf32>
    %129 = vector.shape_cast %128 : vector<32xf32> to vector<32x1xf32>
    %cst_65 = arith.constant 6.400000e+01 : f32
    %130 = vector.broadcast %cst_65 : f32 to vector<32x1xf32>
    %131 = arith.divf %129, %130 : vector<32x1xf32>
    %132 = arith.mulf %126, %126 : vector<32x1xf32>
    %133 = arith.subf %131, %132 : vector<32x1xf32>
    %cst_66 = arith.constant 0.000000e+00 : f32
    %134 = vector.broadcast %cst_66 : f32 to vector<32x1xf32>
    %135 = arith.maximumf %133, %134 : vector<32x1xf32>
    %136 = vector.broadcast %126 : vector<32x1xf32> to vector<32x64xf32>
    %137 = arith.subf %120, %136 : vector<32x64xf32>
    %cst_67 = arith.constant 9.99999996E-13 : f32
    %138 = vector.broadcast %cst_67 : f32 to vector<32x1xf32>
    %139 = arith.addf %135, %138 : vector<32x1xf32>
    %140 = math.rsqrt %139 : vector<32x1xf32>
    %141 = vector.broadcast %140 : vector<32x1xf32> to vector<32x64xf32>
    %142 = arith.mulf %137, %141 : vector<32x64xf32>
    %143 = vector.broadcast %121 : vector<1x64xf32> to vector<32x64xf32>
    %144 = arith.mulf %142, %143 : vector<32x64xf32>
    %145 = vector.broadcast %122 : vector<1x64xf32> to vector<32x64xf32>
    %146 = arith.addf %144, %145 : vector<32x64xf32>
    %c1_68 = arith.constant 1 : index
    %c0_69 = arith.constant 0 : index
    %c0_70 = arith.constant 0 : index
    %147 = vector.load %arg6[%c1_68, %c0_69, %c0_70] : memref<2x16x128xf32, #tpu.memory_space<vmem>>, vector<1x16x128xf32>
    %148 = vector.shape_cast %147 : vector<1x16x128xf32> to vector<16x128xf32>
    %c1_71 = arith.constant 1 : index
    %c0_72 = arith.constant 0 : index
    %c0_73 = arith.constant 0 : index
    %c0_74 = arith.constant 0 : index
    %149 = vector.load %arg2[%c1_71, %c0_72, %c0_73, %c0_74] : memref<2x6x64x32xf32, #tpu.memory_space<vmem>>, vector<1x1x64x32xf32>
    %150 = vector.shape_cast %149 : vector<1x1x64x32xf32> to vector<64x32xf32>
    %151 = vector.extract_strided_slice %148 {offsets = [0, 0], sizes = [1, 32], strides = [1, 1]} : vector<16x128xf32> to vector<1x32xf32>
    %cst_75 = arith.constant dense<0.000000e+00> : vector<32x32xf32>
    %152 = tpu.matmul %146, %150, %cst_75 {dimension_numbers = #tpu.dot_dimension_numbers<[1], [0], [0], [1], [0, 0, 1, 1], [], []>} : vector<32x64xf32>, vector<64x32xf32>, vector<32x32xf32> -> vector<32x32xf32>
    %153 = vector.broadcast %151 : vector<1x32xf32> to vector<32x32xf32>
    %154 = arith.addf %152, %153 : vector<32x32xf32>
    %c1_76 = arith.constant 1 : index
    %c1_77 = arith.constant 1 : index
    %c0_78 = arith.constant 0 : index
    %c0_79 = arith.constant 0 : index
    %155 = vector.load %arg2[%c1_76, %c1_77, %c0_78, %c0_79] : memref<2x6x64x32xf32, #tpu.memory_space<vmem>>, vector<1x1x64x32xf32>
    %156 = vector.shape_cast %155 : vector<1x1x64x32xf32> to vector<64x32xf32>
    %157 = vector.extract_strided_slice %148 {offsets = [1, 0], sizes = [1, 32], strides = [1, 1]} : vector<16x128xf32> to vector<1x32xf32>
    %cst_80 = arith.constant dense<0.000000e+00> : vector<32x32xf32>
    %158 = tpu.matmul %146, %156, %cst_80 {dimension_numbers = #tpu.dot_dimension_numbers<[1], [0], [0], [1], [0, 0, 1, 1], [], []>} : vector<32x64xf32>, vector<64x32xf32>, vector<32x32xf32> -> vector<32x32xf32>
    %159 = vector.broadcast %157 : vector<1x32xf32> to vector<32x32xf32>
    %160 = arith.addf %158, %159 : vector<32x32xf32>
    %161 = tpu.concatenate %154, %160 in 0 : vector<32x32xf32>, vector<32x32xf32> -> vector<64x32xf32>
    %c1_81 = arith.constant 1 : index
    %c2_82 = arith.constant 2 : index
    %c0_83 = arith.constant 0 : index
    %c0_84 = arith.constant 0 : index
    %162 = vector.load %arg2[%c1_81, %c2_82, %c0_83, %c0_84] : memref<2x6x64x32xf32, #tpu.memory_space<vmem>>, vector<1x1x64x32xf32>
    %163 = vector.shape_cast %162 : vector<1x1x64x32xf32> to vector<64x32xf32>
    %164 = vector.extract_strided_slice %148 {offsets = [2, 0], sizes = [1, 32], strides = [1, 1]} : vector<16x128xf32> to vector<1x32xf32>
    %cst_85 = arith.constant dense<0.000000e+00> : vector<32x32xf32>
    %165 = tpu.matmul %146, %163, %cst_85 {dimension_numbers = #tpu.dot_dimension_numbers<[1], [0], [0], [1], [0, 0, 1, 1], [], []>} : vector<32x64xf32>, vector<64x32xf32>, vector<32x32xf32> -> vector<32x32xf32>
    %166 = vector.broadcast %164 : vector<1x32xf32> to vector<32x32xf32>
    %167 = arith.addf %165, %166 : vector<32x32xf32>
    %c1_86 = arith.constant 1 : index
    %c3_87 = arith.constant 3 : index
    %c0_88 = arith.constant 0 : index
    %c0_89 = arith.constant 0 : index
    %168 = vector.load %arg2[%c1_86, %c3_87, %c0_88, %c0_89] : memref<2x6x64x32xf32, #tpu.memory_space<vmem>>, vector<1x1x64x32xf32>
    %169 = vector.shape_cast %168 : vector<1x1x64x32xf32> to vector<64x32xf32>
    %170 = vector.extract_strided_slice %148 {offsets = [3, 0], sizes = [1, 32], strides = [1, 1]} : vector<16x128xf32> to vector<1x32xf32>
    %cst_90 = arith.constant dense<0.000000e+00> : vector<32x32xf32>
    %171 = tpu.matmul %146, %169, %cst_90 {dimension_numbers = #tpu.dot_dimension_numbers<[1], [0], [0], [1], [0, 0, 1, 1], [], []>} : vector<32x64xf32>, vector<64x32xf32>, vector<32x32xf32> -> vector<32x32xf32>
    %172 = vector.broadcast %170 : vector<1x32xf32> to vector<32x32xf32>
    %173 = arith.addf %171, %172 : vector<32x32xf32>
    %174 = tpu.concatenate %167, %173 in 0 : vector<32x32xf32>, vector<32x32xf32> -> vector<64x32xf32>
    %c1_91 = arith.constant 1 : index
    %c4_92 = arith.constant 4 : index
    %c0_93 = arith.constant 0 : index
    %c0_94 = arith.constant 0 : index
    %175 = vector.load %arg2[%c1_91, %c4_92, %c0_93, %c0_94] : memref<2x6x64x32xf32, #tpu.memory_space<vmem>>, vector<1x1x64x32xf32>
    %176 = vector.shape_cast %175 : vector<1x1x64x32xf32> to vector<64x32xf32>
    %177 = vector.extract_strided_slice %148 {offsets = [4, 0], sizes = [1, 32], strides = [1, 1]} : vector<16x128xf32> to vector<1x32xf32>
    %cst_95 = arith.constant dense<0.000000e+00> : vector<32x32xf32>
    %178 = tpu.matmul %146, %176, %cst_95 {dimension_numbers = #tpu.dot_dimension_numbers<[1], [0], [0], [1], [0, 0, 1, 1], [], []>} : vector<32x64xf32>, vector<64x32xf32>, vector<32x32xf32> -> vector<32x32xf32>
    %179 = vector.broadcast %177 : vector<1x32xf32> to vector<32x32xf32>
    %180 = arith.addf %178, %179 : vector<32x32xf32>
    %c1_96 = arith.constant 1 : index
    %c5_97 = arith.constant 5 : index
    %c0_98 = arith.constant 0 : index
    %c0_99 = arith.constant 0 : index
    %181 = vector.load %arg2[%c1_96, %c5_97, %c0_98, %c0_99] : memref<2x6x64x32xf32, #tpu.memory_space<vmem>>, vector<1x1x64x32xf32>
    %182 = vector.shape_cast %181 : vector<1x1x64x32xf32> to vector<64x32xf32>
    %183 = vector.extract_strided_slice %148 {offsets = [5, 0], sizes = [1, 32], strides = [1, 1]} : vector<16x128xf32> to vector<1x32xf32>
    %cst_100 = arith.constant dense<0.000000e+00> : vector<32x32xf32>
    %184 = tpu.matmul %146, %182, %cst_100 {dimension_numbers = #tpu.dot_dimension_numbers<[1], [0], [0], [1], [0, 0, 1, 1], [], []>} : vector<32x64xf32>, vector<64x32xf32>, vector<32x32xf32> -> vector<32x32xf32>
    %185 = vector.broadcast %183 : vector<1x32xf32> to vector<32x32xf32>
    %186 = arith.addf %184, %185 : vector<32x32xf32>
    %187 = tpu.concatenate %180, %186 in 0 : vector<32x32xf32>, vector<32x32xf32> -> vector<64x32xf32>
    %cst_101 = arith.constant dense<0.000000e+00> : vector<64x64xf32>
    %188 = tpu.matmul %161, %174, %cst_101 {dimension_numbers = #tpu.dot_dimension_numbers<[1], [1], [0], [0], [0, 0, 1, 0], [], []>} : vector<64x32xf32>, vector<64x32xf32>, vector<64x64xf32> -> vector<64x64xf32>
    %189 = arith.addf %188, %1 : vector<64x64xf32>
    %cst_102 = arith.constant dense<0xFF800000> : vector<64xf32>
    %190 = vector.multi_reduction <maximumf>, %189, %cst_102 [1] : vector<64x64xf32> to vector<64xf32>
    %191 = vector.shape_cast %190 : vector<64xf32> to vector<64x1xf32>
    %192 = vector.broadcast %191 : vector<64x1xf32> to vector<64x64xf32>
    %193 = arith.subf %189, %192 : vector<64x64xf32>
    %194 = math.exp %193 : vector<64x64xf32>
    %cst_103 = arith.constant dense<0.000000e+00> : vector<64xf32>
    %195 = vector.multi_reduction <add>, %194, %cst_103 [1] : vector<64x64xf32> to vector<64xf32>
    %196 = vector.shape_cast %195 : vector<64xf32> to vector<64x1xf32>
    %197 = tpu.reciprocal %196 {approx = true} : vector<64x1xf32> -> vector<64x1xf32>
    %198 = vector.broadcast %197 : vector<64x1xf32> to vector<64x64xf32>
    %199 = arith.mulf %194, %198 : vector<64x64xf32>
    %cst_104 = arith.constant dense<0.000000e+00> : vector<64x32xf32>
    %200 = tpu.matmul %199, %187, %cst_104 {dimension_numbers = #tpu.dot_dimension_numbers<[1], [0], [0], [1], [0, 0, 1, 1], [], []>} : vector<64x64xf32>, vector<64x32xf32>, vector<64x32xf32> -> vector<64x32xf32>
    %201 = vector.extract_strided_slice %200 {offsets = [0, 0], sizes = [32, 32], strides = [1, 1]} : vector<64x32xf32> to vector<32x32xf32>
    %c1_105 = arith.constant 1 : index
    %c0_106 = arith.constant 0 : index
    %c0_107 = arith.constant 0 : index
    %c0_108 = arith.constant 0 : index
    %202 = vector.load %arg3[%c1_105, %c0_106, %c0_107, %c0_108] : memref<2x2x32x64xf32, #tpu.memory_space<vmem>>, vector<1x1x32x64xf32>
    %203 = vector.shape_cast %202 : vector<1x1x32x64xf32> to vector<32x64xf32>
    %cst_109 = arith.constant dense<0.000000e+00> : vector<32x64xf32>
    %204 = tpu.matmul %201, %203, %cst_109 {dimension_numbers = #tpu.dot_dimension_numbers<[1], [0], [0], [1], [0, 0, 1, 1], [], []>} : vector<32x32xf32>, vector<32x64xf32>, vector<32x64xf32> -> vector<32x64xf32>
    %205 = vector.extract_strided_slice %200 {offsets = [32, 0], sizes = [32, 32], strides = [1, 1]} : vector<64x32xf32> to vector<32x32xf32>
    %c1_110 = arith.constant 1 : index
    %c1_111 = arith.constant 1 : index
    %c0_112 = arith.constant 0 : index
    %c0_113 = arith.constant 0 : index
    %206 = vector.load %arg3[%c1_110, %c1_111, %c0_112, %c0_113] : memref<2x2x32x64xf32, #tpu.memory_space<vmem>>, vector<1x1x32x64xf32>
    %207 = vector.shape_cast %206 : vector<1x1x32x64xf32> to vector<32x64xf32>
    %cst_114 = arith.constant dense<0.000000e+00> : vector<32x64xf32>
    %208 = tpu.matmul %205, %207, %cst_114 {dimension_numbers = #tpu.dot_dimension_numbers<[1], [0], [0], [1], [0, 0, 1, 1], [], []>} : vector<32x32xf32>, vector<32x64xf32>, vector<32x64xf32> -> vector<32x64xf32>
    %209 = arith.addf %204, %208 : vector<32x64xf32>
    %210 = vector.extract_strided_slice %148 {offsets = [6, 0], sizes = [1, 64], strides = [1, 1]} : vector<16x128xf32> to vector<1x64xf32>
    %211 = vector.broadcast %210 : vector<1x64xf32> to vector<32x64xf32>
    %212 = arith.addf %209, %211 : vector<32x64xf32>
    %213 = arith.addf %212, %146 : vector<32x64xf32>
    %214 = vector.extract_strided_slice %148 {offsets = [7, 0], sizes = [1, 64], strides = [1, 1]} : vector<16x128xf32> to vector<1x64xf32>
    %215 = vector.extract_strided_slice %148 {offsets = [8, 0], sizes = [1, 64], strides = [1, 1]} : vector<16x128xf32> to vector<1x64xf32>
    %cst_115 = arith.constant dense<0.000000e+00> : vector<32xf32>
    %216 = vector.multi_reduction <add>, %213, %cst_115 [1] : vector<32x64xf32> to vector<32xf32>
    %217 = vector.shape_cast %216 : vector<32xf32> to vector<32x1xf32>
    %cst_116 = arith.constant 6.400000e+01 : f32
    %218 = vector.broadcast %cst_116 : f32 to vector<32x1xf32>
    %219 = arith.divf %217, %218 : vector<32x1xf32>
    %220 = arith.mulf %213, %213 : vector<32x64xf32>
    %cst_117 = arith.constant dense<0.000000e+00> : vector<32xf32>
    %221 = vector.multi_reduction <add>, %220, %cst_117 [1] : vector<32x64xf32> to vector<32xf32>
    %222 = vector.shape_cast %221 : vector<32xf32> to vector<32x1xf32>
    %cst_118 = arith.constant 6.400000e+01 : f32
    %223 = vector.broadcast %cst_118 : f32 to vector<32x1xf32>
    %224 = arith.divf %222, %223 : vector<32x1xf32>
    %225 = arith.mulf %219, %219 : vector<32x1xf32>
    %226 = arith.subf %224, %225 : vector<32x1xf32>
    %cst_119 = arith.constant 0.000000e+00 : f32
    %227 = vector.broadcast %cst_119 : f32 to vector<32x1xf32>
    %228 = arith.maximumf %226, %227 : vector<32x1xf32>
    %229 = vector.broadcast %219 : vector<32x1xf32> to vector<32x64xf32>
    %230 = arith.subf %213, %229 : vector<32x64xf32>
    %cst_120 = arith.constant 9.99999996E-13 : f32
    %231 = vector.broadcast %cst_120 : f32 to vector<32x1xf32>
    %232 = arith.addf %228, %231 : vector<32x1xf32>
    %233 = math.rsqrt %232 : vector<32x1xf32>
    %234 = vector.broadcast %233 : vector<32x1xf32> to vector<32x64xf32>
    %235 = arith.mulf %230, %234 : vector<32x64xf32>
    %236 = vector.broadcast %214 : vector<1x64xf32> to vector<32x64xf32>
    %237 = arith.mulf %235, %236 : vector<32x64xf32>
    %238 = vector.broadcast %215 : vector<1x64xf32> to vector<32x64xf32>
    %239 = arith.addf %237, %238 : vector<32x64xf32>
    %c1_121 = arith.constant 1 : index
    %c0_122 = arith.constant 0 : index
    %c0_123 = arith.constant 0 : index
    %240 = vector.load %arg4[%c1_121, %c0_122, %c0_123] : memref<2x64x128xf32, #tpu.memory_space<vmem>>, vector<1x64x128xf32>
    %241 = vector.shape_cast %240 : vector<1x64x128xf32> to vector<64x128xf32>
    %cst_124 = arith.constant dense<0.000000e+00> : vector<32x128xf32>
    %242 = tpu.matmul %239, %241, %cst_124 {dimension_numbers = #tpu.dot_dimension_numbers<[1], [0], [0], [1], [0, 0, 1, 1], [], []>} : vector<32x64xf32>, vector<64x128xf32>, vector<32x128xf32> -> vector<32x128xf32>
    %243 = vector.extract_strided_slice %148 {offsets = [9, 0], sizes = [1, 128], strides = [1, 1]} : vector<16x128xf32> to vector<1x128xf32>
    %244 = vector.broadcast %243 : vector<1x128xf32> to vector<32x128xf32>
    %245 = arith.addf %242, %244 : vector<32x128xf32>
    %cst_125 = arith.constant 5.000000e-01 : f32
    %246 = vector.broadcast %cst_125 : f32 to vector<32x128xf32>
    %247 = arith.mulf %246, %245 : vector<32x128xf32>
    %cst_126 = arith.constant 4.471500e-02 : f32
    %248 = vector.broadcast %cst_126 : f32 to vector<32x128xf32>
    %249 = arith.mulf %248, %245 : vector<32x128xf32>
    %250 = arith.mulf %249, %245 : vector<32x128xf32>
    %251 = arith.mulf %250, %245 : vector<32x128xf32>
    %252 = arith.addf %245, %251 : vector<32x128xf32>
    %cst_127 = arith.constant 0.797884583 : f32
    %253 = vector.broadcast %cst_127 : f32 to vector<32x128xf32>
    %254 = arith.mulf %253, %252 : vector<32x128xf32>
    %255 = math.tanh %254 : vector<32x128xf32>
    %cst_128 = arith.constant 1.000000e+00 : f32
    %256 = vector.broadcast %cst_128 : f32 to vector<32x128xf32>
    %257 = arith.addf %256, %255 : vector<32x128xf32>
    %258 = arith.mulf %247, %257 : vector<32x128xf32>
    %c1_129 = arith.constant 1 : index
    %c0_130 = arith.constant 0 : index
    %c0_131 = arith.constant 0 : index
    %259 = vector.load %arg5[%c1_129, %c0_130, %c0_131] : memref<2x128x64xf32, #tpu.memory_space<vmem>>, vector<1x128x64xf32>
    %260 = vector.shape_cast %259 : vector<1x128x64xf32> to vector<128x64xf32>
    %cst_132 = arith.constant dense<0.000000e+00> : vector<32x64xf32>
    %261 = tpu.matmul %258, %260, %cst_132 {dimension_numbers = #tpu.dot_dimension_numbers<[1], [0], [0], [1], [0, 0, 1, 1], [], []>} : vector<32x128xf32>, vector<128x64xf32>, vector<32x64xf32> -> vector<32x64xf32>
    %262 = vector.extract_strided_slice %148 {offsets = [10, 0], sizes = [1, 64], strides = [1, 1]} : vector<16x128xf32> to vector<1x64xf32>
    %263 = vector.broadcast %262 : vector<1x64xf32> to vector<32x64xf32>
    %264 = arith.addf %261, %263 : vector<32x64xf32>
    %265 = arith.addf %264, %239 : vector<32x64xf32>
    %266 = vector.extract_strided_slice %148 {offsets = [11, 0], sizes = [1, 64], strides = [1, 1]} : vector<16x128xf32> to vector<1x64xf32>
    %267 = vector.extract_strided_slice %148 {offsets = [12, 0], sizes = [1, 64], strides = [1, 1]} : vector<16x128xf32> to vector<1x64xf32>
    %cst_133 = arith.constant dense<0.000000e+00> : vector<32xf32>
    %268 = vector.multi_reduction <add>, %265, %cst_133 [1] : vector<32x64xf32> to vector<32xf32>
    %269 = vector.shape_cast %268 : vector<32xf32> to vector<32x1xf32>
    %cst_134 = arith.constant 6.400000e+01 : f32
    %270 = vector.broadcast %cst_134 : f32 to vector<32x1xf32>
    %271 = arith.divf %269, %270 : vector<32x1xf32>
    %272 = arith.mulf %265, %265 : vector<32x64xf32>
    %cst_135 = arith.constant dense<0.000000e+00> : vector<32xf32>
    %273 = vector.multi_reduction <add>, %272, %cst_135 [1] : vector<32x64xf32> to vector<32xf32>
    %274 = vector.shape_cast %273 : vector<32xf32> to vector<32x1xf32>
    %cst_136 = arith.constant 6.400000e+01 : f32
    %275 = vector.broadcast %cst_136 : f32 to vector<32x1xf32>
    %276 = arith.divf %274, %275 : vector<32x1xf32>
    %277 = arith.mulf %271, %271 : vector<32x1xf32>
    %278 = arith.subf %276, %277 : vector<32x1xf32>
    %cst_137 = arith.constant 0.000000e+00 : f32
    %279 = vector.broadcast %cst_137 : f32 to vector<32x1xf32>
    %280 = arith.maximumf %278, %279 : vector<32x1xf32>
    %281 = vector.broadcast %271 : vector<32x1xf32> to vector<32x64xf32>
    %282 = arith.subf %265, %281 : vector<32x64xf32>
    %cst_138 = arith.constant 9.99999996E-13 : f32
    %283 = vector.broadcast %cst_138 : f32 to vector<32x1xf32>
    %284 = arith.addf %280, %283 : vector<32x1xf32>
    %285 = math.rsqrt %284 : vector<32x1xf32>
    %286 = vector.broadcast %285 : vector<32x1xf32> to vector<32x64xf32>
    %287 = arith.mulf %282, %286 : vector<32x64xf32>
    %288 = vector.broadcast %266 : vector<1x64xf32> to vector<32x64xf32>
    %289 = arith.mulf %287, %288 : vector<32x64xf32>
    %290 = vector.broadcast %267 : vector<1x64xf32> to vector<32x64xf32>
    %291 = arith.addf %289, %290 : vector<32x64xf32>
    %c0_139 = arith.constant 0 : index
    %c0_140 = arith.constant 0 : index
    %292 = vector.load %arg7[%c0_139, %c0_140] : memref<32x64xf32, #tpu.memory_space<vmem>>, vector<32x64xf32>
    tpu.vector_store %arg7[%c0_139, %c0_140], %291 {strides = array<i32>} : memref<32x64xf32, #tpu.memory_space<vmem>>, vector<32x64xf32>,
    return
  }
}

</mosaic_0001>

<llo_original>
// kernel: cadirec_forward.1
$region0: #{cadirec_forward.1}
  #allocation0 [shape = 'u32[]', space=smem, size = 0x4, offset = 0x4, fixed_abs, tag = 'smem constant byte address 0x4 - core index']
  #allocation1 [shape = 'u32[144,128]{1,0:T(1,128)}', space=vmem, size = 0x12000, scoped, tag = 'internal scratch']
  %s0 = inlined_call_operand.vmem [shape: f32[32,64], index: 0, kind: input, shape index: {}]
  %s1 = inlined_call_operand.vmem [shape: f32[64,64], index: 1, kind: input, shape index: {}]
  %s2 = inlined_call_operand.vmem [shape: f32[2,6,64,32], index: 2, kind: input, shape index: {}]
  %s3 = inlined_call_operand.vmem [shape: f32[2,2,32,64], index: 3, kind: input, shape index: {}]
  %s4 = inlined_call_operand.vmem [shape: f32[2,64,128], index: 4, kind: input, shape index: {}]
  %s5 = inlined_call_operand.vmem [shape: f32[2,128,64], index: 5, kind: input, shape index: {}]
  %s6 = inlined_call_operand.vmem [shape: f32[2,16,128], index: 6, kind: input, shape index: {}]
  %s7 = inlined_call_operand.hbm [shape: f32[32,64], index: 7, kind: output, shape index: {}]
  %s8 = sld [smem:[#allocation0]]
  $region38: #{cadirec_forward.1} parent=0
    _
  %s10 = ssub.s32 1, %s8
  %s11 = scalar_select 0, %s10, %s8
  $region1: #{cadirec_forward.1} parent=0
    #allocation2 [shape = 'u8[16384]{0}', space=vmem, size = 0x4000, scoped, tag = 'output window, operand 0, single buffered']
    #allocation3 [shape = 's32[1]{0}', space=sflag, size = 0x4, scoped, tag = 'scoped memory for cadirec_forward.1']
    %12 = vsyncpa [#allocation3], 0
    // Predicated region
    $region2: #{cadirec_forward.1} parent=1 // pred_check
      _
    $region3: #{cadirec_forward.1} parent=1 // pred_check_branch
      %14 = sbr.rel (0) target = $region5
    $region4: #{cadirec_forward.1} parent=1 // pred_region
      _
    $region5: #{cadirec_forward.1} parent=1 // pred_fallthru
      _
    // Predicated region
    $region6: #{cadirec_forward.1} parent=1 // pred_check
      _
    $region7: #{cadirec_forward.1} parent=1 // pred_check_branch
      %16 = sbr.rel (0) target = $region9
    $region8: #{cadirec_forward.1} parent=1 // pred_region
      _
    $region9: #{cadirec_forward.1} parent=1 // pred_fallthru
      _
    // Predicated region
    $region10: #{cadirec_forward.1} parent=1 // pred_check
      _
    $region11: #{cadirec_forward.1} parent=1 // pred_check_branch
      %18 = sbr.rel (0) target = $region13
    $region12: #{cadirec_forward.1} parent=1 // pred_region
      _
    $region13: #{cadirec_forward.1} parent=1 // pred_fallthru
      _
    // Predicated region
    $region14: #{cadirec_forward.1} parent=1 // pred_check
      _
    $region15: #{cadirec_forward.1} parent=1 // pred_check_branch
      %20 = sbr.rel (0) target = $region17
    $region16: #{cadirec_forward.1} parent=1 // pred_region
      _
    $region17: #{cadirec_forward.1} parent=1 // pred_fallthru
      _
    // Predicated region
    $region18: #{cadirec_forward.1} parent=1 // pred_check
      _
    $region19: #{cadirec_forward.1} parent=1 // pred_check_branch
      %22 = sbr.rel (0) target = $region21
    $region20: #{cadirec_forward.1} parent=1 // pred_region
      _
    $region21: #{cadirec_forward.1} parent=1 // pred_fallthru
      _
    // Predicated region
    $region22: #{cadirec_forward.1} parent=1 // pred_check
      _
    $region23: #{cadirec_forward.1} parent=1 // pred_check_branch
      %24 = sbr.rel (0) target = $region25
    $region24: #{cadirec_forward.1} parent=1 // pred_region
      _
    $region25: #{cadirec_forward.1} parent=1 // pred_fallthru
      _
    // Predicated region
    $region26: #{cadirec_forward.1} parent=1 // pred_check
      _
    $region27: #{cadirec_forward.1} parent=1 // pred_check_branch
      %26 = sbr.rel (0) target = $region29
    $region28: #{cadirec_forward.1} parent=1 // pred_region
      _
    $region29: #{cadirec_forward.1} parent=1 // pred_fallthru
      _
    %v27 = vld [vmem:[%s0] sm:$0xff]
    %v28 = vld [vmem:[%s0 + $0x8] sm:$0xff]
    %v29 = vld [vmem:[%s0 + $0x10] sm:$0xff]
    %v30 = vld [vmem:[%s0 + $0x18] sm:$0xff]
    %v31 = vld [vmem:[%s1] sm:$0xff]
    %v32 = vld [vmem:[%s1 + $0x8] sm:$0xff]
    %v33 = vld [vmem:[%s1 + $0x10] sm:$0xff]
    %v34 = vld [vmem:[%s1 + $0x18] sm:$0xff]
    %v35 = vld [vmem:[%s1 + $0x20] sm:$0xff]
    %v36 = vld [vmem:[%s1 + $0x28] sm:$0xff]
    %v37 = vld [vmem:[%s1 + $0x30] sm:$0xff]
    %v38 = vld [vmem:[%s1 + $0x38] sm:$0xff]
    %v39 = vld [vmem:[%s6] sm:$0xff]
    %v40 = vld [vmem:[%s6 + $0x8] sm:$0xff]
    %v41 = vld [vmem:[%s2] sm:$0xff]
    %v42 = vld [vmem:[%s2 + $0x8] sm:$0xff]
    %v43 = vld [vmem:[%s2 + $0x10] sm:$0xff]
    %v44 = vld [vmem:[%s2 + $0x18] sm:$0xff]
    %v45 = vld [vmem:[%s2 + $0x20] sm:$0xff]
    %v46 = vld [vmem:[%s2 + $0x28] sm:$0xff]
    %v47 = vld [vmem:[%s2 + $0x30] sm:$0xff]
    %v48 = vld [vmem:[%s2 + $0x38] sm:$0xff]
    %v49 = vlaneseq
    %v50 = vshrl.u32 %v49, 7
    %v51 = vsub.s32 0, %v50
    %v52 = vrot.slane %v39, %v51
    %vm53 = vcmask 523264
    %v55 = vsel %vm53, %v27, 0
    %v58 = vsel %vm53, %v28, 0
    %v61 = vsel %vm53, %v29, 0
    %v64 = vsel %vm53, %v30, 0
    %66 = vmatprep.subr.mxu0 0.0
    %67 = vmatpush1.msra.mxu0 %v41
    %68 = vmatprep.subr.mxu0 0.0
    %69 = vmatpush1.msra.mxu0 %v42
    %70 = vmatprep.subr.mxu0 0.0
    %71 = vmatpush1.msra.mxu0 %v43
    %72 = vmatprep.subr.mxu0 0.0
    %73 = vmatpush1.msra.mxu0 %v44
    %74 = vmatprep.subr.mxu0 0.0
    %75 = vmatpush1.msra.mxu0 %v45
    %76 = vmatprep.subr.mxu0 0.0
    %77 = vmatpush1.msra.mxu0 %v46
    %78 = vmatprep.subr.mxu0 0.0
    %79 = vmatpush1.msra.mxu0 %v47
    %80 = vmatprep.subr.mxu0 0.0
    %81 = vmatpush1.msra.mxu0 %v48
    %82 = vmatprep.subr.mxu0 0.0
    %83 = vmatpush1.msra.mxu0 0.0
    %84 = vmatprep.subr.mxu0 0.0
    %85 = vmatpush1.msra.mxu0 0.0
    %86 = vmatprep.subr.mxu0 0.0
    %87 = vmatpush1.msra.mxu0 0.0
    %88 = vmatprep.subr.mxu0 0.0
    %89 = vmatpush1.msra.mxu0 0.0
    %90 = vmatprep.subr.mxu0 0.0
    %91 = vmatpush1.msra.mxu0 0.0
    %92 = vmatprep.subr.mxu0 0.0
    %93 = vmatpush1.msra.mxu0 0.0
    %94 = vmatprep.subr.mxu0 0.0
    %95 = vmatpush1.msra.mxu0 0.0
    %96 = vmatprep.subr.mxu0 0.0
    %97 = vmatpush1.msra.mxu0 0.0
    %98 = vmatprep.subr.mxu0 0.0
    %99 = vmatpush1.msra.mxu0 0.0
    %100 = vmatprep.subr.mxu0 0.0
    %101 = vmatpush1.msra.mxu0 0.0
    %102 = vmatprep.subr.mxu0 0.0
    %103 = vmatpush1.msra.mxu0 0.0
    %104 = vmatprep.subr.mxu0 0.0
    %105 = vmatpush1.msra.mxu0 0.0
    %106 = vmatprep.subr.mxu0 0.0
    %107 = vmatpush1.msra.mxu0 0.0
    %108 = vmatprep.subr.mxu0 0.0
    %109 = vmatpush1.msra.mxu0 0.0
    %110 = vmatprep.subr.mxu0 0.0
    %111 = vmatpush1.msra.mxu0 0.0
    %112 = vmatprep.subr.mxu0 0.0
    %113 = vmatpush1.msra.mxu0 0.0
    %114 = vmatprep.subr.mxu0 0.0
    %115 = vmatpush1.msra.mxu0 0.0
    %116 = vmatprep.subr.mxu0 0.0
    %117 = vmatpush1.msra.mxu0 0.0
    %118 = vmatprep.subr.mxu0 0.0
    %119 = vmatpush1.msra.mxu0 0.0
    %120 = vmatprep.subr.mxu0 0.0
    %121 = vmatpush1.msra.mxu0 0.0
    %122 = vmatprep.subr.mxu0 0.0
    %123 = vmatpush1.msra.mxu0 0.0
    %124 = vmatprep.subr.mxu0 0.0
    %125 = vmatpush1.msra.mxu0 0.0
    %126 = vmatprep.subr.mxu0 0.0
    %127 = vmatpush1.msra.mxu0 0.0
    %128 = vmatprep.subr.mxu0 0.0
    %129 = vmatpush1.msra.mxu0 0.0
    %130 = vmatprep.mubr.f32.mxu0 0.0
    %131 = vmatmul.mubr.f32.gmra.mrb[0].mxu0 %v55
    %v132 = vpop.f32.mrb[0].mxu0
    %v133 = vadd.f32 %v52, %v132
    %v134 = vpop.f32.mrb[0].mxu0
    %135 = vmatprep.mubr.f32.mxu0 0.0
    %136 = vmatmul.mubr.f32.gmra.mrb[0].mxu0 %v58
    %v137 = vpop.f32.mrb[0].mxu0
    %v138 = vadd.f32 %v52, %v137
    %v139 = vpop.f32.mrb[0].mxu0
    %140 = vmatprep.mubr.f32.mxu0 0.0
    %141 = vmatmul.mubr.f32.gmra.mrb[0].mxu0 %v61
    %v142 = vpop.f32.mrb[0].mxu0
    %v143 = vadd.f32 %v52, %v142
    %v144 = vpop.f32.mrb[0].mxu0
    %145 = vmatprep.mubr.f32.mxu0 0.0
    %146 = vmatmul.mubr.f32.gmra.mrb[0].mxu0 %v64
    %v147 = vpop.f32.mrb[0].mxu0
    %v148 = vadd.f32 %v52, %v147
    %v149 = vpop.f32.mrb[0].mxu0
    %150 = vdwg.mxu0
    %s151 = scalar_lea.vmem %s2, 64
    %v152 = vld [vmem:[%s151] sm:$0xff]
    %v153 = vld [vmem:[%s151 + $0x8] sm:$0xff]
    %v154 = vld [vmem:[%s151 + $0x10] sm:$0xff]
    %v155 = vld [vmem:[%s151 + $0x18] sm:$0xff]
    %v156 = vld [vmem:[%s151 + $0x20] sm:$0xff]
    %v157 = vld [vmem:[%s151 + $0x28] sm:$0xff]
    %v158 = vld [vmem:[%s151 + $0x30] sm:$0xff]
    %v159 = vld [vmem:[%s151 + $0x38] sm:$0xff]
    %v160 = vlaneseq
    %v161 = vshrl.u32 %v160, 7
    %v162 = vsub.s32 1, %v161
    %v163 = vrot.slane %v39, %v162
    %164 = vmatprep.subr.mxu0 0.0
    %165 = vmatpush1.msra.mxu0 %v152
    %166 = vmatprep.subr.mxu0 0.0
    %167 = vmatpush1.msra.mxu0 %v153
    %168 = vmatprep.subr.mxu0 0.0
    %169 = vmatpush1.msra.mxu0 %v154
    %170 = vmatprep.subr.mxu0 0.0
    %171 = vmatpush1.msra.mxu0 %v155
    %172 = vmatprep.subr.mxu0 0.0
    %173 = vmatpush1.msra.mxu0 %v156
    %174 = vmatprep.subr.mxu0 0.0
    %175 = vmatpush1.msra.mxu0 %v157
    %176 = vmatprep.subr.mxu0 0.0
    %177 = vmatpush1.msra.mxu0 %v158
    %178 = vmatprep.subr.mxu0 0.0
    %179 = vmatpush1.msra.mxu0 %v159
    %180 = vmatprep.subr.mxu0 0.0
    %181 = vmatpush1.msra.mxu0 0.0
    %182 = vmatprep.subr.mxu0 0.0
    %183 = vmatpush1.msra.mxu0 0.0
    %184 = vmatprep.subr.mxu0 0.0
    %185 = vmatpush1.msra.mxu0 0.0
    %186 = vmatprep.subr.mxu0 0.0
    %187 = vmatpush1.msra.mxu0 0.0
    %188 = vmatprep.subr.mxu0 0.0
    %189 = vmatpush1.msra.mxu0 0.0
    %190 = vmatprep.subr.mxu0 0.0
    %191 = vmatpush1.msra.mxu0 0.0
    %192 = vmatprep.subr.mxu0 0.0
    %193 = vmatpush1.msra.mxu0 0.0
    %194 = vmatprep.subr.mxu0 0.0
    %195 = vmatpush1.msra.mxu0 0.0
    %196 = vmatprep.subr.mxu0 0.0
    %197 = vmatpush1.msra.mxu0 0.0
    %198 = vmatprep.subr.mxu0 0.0
    %199 = vmatpush1.msra.mxu0 0.0
    %200 = vmatprep.subr.mxu0 0.0
    %201 = vmatpush1.msra.mxu0 0.0
    %202 = vmatprep.subr.mxu0 0.0
    %203 = vmatpush1.msra.mxu0 0.0
    %204 = vmatprep.subr.mxu0 0.0
    %205 = vmatpush1.msra.mxu0 0.0
    %206 = vmatprep.subr.mxu0 0.0
    %207 = vmatpush1.msra.mxu0 0.0
    %208 = vmatprep.subr.mxu0 0.0
    %209 = vmatpush1.msra.mxu0 0.0
    %210 = vmatprep.subr.mxu0 0.0
    %211 = vmatpush1.msra.mxu0 0.0
    %212 = vmatprep.subr.mxu0 0.0
    %213 = vmatpush1.msra.mxu0 0.0
    %214 = vmatprep.subr.mxu0 0.0
    %215 = vmatpush1.msra.mxu0 0.0
    %216 = vmatprep.subr.mxu0 0.0
    %217 = vmatpush1.msra.mxu0 0.0
    %218 = vmatprep.subr.mxu0 0.0
    %219 = vmatpush1.msra.mxu0 0.0
    %220 = vmatprep.subr.mxu0 0.0
    %221 = vmatpush1.msra.mxu0 0.0
    %222 = vmatprep.subr.mxu0 0.0
    %223 = vmatpush1.msra.mxu0 0.0
    %224 = vmatprep.subr.mxu0 0.0
    %225 = vmatpush1.msra.mxu0 0.0
    %226 = vmatprep.subr.mxu0 0.0
    %227 = vmatpush1.msra.mxu0 0.0
    %228 = vmatprep.mubr.f32.mxu0 0.0
    %229 = vmatmul.mubr.f32.gmra.mrb[0].mxu0 %v55
    %v230 = vpop.f32.mrb[0].mxu0
    %v231 = vadd.f32 %v163, %v230
    %v232 = vpop.f32.mrb[0].mxu0
    %233 = vmatprep.mubr.f32.mxu0 0.0
    %234 = vmatmul.mubr.f32.gmra.mrb[0].mxu0 %v58
    %v235 = vpop.f32.mrb[0].mxu0
    %v236 = vadd.f32 %v163, %v235
    %v237 = vpop.f32.mrb[0].mxu0
    %238 = vmatprep.mubr.f32.mxu0 0.0
    %239 = vmatmul.mubr.f32.gmra.mrb[0].mxu0 %v61
    %v240 = vpop.f32.mrb[0].mxu0
    %v241 = vadd.f32 %v163, %v240
    %v242 = vpop.f32.mrb[0].mxu0
    %243 = vmatprep.mubr.f32.mxu0 0.0
    %244 = vmatmul.mubr.f32.gmra.mrb[0].mxu0 %v64
    %v245 = vpop.f32.mrb[0].mxu0
    %v246 = vadd.f32 %v163, %v245
    %v247 = vpop.f32.mrb[0].mxu0
    %248 = vdwg.mxu0
    %s249 = scalar_lea.vmem %s2, 128
    %v250 = vld [vmem:[%s249] sm:$0xff]
    %v251 = vld [vmem:[%s249 + $0x8] sm:$0xff]
    %v252 = vld [vmem:[%s249 + $0x10] sm:$0xff]
    %v253 = vld [vmem:[%s249 + $0x18] sm:$0xff]
    %v254 = vld [vmem:[%s249 + $0x20] sm:$0xff]
    %v255 = vld [vmem:[%s249 + $0x28] sm:$0xff]
    %v256 = vld [vmem:[%s249 + $0x30] sm:$0xff]
    %v257 = vld [vmem:[%s249 + $0x38] sm:$0xff]
    %v258 = vlaneseq
    %v259 = vshrl.u32 %v258, 7
    %v260 = vsub.s32 2, %v259
    %v261 = vrot.slane %v39, %v260
    %262 = vmatprep.subr.mxu0 0.0
    %263 = vmatpush1.msra.mxu0 %v250
    %264 = vmatprep.subr.mxu0 0.0
    %265 = vmatpush1.msra.mxu0 %v251
    %266 = vmatprep.subr.mxu0 0.0
    %267 = vmatpush1.msra.mxu0 %v252
    %268 = vmatprep.subr.mxu0 0.0
    %269 = vmatpush1.msra.mxu0 %v253
    %270 = vmatprep.subr.mxu0 0.0
    %271 = vmatpush1.msra.mxu0 %v254
    %272 = vmatprep.subr.mxu0 0.0
    %273 = vmatpush1.msra.mxu0 %v255
    %274 = vmatprep.subr.mxu0 0.0
    %275 = vmatpush1.msra.mxu0 %v256
    %276 = vmatprep.subr.mxu0 0.0
    %277 = vmatpush1.msra.mxu0 %v257
    %278 = vmatprep.subr.mxu0 0.0
    %279 = vmatpush1.msra.mxu0 0.0
    %280 = vmatprep.subr.mxu0 0.0
    %281 = vmatpush1.msra.mxu0 0.0
    %282 = vmatprep.subr.mxu0 0.0
    %283 = vmatpush1.msra.mxu0 0.0
    %284 = vmatprep.subr.mxu0 0.0
    %285 = vmatpush1.msra.mxu0 0.0
    %286 = vmatprep.subr.mxu0 0.0
    %287 = vmatpush1.msra.mxu0 0.0
    %288 = vmatprep.subr.mxu0 0.0
    %289 = vmatpush1.msra.mxu0 0.0
    %290 = vmatprep.subr.mxu0 0.0
    %291 = vmatpush1.msra.mxu0 0.0
    %292 = vmatprep.subr.mxu0 0.0
    %293 = vmatpush1.msra.mxu0 0.0
    %294 = vmatprep.subr.mxu0 0.0
    %295 = vmatpush1.msra.mxu0 0.0
    %296 = vmatprep.subr.mxu0 0.0
    %297 = vmatpush1.msra.mxu0 0.0
    %298 = vmatprep.subr.mxu0 0.0
    %299 = vmatpush1.msra.mxu0 0.0
    %300 = vmatprep.subr.mxu0 0.0
    %301 = vmatpush1.msra.mxu0 0.0
    %302 = vmatprep.subr.mxu0 0.0
    %303 = vmatpush1.msra.mxu0 0.0
    %304 = vmatprep.subr.mxu0 0.0
    %305 = vmatpush1.msra.mxu0 0.0
    %306 = vmatprep.subr.mxu0 0.0
    %307 = vmatpush1.msra.mxu0 0.0
    %308 = vmatprep.subr.mxu0 0.0
    %309 = vmatpush1.msra.mxu0 0.0
    %310 = vmatprep.subr.mxu0 0.0
    %311 = vmatpush1.msra.mxu0 0.0
    %312 = vmatprep.subr.mxu0 0.0
    %313 = vmatpush1.msra.mxu0 0.0
    %314 = vmatprep.subr.mxu0 0.0
    %315 = vmatpush1.msra.mxu0 0.0
    %316 = vmatprep.subr.mxu0 0.0
    %317 = vmatpush1.msra.mxu0 0.0
    %318 = vmatprep.subr.mxu0 0.0
    %319 = vmatpush1.msra.mxu0 0.0
    %320 = vmatprep.subr.mxu0 0.0
    %321 = vmatpush1.msra.mxu0 0.0
    %322 = vmatprep.subr.mxu0 0.0
    %323 = vmatpush1.msra.mxu0 0.0
    %324 = vmatprep.subr.mxu0 0.0
    %325 = vmatpush1.msra.mxu0 0.0
    %326 = vmatprep.mubr.f32.mxu0 0.0
    %327 = vmatmul.mubr.f32.gmra.mrb[0].mxu0 %v55
    %v328 = vpop.f32.mrb[0].mxu0
    %v329 = vadd.f32 %v261, %v328
    %v330 = vpop.f32.mrb[0].mxu0
    %331 = vmatprep.mubr.f32.mxu0 0.0
    %332 = vmatmul.mubr.f32.gmra.mrb[0].mxu0 %v58
    %v333 = vpop.f32.mrb[0].mxu0
    %v334 = vadd.f32 %v261, %v333
    %v335 = vpop.f32.mrb[0].mxu0
    %336 = vmatprep.mubr.f32.mxu0 0.0
    %337 = vmatmul.mubr.f32.gmra.mrb[0].mxu0 %v61
    %v338 = vpop.f32.mrb[0].mxu0
    %v339 = vadd.f32 %v261, %v338
    %v340 = vpop.f32.mrb[0].mxu0
    %341 = vmatprep.mubr.f32.mxu0 0.0
    %342 = vmatmul.mubr.f32.gmra.mrb[0].mxu0 %v64
    %v343 = vpop.f32.mrb[0].mxu0
    %v344 = vadd.f32 %v261, %v343
    %v345 = vpop.f32.mrb[0].mxu0
    %346 = vdwg.mxu0
    %s347 = scalar_lea.vmem %s2, 192
    %v348 = vld [vmem:[%s347] sm:$0xff]
    %v349 = vld [vmem:[%s347 + $0x8] sm:$0xff]
    %v350 = vld [vmem:[%s347 + $0x10] sm:$0xff]
    %v351 = vld [vmem:[%s347 + $0x18] sm:$0xff]
    %v352 = vld [vmem:[%s347 + $0x20] sm:$0xff]
    %v353 = vld [vmem:[%s347 + $0x28] sm:$0xff]
    %v354 = vld [vmem:[%s347 + $0x30] sm:$0xff]
    %v355 = vld [vmem:[%s347 + $0x38] sm:$0xff]
    %v356 = vlaneseq
    %v357 = vshrl.u32 %v356, 7
    %v358 = vsub.s32 3, %v357
    %v359 = vrot.slane %v39, %v358
    %360 = vmatprep.subr.mxu0 0.0
    %361 = vmatpush1.msra.mxu0 %v348
    %362 = vmatprep.subr.mxu0 0.0
    %363 = vmatpush1.msra.mxu0 %v349
    %364 = vmatprep.subr.mxu0 0.0
    %365 = vmatpush1.msra.mxu0 %v350
    %366 = vmatprep.subr.mxu0 0.0
    %367 = vmatpush1.msra.mxu0 %v351
    %368 = vmatprep.subr.mxu0 0.0
    %369 = vmatpush1.msra.mxu0 %v352
    %370 = vmatprep.subr.mxu0 0.0
    %371 = vmatpush1.msra.mxu0 %v353
    %372 = vmatprep.subr.mxu0 0.0
    %373 = vmatpush1.msra.mxu0 %v354
    %374 = vmatprep.subr.mxu0 0.0
    %375 = vmatpush1.msra.mxu0 %v355
    %376 = vmatprep.subr.mxu0 0.0
    %377 = vmatpush1.msra.mxu0 0.0
    %378 = vmatprep.subr.mxu0 0.0
    %379 = vmatpush1.msra.mxu0 0.0
    %380 = vmatprep.subr.mxu0 0.0
    %381 = vmatpush1.msra.mxu0 0.0
    %382 = vmatprep.subr.mxu0 0.0
    %383 = vmatpush1.msra.mxu0 0.0
    %384 = vmatprep.subr.mxu0 0.0
    %385 = vmatpush1.msra.mxu0 0.0
    %386 = vmatprep.subr.mxu0 0.0
    %387 = vmatpush1.msra.mxu0 0.0
    %388 = vmatprep.subr.mxu0 0.0
    %389 = vmatpush1.msra.mxu0 0.0
    %390 = vmatprep.subr.mxu0 0.0
    %391 = vmatpush1.msra.mxu0 0.0
    %392 = vmatprep.subr.mxu0 0.0
    %393 = vmatpush1.msra.mxu0 0.0
    %394 = vmatprep.subr.mxu0 0.0
    %395 = vmatpush1.msra.mxu0 0.0
    %396 = vmatprep.subr.mxu0 0.0
    %397 = vmatpush1.msra.mxu0 0.0
    %398 = vmatprep.subr.mxu0 0.0
    %399 = vmatpush1.msra.mxu0 0.0
    %400 = vmatprep.subr.mxu0 0.0
    %401 = vmatpush1.msra.mxu0 0.0
    %402 = vmatprep.subr.mxu0 0.0
    %403 = vmatpush1.msra.mxu0 0.0
    %404 = vmatprep.subr.mxu0 0.0
    %405 = vmatpush1.msra.mxu0 0.0
    %406 = vmatprep.subr.mxu0 0.0
    %407 = vmatpush1.msra.mxu0 0.0
    %408 = vmatprep.subr.mxu0 0.0
    %409 = vmatpush1.msra.mxu0 0.0
    %410 = vmatprep.subr.mxu0 0.0
    %411 = vmatpush1.msra.mxu0 0.0
    %412 = vmatprep.subr.mxu0 0.0
    %413 = vmatpush1.msra.mxu0 0.0
    %414 = vmatprep.subr.mxu0 0.0
    %415 = vmatpush1.msra.mxu0 0.0
    %416 = vmatprep.subr.mxu0 0.0
    %417 = vmatpush1.msra.mxu0 0.0
    %418 = vmatprep.subr.mxu0 0.0
    %419 = vmatpush1.msra.mxu0 0.0
    %420 = vmatprep.subr.mxu0 0.0
    %421 = vmatpush1.msra.mxu0 0.0
    %422 = vmatprep.subr.mxu0 0.0
    %423 = vmatpush1.msra.mxu0 0.0
    %424 = vmatprep.mubr.f32.mxu0 0.0
    %425 = vmatmul.mubr.f32.gmra.mrb[0].mxu0 %v55
    %v426 = vpop.f32.mrb[0].mxu0
    %v427 = vadd.f32 %v359, %v426
    %v428 = vpop.f32.mrb[0].mxu0
    %429 = vmatprep.mubr.f32.mxu0 0.0
    %430 = vmatmul.mubr.f32.gmra.mrb[0].mxu0 %v58
    %v431 = vpop.f32.mrb[0].mxu0
    %v432 = vadd.f32 %v359, %v431
    %v433 = vpop.f32.mrb[0].mxu0
    %434 = vmatprep.mubr.f32.mxu0 0.0
    %435 = vmatmul.mubr.f32.gmra.mrb[0].mxu0 %v61
    %v436 = vpop.f32.mrb[0].mxu0
    %v437 = vadd.f32 %v359, %v436
    %v438 = vpop.f32.mrb[0].mxu0
    %439 = vmatprep.mubr.f32.mxu0 0.0
    %440 = vmatmul.mubr.f32.gmra.mrb[0].mxu0 %v64
    %v441 = vpop.f32.mrb[0].mxu0
    %v442 = vadd.f32 %v359, %v441
    %v443 = vpop.f32.mrb[0].mxu0
    %444 = vdwg.mxu0
    %s445 = scalar_lea.vmem %s2, 256
    %v446 = vld [vmem:[%s445] sm:$0xff]
    %v447 = vld [vmem:[%s445 + $0x8] sm:$0xff]
    %v448 = vld [vmem:[%s445 + $0x10] sm:$0xff]
    %v449 = vld [vmem:[%s445 + $0x18] sm:$0xff]
    %v450 = vld [vmem:[%s445 + $0x20] sm:$0xff]
    %v451 = vld [vmem:[%s445 + $0x28] sm:$0xff]
    %v452 = vld [vmem:[%s445 + $0x30] sm:$0xff]
    %v453 = vld [vmem:[%s445 + $0x38] sm:$0xff]
    %v454 = vlaneseq
    %v455 = vshrl.u32 %v454, 7
    %v456 = vsub.s32 4, %v455
    %v457 = vrot.slane %v39, %v456
    %458 = vmatprep.subr.mxu0 0.0
    %459 = vmatpush1.msra.mxu0 %v446
    %460 = vmatprep.subr.mxu0 0.0
    %461 = vmatpush1.msra.mxu0 %v447
    %462 = vmatprep.subr.mxu0 0.0
    %463 = vmatpush1.msra.mxu0 %v448
    %464 = vmatprep.subr.mxu0 0.0
    %465 = vmatpush1.msra.mxu0 %v449
    %466 = vmatprep.subr.mxu0 0.0
    %467 = vmatpush1.msra.mxu0 %v450
    %468 = vmatprep.subr.mxu0 0.0
    %469 = vmatpush1.msra.mxu0 %v451
    %470 = vmatprep.subr.mxu0 0.0
    %471 = vmatpush1.msra.mxu0 %v452
    %472 = vmatprep.subr.mxu0 0.0
    %473 = vmatpush1.msra.mxu0 %v453
    %474 = vmatprep.subr.mxu0 0.0
    %475 = vmatpush1.msra.mxu0 0.0
    %476 = vmatprep.subr.mxu0 0.0
    %477 = vmatpush1.msra.mxu0 0.0
    %478 = vmatprep.subr.mxu0 0.0
    %479 = vmatpush1.msra.mxu0 0.0
    %480 = vmatprep.subr.mxu0 0.0
    %481 = vmatpush1.msra.mxu0 0.0
    %482 = vmatprep.subr.mxu0 0.0
    %483 = vmatpush1.msra.mxu0 0.0
    %484 = vmatprep.subr.mxu0 0.0
    %485 = vmatpush1.msra.mxu0 0.0
    %486 = vmatprep.subr.mxu0 0.0
    %487 = vmatpush1.msra.mxu0 0.0
    %488 = vmatprep.subr.mxu0 0.0
    %489 = vmatpush1.msra.mxu0 0.0
    %490 = vmatprep.subr.mxu0 0.0
    %491 = vmatpush1.msra.mxu0 0.0
    %492 = vmatprep.subr.mxu0 0.0
    %493 = vmatpush1.msra.mxu0 0.0
    %494 = vmatprep.subr.mxu0 0.0
    %495 = vmatpush1.msra.mxu0 0.0
    %496 = vmatprep.subr.mxu0 0.0
    %497 = vmatpush1.msra.mxu0 0.0
    %498 = vmatprep.subr.mxu0 0.0
    %499 = vmatpush1.msra.mxu0 0.0
    %500 = vmatprep.subr.mxu0 0.0
    %501 = vmatpush1.msra.mxu0 0.0
    %502 = vmatprep.subr.mxu0 0.0
    %503 = vmatpush1.msra.mxu0 0.0
    %504 = vmatprep.subr.mxu0 0.0
    %505 = vmatpush1.msra.mxu0 0.0
    %506 = vmatprep.subr.mxu0 0.0
    %507 = vmatpush1.msra.mxu0 0.0
    %508 = vmatprep.subr.mxu0 0.0
    %509 = vmatpush1.msra.mxu0 0.0
    %510 = vmatprep.subr.mxu0 0.0
    %511 = vmatpush1.msra.mxu0 0.0
    %512 = vmatprep.subr.mxu0 0.0
    %513 = vmatpush1.msra.mxu0 0.0
    %514 = vmatprep.subr.mxu0 0.0
    %515 = vmatpush1.msra.mxu0 0.0
    %516 = vmatprep.subr.mxu0 0.0
    %517 = vmatpush1.msra.mxu0 0.0
    %518 = vmatprep.subr.mxu0 0.0
    %519 = vmatpush1.msra.mxu0 0.0
    %520 = vmatprep.subr.mxu0 0.0
    %521 = vmatpush1.msra.mxu0 0.0
    %522 = vmatprep.mubr.f32.mxu0 0.0
    %523 = vmatmul.mubr.f32.gmra.mrb[0].mxu0 %v55
    %v524 = vpop.f32.mrb[0].mxu0
    %v525 = vadd.f32 %v457, %v524
    %v526 = vpop.f32.mrb[0].mxu0
    %527 = vmatprep.mubr.f32.mxu0 0.0
    %528 = vmatmul.mubr.f32.gmra.mrb[0].mxu0 %v58
    %v529 = vpop.f32.mrb[0].mxu0
    %v530 = vadd.f32 %v457, %v529
    %v531 = vpop.f32.mrb[0].mxu0
    %532 = vmatprep.mubr.f32.mxu0 0.0
    %533 = vmatmul.mubr.f32.gmra.mrb[0].mxu0 %v61
    %v534 = vpop.f32.mrb[0].mxu0
    %v535 = vadd.f32 %v457, %v534
    %v536 = vpop.f32.mrb[0].mxu0
    %537 = vmatprep.mubr.f32.mxu0 0.0
    %538 = vmatmul.mubr.f32.gmra.mrb[0].mxu0 %v64
    %v539 = vpop.f32.mrb[0].mxu0
    %v540 = vadd.f32 %v457, %v539
    %v541 = vpop.f32.mrb[0].mxu0
    %542 = vdwg.mxu0
    %s543 = scalar_lea.vmem %s2, 320
    %v544 = vld [vmem:[%s543] sm:$0xff]
    %v545 = vld [vmem:[%s543 + $0x8] sm:$0xff]
    %v546 = vld [vmem:[%s543 + $0x10] sm:$0xff]
    %v547 = vld [vmem:[%s543 + $0x18] sm:$0xff]
    %v548 = vld [vmem:[%s543 + $0x20] sm:$0xff]
    %v549 = vld [vmem:[%s543 + $0x28] sm:$0xff]
    %v550 = vld [vmem:[%s543 + $0x30] sm:$0xff]
    %v551 = vld [vmem:[%s543 + $0x38] sm:$0xff]
    %v552 = vlaneseq
    %v553 = vshrl.u32 %v552, 7
    %v554 = vsub.s32 5, %v553
    %v555 = vrot.slane %v39, %v554
    %556 = vmatprep.subr.mxu0 0.0
    %557 = vmatpush1.msra.mxu0 %v544
    %558 = vmatprep.subr.mxu0 0.0
    %559 = vmatpush1.msra.mxu0 %v545
    %560 = vmatprep.subr.mxu0 0.0
    %561 = vmatpush1.msra.mxu0 %v546
    %562 = vmatprep.subr.mxu0 0.0
    %563 = vmatpush1.msra.mxu0 %v547
    %564 = vmatprep.subr.mxu0 0.0
    %565 = vmatpush1.msra.mxu0 %v548
    %566 = vmatprep.subr.mxu0 0.0
    %567 = vmatpush1.msra.mxu0 %v549
    %568 = vmatprep.subr.mxu0 0.0
    %569 = vmatpush1.msra.mxu0 %v550
    %570 = vmatprep.subr.mxu0 0.0
    %571 = vmatpush1.msra.mxu0 %v551
    %572 = vmatprep.subr.mxu0 0.0
    %573 = vmatpush1.msra.mxu0 0.0
    %574 = vmatprep.subr.mxu0 0.0
    %575 = vmatpush1.msra.mxu0 0.0
    %576 = vmatprep.subr.mxu0 0.0
    %577 = vmatpush1.msra.mxu0 0.0
    %578 = vmatprep.subr.mxu0 0.0
    %579 = vmatpush1.msra.mxu0 0.0
    %580 = vmatprep.subr.mxu0 0.0
    %581 = vmatpush1.msra.mxu0 0.0
    %582 = vmatprep.subr.mxu0 0.0
    %583 = vmatpush1.msra.mxu0 0.0
    %584 = vmatprep.subr.mxu0 0.0
    %585 = vmatpush1.msra.mxu0 0.0
    %586 = vmatprep.subr.mxu0 0.0
    %587 = vmatpush1.msra.mxu0 0.0
    %588 = vmatprep.subr.mxu0 0.0
    %589 = vmatpush1.msra.mxu0 0.0
    %590 = vmatprep.subr.mxu0 0.0
    %591 = vmatpush1.msra.mxu0 0.0
    %592 = vmatprep.subr.mxu0 0.0
    %593 = vmatpush1.msra.mxu0 0.0
    %594 = vmatprep.subr.mxu0 0.0
    %595 = vmatpush1.msra.mxu0 0.0
    %596 = vmatprep.subr.mxu0 0.0
    %597 = vmatpush1.msra.mxu0 0.0
    %598 = vmatprep.subr.mxu0 0.0
    %599 = vmatpush1.msra.mxu0 0.0
    %600 = vmatprep.subr.mxu0 0.0
    %601 = vmatpush1.msra.mxu0 0.0
    %602 = vmatprep.subr.mxu0 0.0
    %603 = vmatpush1.msra.mxu0 0.0
    %604 = vmatprep.subr.mxu0 0.0
    %605 = vmatpush1.msra.mxu0 0.0
    %606 = vmatprep.subr.mxu0 0.0
    %607 = vmatpush1.msra.mxu0 0.0
    %608 = vmatprep.subr.mxu0 0.0
    %609 = vmatpush1.msra.mxu0 0.0
    %610 = vmatprep.subr.mxu0 0.0
    %611 = vmatpush1.msra.mxu0 0.0
    %612 = vmatprep.subr.mxu0 0.0
    %613 = vmatpush1.msra.mxu0 0.0
    %614 = vmatprep.subr.mxu0 0.0
    %615 = vmatpush1.msra.mxu0 0.0
    %616 = vmatprep.subr.mxu0 0.0
    %617 = vmatpush1.msra.mxu0 0.0
    %618 = vmatprep.subr.mxu0 0.0
    %619 = vmatpush1.msra.mxu0 0.0
    %620 = vmatprep.mubr.f32.mxu0 0.0
    %621 = vmatmul.mubr.f32.gmra.mrb[0].mxu0 %v55
    %v622 = vpop.f32.mrb[0].mxu0
    %v623 = vadd.f32 %v555, %v622
    %v624 = vpop.f32.mrb[0].mxu0
    %625 = vmatprep.mubr.f32.mxu0 0.0
    %626 = vmatmul.mubr.f32.gmra.mrb[0].mxu0 %v58
    %v627 = vpop.f32.mrb[0].mxu0
    %v628 = vadd.f32 %v555, %v627
    %v629 = vpop.f32.mrb[0].mxu0
    %630 = vmatprep.mubr.f32.mxu0 0.0
    %631 = vmatmul.mubr.f32.gmra.mrb[0].mxu0 %v61
    %v632 = vpop.f32.mrb[0].mxu0
    %v633 = vadd.f32 %v555, %v632
    %v634 = vpop.f32.mrb[0].mxu0
    %635 = vmatprep.mubr.f32.mxu0 0.0
    %636 = vmatmul.mubr.f32.gmra.mrb[0].mxu0 %v64
    %v637 = vpop.f32.mrb[0].mxu0
    %v638 = vadd.f32 %v555, %v637
    %v639 = vpop.f32.mrb[0].mxu0
    %640 = vdwg.mxu0
    %vm641 = vcmask 261120
    %v643 = vsel %vm641, %v133, 0
    %v646 = vsel %vm641, %v138, 0
    %v649 = vsel %vm641, %v143, 0
    %v652 = vsel %vm641, %v148, 0
    %v655 = vsel %vm641, %v231, 0
    %v658 = vsel %vm641, %v236, 0
    %v661 = vsel %vm641, %v241, 0
    %v664 = vsel %vm641, %v246, 0
    %v667 = vsel %vm641, %v329, 0
    %v670 = vsel %vm641, %v334, 0
    %v673 = vsel %vm641, %v339, 0
    %v676 = vsel %vm641, %v344, 0
    %v679 = vsel %vm641, %v427, 0
    %v682 = vsel %vm641, %v432, 0
    %v685 = vsel %vm641, %v437, 0
    %v688 = vsel %vm641, %v442, 0
    %690 = vmatprep.subr.mxu0 0.0
    %691 = vmatpush1.xpose.msra.mxu0 %v667
    %692 = vmatprep.subr.mxu0 0.0
    %693 = vmatpush1.xpose.msra.mxu0 %v670
    %694 = vmatprep.subr.mxu0 0.0
    %695 = vmatpush1.xpose.msra.mxu0 %v673
    %696 = vmatprep.subr.mxu0 0.0
    %697 = vmatpush1.xpose.msra.mxu0 %v676
    %698 = vmatprep.subr.mxu0 0.0
    %699 = vmatpush1.xpose.msra.mxu0 %v679
    %700 = vmatprep.subr.mxu0 0.0
    %701 = vmatpush1.xpose.msra.mxu0 %v682
    %702 = vmatprep.subr.mxu0 0.0
    %703 = vmatpush1.xpose.msra.mxu0 %v685
    %704 = vmatprep.subr.mxu0 0.0
    %705 = vmatpush1.xpose.msra.mxu0 %v688
    %706 = vmatprep.subr.mxu0 0.0
    %707 = vmatpush1.xpose.msra.mxu0 0.0
    %708 = vmatprep.subr.mxu0 0.0
    %709 = vmatpush1.xpose.msra.mxu0 0.0
    %710 = vmatprep.subr.mxu0 0.0
    %711 = vmatpush1.xpose.msra.mxu0 0.0
    %712 = vmatprep.subr.mxu0 0.0
    %713 = vmatpush1.xpose.msra.mxu0 0.0
    %714 = vmatprep.subr.mxu0 0.0
    %715 = vmatpush1.xpose.msra.mxu0 0.0
    %716 = vmatprep.subr.mxu0 0.0
    %717 = vmatpush1.xpose.msra.mxu0 0.0
    %718 = vmatprep.subr.mxu0 0.0
    %719 = vmatpush1.xpose.msra.mxu0 0.0
    %720 = vmatprep.subr.mxu0 0.0
    %721 = vmatpush1.xpose.msra.mxu0 0.0
    %722 = vmatprep.subr.mxu0 0.0
    %723 = vmatpush1.xpose.msra.mxu0 0.0
    %724 = vmatprep.subr.mxu0 0.0
    %725 = vmatpush1.xpose.msra.mxu0 0.0
    %726 = vmatprep.subr.mxu0 0.0
    %727 = vmatpush1.xpose.msra.mxu0 0.0
    %728 = vmatprep.subr.mxu0 0.0
    %729 = vmatpush1.xpose.msra.mxu0 0.0
    %730 = vmatprep.subr.mxu0 0.0
    %731 = vmatpush1.xpose.msra.mxu0 0.0
    %732 = vmatprep.subr.mxu0 0.0
    %733 = vmatpush1.xpose.msra.mxu0 0.0
    %734 = vmatprep.subr.mxu0 0.0
    %735 = vmatpush1.xpose.msra.mxu0 0.0
    %736 = vmatprep.subr.mxu0 0.0
    %737 = vmatpush1.xpose.msra.mxu0 0.0
    %738 = vmatprep.subr.mxu0 0.0
    %739 = vmatpush1.xpose.msra.mxu0 0.0
    %740 = vmatprep.subr.mxu0 0.0
    %741 = vmatpush1.xpose.msra.mxu0 0.0
    %742 = vmatprep.subr.mxu0 0.0
    %743 = vmatpush1.xpose.msra.mxu0 0.0
    %744 = vmatprep.subr.mxu0 0.0
    %745 = vmatpush1.xpose.msra.mxu0 0.0
    %746 = vmatprep.subr.mxu0 0.0
    %747 = vmatpush1.xpose.msra.mxu0 0.0
    %748 = vmatprep.subr.mxu0 0.0
    %749 = vmatpush1.xpose.msra.mxu0 0.0
    %750 = vmatprep.subr.mxu0 0.0
    %751 = vmatpush1.xpose.msra.mxu0 0.0
    %752 = vmatprep.subr.mxu0 0.0
    %753 = vmatpush1.xpose.msra.mxu0 0.0
    %754 = vmatprep.mubr.f32.mxu0 0.0
    %755 = vmatmul.mubr.f32.gmra.mrb[0].mxu0 %v643
    %v756 = vpop.f32.mrb[0].mxu0
    %v757 = vadd.f32 %v31, %v756
    %v758 = vpop.f32.mrb[0].mxu0
    %759 = vmatprep.mubr.f32.mxu0 0.0
    %760 = vmatmul.mubr.f32.gmra.mrb[0].mxu0 %v646
    %v761 = vpop.f32.mrb[0].mxu0
    %v762 = vadd.f32 %v32, %v761
    %v763 = vpop.f32.mrb[0].mxu0
    %764 = vmatprep.mubr.f32.mxu0 0.0
    %765 = vmatmul.mubr.f32.gmra.mrb[0].mxu0 %v649
    %v766 = vpop.f32.mrb[0].mxu0
    %v767 = vadd.f32 %v33, %v766
    %v768 = vpop.f32.mrb[0].mxu0
    %769 = vmatprep.mubr.f32.mxu0 0.0
    %770 = vmatmul.mubr.f32.gmra.mrb[0].mxu0 %v652
    %v771 = vpop.f32.mrb[0].mxu0
    %v772 = vadd.f32 %v34, %v771
    %v773 = vpop.f32.mrb[0].mxu0
    %774 = vmatprep.mubr.f32.mxu0 0.0
    %775 = vmatmul.mubr.f32.gmra.mrb[0].mxu0 %v655
    %v776 = vpop.f32.mrb[0].mxu0
    %v777 = vadd.f32 %v35, %v776
    %v778 = vpop.f32.mrb[0].mxu0
    %779 = vmatprep.mubr.f32.mxu0 0.0
    %780 = vmatmul.mubr.f32.gmra.mrb[0].mxu0 %v658
    %v781 = vpop.f32.mrb[0].mxu0
    %v782 = vadd.f32 %v36, %v781
    %v783 = vpop.f32.mrb[0].mxu0
    %784 = vmatprep.mubr.f32.mxu0 0.0
    %785 = vmatmul.mubr.f32.gmra.mrb[0].mxu0 %v661
    %v786 = vpop.f32.mrb[0].mxu0
    %v787 = vadd.f32 %v37, %v786
    %v788 = vpop.f32.mrb[0].mxu0
    %789 = vmatprep.mubr.f32.mxu0 0.0
    %790 = vmatmul.mubr.f32.gmra.mrb[0].mxu0 %v664
    %v791 = vpop.f32.mrb[0].mxu0
    %v792 = vadd.f32 %v38, %v791
    %v793 = vpop.f32.mrb[0].mxu0
    %794 = vdwg.mxu0
    %v795 = vsel %vm53, %v757, -inf
    %796 = vmax.xlane.f32.xlu0 %v795
    %v797 = vpop.xlane.xlu0 %796
    %v798 = vsel %vm53, %v762, -inf
    %799 = vmax.xlane.f32.xlu0 %v798
    %v800 = vpop.xlane.xlu0 %799
    %v801 = vsel %vm53, %v767, -inf
    %802 = vmax.xlane.f32.xlu0 %v801
    %v803 = vpop.xlane.xlu0 %802
    %v804 = vsel %vm53, %v772, -inf
    %805 = vmax.xlane.f32.xlu0 %v804
    %v806 = vpop.xlane.xlu0 %805
    %v807 = vsel %vm53, %v777, -inf
    %808 = vmax.xlane.f32.xlu0 %v807
    %v809 = vpop.xlane.xlu0 %808
    %v810 = vsel %vm53, %v782, -inf
    %811 = vmax.xlane.f32.xlu0 %v810
    %v812 = vpop.xlane.xlu0 %811
    %v813 = vsel %vm53, %v787, -inf
    %814 = vmax.xlane.f32.xlu0 %v813
    %v815 = vpop.xlane.xlu0 %814
    %v816 = vsel %vm53, %v792, -inf
    %817 = vmax.xlane.f32.xlu0 %v816
    %v818 = vpop.xlane.xlu0 %817
    %v819 = vsub.f32 %v757, %v797
    %v820 = vsub.f32 %v762, %v800
    %v821 = vsub.f32 %v767, %v803
    %v822 = vsub.f32 %v772, %v806
    %v823 = vsub.f32 %v777, %v809
    %v824 = vsub.f32 %v782, %v812
    %v825 = vsub.f32 %v787, %v815
    %v826 = vsub.f32 %v792, %v818
    %v827 = vmul.f32 %v819, 1.442695
    %v828 = vpow.pop %v827
    %v829 = vmul.f32 %v820, 1.442695
    %v830 = vpow.pop %v829
    %v831 = vmul.f32 %v821, 1.442695
    %v832 = vpow.pop %v831
    %v833 = vmul.f32 %v822, 1.442695
    %v834 = vpow.pop %v833
    %v835 = vmul.f32 %v823, 1.442695
    %v836 = vpow.pop %v835
    %v837 = vmul.f32 %v824, 1.442695
    %v838 = vpow.pop %v837
    %v839 = vmul.f32 %v825, 1.442695
    %v840 = vpow.pop %v839
    %v841 = vmul.f32 %v826, 1.442695
    %v842 = vpow.pop %v841
    %v843 = vsel %vm53, %v828, 0.0
    %844 = vadd.xlane.f32.xlu0 %v843
    %v845 = vpop.xlane.xlu0 %844
    %v846 = vsel %vm53, %v830, 0.0
    %847 = vadd.xlane.f32.xlu0 %v846
    %v848 = vpop.xlane.xlu0 %847
    %v849 = vsel %vm53, %v832, 0.0
    %850 = vadd.xlane.f32.xlu0 %v849
    %v851 = vpop.xlane.xlu0 %850
    %v852 = vsel %vm53, %v834, 0.0
    %853 = vadd.xlane.f32.xlu0 %v852
    %v854 = vpop.xlane.xlu0 %853
    %v855 = vsel %vm53, %v836, 0.0
    %856 = vadd.xlane.f32.xlu0 %v855
    %v857 = vpop.xlane.xlu0 %856
    %v858 = vsel %vm53, %v838, 0.0
    %859 = vadd.xlane.f32.xlu0 %v858
    %v860 = vpop.xlane.xlu0 %859
    %v861 = vsel %vm53, %v840, 0.0
    %862 = vadd.xlane.f32.xlu0 %v861
    %v863 = vpop.xlane.xlu0 %862
    %v864 = vsel %vm53, %v842, 0.0
    %865 = vadd.xlane.f32.xlu0 %v864
    %v866 = vpop.xlane.xlu0 %865
    %v867 = vrcp.pop %v845
    %v868 = vrcp.pop %v848
    %v869 = vrcp.pop %v851
    %v870 = vrcp.pop %v854
    %v871 = vrcp.pop %v857
    %v872 = vrcp.pop %v860
    %v873 = vrcp.pop %v863
    %v874 = vrcp.pop %v866
    %v875 = vmul.f32 %v828, %v867
    %v876 = vmul.f32 %v830, %v868
    %v877 = vmul.f32 %v832, %v869
    %v878 = vmul.f32 %v834, %v870
    %v879 = vmul.f32 %v836, %v871
    %v880 = vmul.f32 %v838, %v872
    %v881 = vmul.f32 %v840, %v873
    %v882 = vmul.f32 %v842, %v874
    %v884 = vsel %vm53, %v875, 0
    %v887 = vsel %vm53, %v876, 0
    %v890 = vsel %vm53, %v877, 0
    %v893 = vsel %vm53, %v878, 0
    %v896 = vsel %vm53, %v879, 0
    %v899 = vsel %vm53, %v880, 0
    %v902 = vsel %vm53, %v881, 0
    %v905 = vsel %vm53, %v882, 0
    %907 = vmatprep.subr.mxu0 0.0
    %908 = vmatpush1.msra.mxu0 %v525
    %909 = vmatprep.subr.mxu0 0.0
    %910 = vmatpush1.msra.mxu0 %v530
    %911 = vmatprep.subr.mxu0 0.0
    %912 = vmatpush1.msra.mxu0 %v535
    %913 = vmatprep.subr.mxu0 0.0
    %914 = vmatpush1.msra.mxu0 %v540
    %915 = vmatprep.subr.mxu0 0.0
    %916 = vmatpush1.msra.mxu0 %v623
    %917 = vmatprep.subr.mxu0 0.0
    %918 = vmatpush1.msra.mxu0 %v628
    %919 = vmatprep.subr.mxu0 0.0
    %920 = vmatpush1.msra.mxu0 %v633
    %921 = vmatprep.subr.mxu0 0.0
    %922 = vmatpush1.msra.mxu0 %v638
    %923 = vmatprep.subr.mxu0 0.0
    %924 = vmatpush1.msra.mxu0 0.0
    %925 = vmatprep.subr.mxu0 0.0
    %926 = vmatpush1.msra.mxu0 0.0
    %927 = vmatprep.subr.mxu0 0.0
    %928 = vmatpush1.msra.mxu0 0.0
    %929 = vmatprep.subr.mxu0 0.0
    %930 = vmatpush1.msra.mxu0 0.0
    %931 = vmatprep.subr.mxu0 0.0
    %932 = vmatpush1.msra.mxu0 0.0
    %933 = vmatprep.subr.mxu0 0.0
    %934 = vmatpush1.msra.mxu0 0.0
    %935 = vmatprep.subr.mxu0 0.0
    %936 = vmatpush1.msra.mxu0 0.0
    %937 = vmatprep.subr.mxu0 0.0
    %938 = vmatpush1.msra.mxu0 0.0
    %939 = vmatprep.subr.mxu0 0.0
    %940 = vmatpush1.msra.mxu0 0.0
    %941 = vmatprep.subr.mxu0 0.0
    %942 = vmatpush1.msra.mxu0 0.0
    %943 = vmatprep.subr.mxu0 0.0
    %944 = vmatpush1.msra.mxu0 0.0
    %945 = vmatprep.subr.mxu0 0.0
    %946 = vmatpush1.msra.mxu0 0.0
    %947 = vmatprep.subr.mxu0 0.0
    %948 = vmatpush1.msra.mxu0 0.0
    %949 = vmatprep.subr.mxu0 0.0
    %950 = vmatpush1.msra.mxu0 0.0
    %951 = vmatprep.subr.mxu0 0.0
    %952 = vmatpush1.msra.mxu0 0.0
    %953 = vmatprep.subr.mxu0 0.0
    %954 = vmatpush1.msra.mxu0 0.0
    %955 = vmatprep.subr.mxu0 0.0
    %956 = vmatpush1.msra.mxu0 0.0
    %957 = vmatprep.subr.mxu0 0.0
    %958 = vmatpush1.msra.mxu0 0.0
    %959 = vmatprep.subr.mxu0 0.0
    %960 = vmatpush1.msra.mxu0 0.0
    %961 = vmatprep.subr.mxu0 0.0
    %962 = vmatpush1.msra.mxu0 0.0
    %963 = vmatprep.subr.mxu0 0.0
    %964 = vmatpush1.msra.mxu0 0.0
    %965 = vmatprep.subr.mxu0 0.0
    %966 = vmatpush1.msra.mxu0 0.0
    %967 = vmatprep.subr.mxu0 0.0
    %968 = vmatpush1.msra.mxu0 0.0
    %969 = vmatprep.subr.mxu0 0.0
    %970 = vmatpush1.msra.mxu0 0.0
    %971 = vmatprep.mubr.f32.mxu0 0.0
    %972 = vmatmul.mubr.f32.gmra.mrb[0].mxu0 %v884
    %v973 = vpop.f32.mrb[0].mxu0
    %v974 = vadd.f32 0.0, %v973
    %v975 = vpop.f32.mrb[0].mxu0
    %976 = vmatprep.mubr.f32.mxu0 0.0
    %977 = vmatmul.mubr.f32.gmra.mrb[0].mxu0 %v887
    %v978 = vpop.f32.mrb[0].mxu0
    %v979 = vadd.f32 0.0, %v978
    %v980 = vpop.f32.mrb[0].mxu0
    %981 = vmatprep.mubr.f32.mxu0 0.0
    %982 = vmatmul.mubr.f32.gmra.mrb[0].mxu0 %v890
    %v983 = vpop.f32.mrb[0].mxu0
    %v984 = vadd.f32 0.0, %v983
    %v985 = vpop.f32.mrb[0].mxu0
    %986 = vmatprep.mubr.f32.mxu0 0.0
    %987 = vmatmul.mubr.f32.gmra.mrb[0].mxu0 %v893
    %v988 = vpop.f32.mrb[0].mxu0
    %v989 = vadd.f32 0.0, %v988
    %v990 = vpop.f32.mrb[0].mxu0
    %991 = vmatprep.mubr.f32.mxu0 0.0
    %992 = vmatmul.mubr.f32.gmra.mrb[0].mxu0 %v896
    %v993 = vpop.f32.mrb[0].mxu0
    %v994 = vadd.f32 0.0, %v993
    %v995 = vpop.f32.mrb[0].mxu0
    %996 = vmatprep.mubr.f32.mxu0 0.0
    %997 = vmatmul.mubr.f32.gmra.mrb[0].mxu0 %v899
    %v998 = vpop.f32.mrb[0].mxu0
    %v999 = vadd.f32 0.0, %v998
    %v1000 = vpop.f32.mrb[0].mxu0
    %1001 = vmatprep.mubr.f32.mxu0 0.0
    %1002 = vmatmul.mubr.f32.gmra.mrb[0].mxu0 %v902
    %v1003 = vpop.f32.mrb[0].mxu0
    %v1004 = vadd.f32 0.0, %v1003
    %v1005 = vpop.f32.mrb[0].mxu0
    %1006 = vmatprep.mubr.f32.mxu0 0.0
    %1007 = vmatmul.mubr.f32.gmra.mrb[0].mxu0 %v905
    %v1008 = vpop.f32.mrb[0].mxu0
    %v1009 = vadd.f32 0.0, %v1008
    %v1010 = vpop.f32.mrb[0].mxu0
    %1011 = vdwg.mxu0
    %v1012 = vld [vmem:[%s3] sm:$0xff]
    %v1013 = vld [vmem:[%s3 + $0x8] sm:$0xff]
    %v1014 = vld [vmem:[%s3 + $0x10] sm:$0xff]
    %v1015 = vld [vmem:[%s3 + $0x18] sm:$0xff]
    %s1016 = scalar_lea.vmem %s3, 32
    %v1017 = vld [vmem:[%s1016] sm:$0xff]
    %v1018 = vld [vmem:[%s1016 + $0x8] sm:$0xff]
    %v1019 = vld [vmem:[%s1016 + $0x10] sm:$0xff]
    %v1020 = vld [vmem:[%s1016 + $0x18] sm:$0xff]
    %v1022 = vsel %vm641, %v994, 0
    %v1025 = vsel %vm641, %v999, 0
    %v1028 = vsel %vm641, %v1004, 0
    %v1031 = vsel %vm641, %v1009, 0
    %1033 = vmatprep.subr.mxu0 0.0
    %1034 = vmatpush1.msra.mxu0 %v1017
    %1035 = vmatprep.subr.mxu0 0.0
    %1036 = vmatpush1.msra.mxu0 %v1018
    %1037 = vmatprep.subr.mxu0 0.0
    %1038 = vmatpush1.msra.mxu0 %v1019
    %1039 = vmatprep.subr.mxu0 0.0
    %1040 = vmatpush1.msra.mxu0 %v1020
    %1041 = vmatprep.subr.mxu0 0.0
    %1042 = vmatpush1.msra.mxu0 0.0
    %1043 = vmatprep.subr.mxu0 0.0
    %1044 = vmatpush1.msra.mxu0 0.0
    %1045 = vmatprep.subr.mxu0 0.0
    %1046 = vmatpush1.msra.mxu0 0.0
    %1047 = vmatprep.subr.mxu0 0.0
    %1048 = vmatpush1.msra.mxu0 0.0
    %1049 = vmatprep.subr.mxu0 0.0
    %1050 = vmatpush1.msra.mxu0 0.0
    %1051 = vmatprep.subr.mxu0 0.0
    %1052 = vmatpush1.msra.mxu0 0.0
    %1053 = vmatprep.subr.mxu0 0.0
    %1054 = vmatpush1.msra.mxu0 0.0
    %1055 = vmatprep.subr.mxu0 0.0
    %1056 = vmatpush1.msra.mxu0 0.0
    %1057 = vmatprep.subr.mxu0 0.0
    %1058 = vmatpush1.msra.mxu0 0.0
    %1059 = vmatprep.subr.mxu0 0.0
    %1060 = vmatpush1.msra.mxu0 0.0
    %1061 = vmatprep.subr.mxu0 0.0
    %1062 = vmatpush1.msra.mxu0 0.0
    %1063 = vmatprep.subr.mxu0 0.0
    %1064 = vmatpush1.msra.mxu0 0.0
    %1065 = vmatprep.subr.mxu0 0.0
    %1066 = vmatpush1.msra.mxu0 0.0
    %1067 = vmatprep.subr.mxu0 0.0
    %1068 = vmatpush1.msra.mxu0 0.0
    %1069 = vmatprep.subr.mxu0 0.0
    %1070 = vmatpush1.msra.mxu0 0.0
    %1071 = vmatprep.subr.mxu0 0.0
    %1072 = vmatpush1.msra.mxu0 0.0
    %1073 = vmatprep.subr.mxu0 0.0
    %1074 = vmatpush1.msra.mxu0 0.0
    %1075 = vmatprep.subr.mxu0 0.0
    %1076 = vmatpush1.msra.mxu0 0.0
    %1077 = vmatprep.subr.mxu0 0.0
    %1078 = vmatpush1.msra.mxu0 0.0
    %1079 = vmatprep.subr.mxu0 0.0
    %1080 = vmatpush1.msra.mxu0 0.0
    %1081 = vmatprep.subr.mxu0 0.0
    %1082 = vmatpush1.msra.mxu0 0.0
    %1083 = vmatprep.subr.mxu0 0.0
    %1084 = vmatpush1.msra.mxu0 0.0
    %1085 = vmatprep.subr.mxu0 0.0
    %1086 = vmatpush1.msra.mxu0 0.0
    %1087 = vmatprep.subr.mxu0 0.0
    %1088 = vmatpush1.msra.mxu0 0.0
    %1089 = vmatprep.subr.mxu0 0.0
    %1090 = vmatpush1.msra.mxu0 0.0
    %1091 = vmatprep.subr.mxu0 0.0
    %1092 = vmatpush1.msra.mxu0 0.0
    %1093 = vmatprep.subr.mxu0 0.0
    %1094 = vmatpush1.msra.mxu0 0.0
    %1095 = vmatprep.subr.mxu0 0.0
    %1096 = vmatpush1.msra.mxu0 0.0
    %1097 = vmatprep.mubr.f32.mxu0 0.0
    %1098 = vmatmul.mubr.f32.gmra.mrb[0].mxu0 %v1022
    %v1099 = vpop.f32.mrb[0].mxu0
    %v1100 = vadd.f32 0.0, %v1099
    %v1101 = vpop.f32.mrb[0].mxu0
    %1102 = vmatprep.mubr.f32.mxu0 0.0
    %1103 = vmatmul.mubr.f32.gmra.mrb[0].mxu0 %v1025
    %v1104 = vpop.f32.mrb[0].mxu0
    %v1105 = vadd.f32 0.0, %v1104
    %v1106 = vpop.f32.mrb[0].mxu0
    %1107 = vmatprep.mubr.f32.mxu0 0.0
    %1108 = vmatmul.mubr.f32.gmra.mrb[0].mxu0 %v1028
    %v1109 = vpop.f32.mrb[0].mxu0
    %v1110 = vadd.f32 0.0, %v1109
    %v1111 = vpop.f32.mrb[0].mxu0
    %1112 = vmatprep.mubr.f32.mxu0 0.0
    %1113 = vmatmul.mubr.f32.gmra.mrb[0].mxu0 %v1031
    %v1114 = vpop.f32.mrb[0].mxu0
    %v1115 = vadd.f32 0.0, %v1114
    %v1116 = vpop.f32.mrb[0].mxu0
    %1117 = vdwg.mxu0
    %v1119 = vsel %vm641, %v974, 0
    %v1122 = vsel %vm641, %v979, 0
    %v1125 = vsel %vm641, %v984, 0
    %v1128 = vsel %vm641, %v989, 0
    %1130 = vmatprep.subr.mxu0 0.0
    %1131 = vmatpush1.msra.mxu0 %v1012
    %1132 = vmatprep.subr.mxu0 0.0
    %1133 = vmatpush1.msra.mxu0 %v1013
    %1134 = vmatprep.subr.mxu0 0.0
    %1135 = vmatpush1.msra.mxu0 %v1014
    %1136 = vmatprep.subr.mxu0 0.0
    %1137 = vmatpush1.msra.mxu0 %v1015
    %1138 = vmatprep.subr.mxu0 0.0
    %1139 = vmatpush1.msra.mxu0 0.0
    %1140 = vmatprep.subr.mxu0 0.0
    %1141 = vmatpush1.msra.mxu0 0.0
    %1142 = vmatprep.subr.mxu0 0.0
    %1143 = vmatpush1.msra.mxu0 0.0
    %1144 = vmatprep.subr.mxu0 0.0
    %1145 = vmatpush1.msra.mxu0 0.0
    %1146 = vmatprep.subr.mxu0 0.0
    %1147 = vmatpush1.msra.mxu0 0.0
    %1148 = vmatprep.subr.mxu0 0.0
    %1149 = vmatpush1.msra.mxu0 0.0
    %1150 = vmatprep.subr.mxu0 0.0
    %1151 = vmatpush1.msra.mxu0 0.0
    %1152 = vmatprep.subr.mxu0 0.0
    %1153 = vmatpush1.msra.mxu0 0.0
    %1154 = vmatprep.subr.mxu0 0.0
    %1155 = vmatpush1.msra.mxu0 0.0
    %1156 = vmatprep.subr.mxu0 0.0
    %1157 = vmatpush1.msra.mxu0 0.0
    %1158 = vmatprep.subr.mxu0 0.0
    %1159 = vmatpush1.msra.mxu0 0.0
    %1160 = vmatprep.subr.mxu0 0.0
    %1161 = vmatpush1.msra.mxu0 0.0
    %1162 = vmatprep.subr.mxu0 0.0
    %1163 = vmatpush1.msra.mxu0 0.0
    %1164 = vmatprep.subr.mxu0 0.0
    %1165 = vmatpush1.msra.mxu0 0.0
    %1166 = vmatprep.subr.mxu0 0.0
    %1167 = vmatpush1.msra.mxu0 0.0
    %1168 = vmatprep.subr.mxu0 0.0
    %1169 = vmatpush1.msra.mxu0 0.0
    %1170 = vmatprep.subr.mxu0 0.0
    %1171 = vmatpush1.msra.mxu0 0.0
    %1172 = vmatprep.subr.mxu0 0.0
    %1173 = vmatpush1.msra.mxu0 0.0
    %1174 = vmatprep.subr.mxu0 0.0
    %1175 = vmatpush1.msra.mxu0 0.0
    %1176 = vmatprep.subr.mxu0 0.0
    %1177 = vmatpush1.msra.mxu0 0.0
    %1178 = vmatprep.subr.mxu0 0.0
    %1179 = vmatpush1.msra.mxu0 0.0
    %1180 = vmatprep.subr.mxu0 0.0
    %1181 = vmatpush1.msra.mxu0 0.0
    %1182 = vmatprep.subr.mxu0 0.0
    %1183 = vmatpush1.msra.mxu0 0.0
    %1184 = vmatprep.subr.mxu0 0.0
    %1185 = vmatpush1.msra.mxu0 0.0
    %1186 = vmatprep.subr.mxu0 0.0
    %1187 = vmatpush1.msra.mxu0 0.0
    %1188 = vmatprep.subr.mxu0 0.0
    %1189 = vmatpush1.msra.mxu0 0.0
    %1190 = vmatprep.subr.mxu0 0.0
    %1191 = vmatpush1.msra.mxu0 0.0
    %1192 = vmatprep.subr.mxu0 0.0
    %1193 = vmatpush1.msra.mxu0 0.0
    %1194 = vmatprep.mubr.f32.mxu0 0.0
    %1195 = vmatmul.mubr.f32.gmra.mrb[0].mxu0 %v1119
    %v1196 = vpop.f32.mrb[0].mxu0
    %v1197 = vadd.f32 %v1100, %v1196
    %v1198 = vpop.f32.mrb[0].mxu0
    %1199 = vmatprep.mubr.f32.mxu0 0.0
    %1200 = vmatmul.mubr.f32.gmra.mrb[0].mxu0 %v1122
    %v1201 = vpop.f32.mrb[0].mxu0
    %v1202 = vadd.f32 %v1105, %v1201
    %v1203 = vpop.f32.mrb[0].mxu0
    %1204 = vmatprep.mubr.f32.mxu0 0.0
    %1205 = vmatmul.mubr.f32.gmra.mrb[0].mxu0 %v1125
    %v1206 = vpop.f32.mrb[0].mxu0
    %v1207 = vadd.f32 %v1110, %v1206
    %v1208 = vpop.f32.mrb[0].mxu0
    %1209 = vmatprep.mubr.f32.mxu0 0.0
    %1210 = vmatmul.mubr.f32.gmra.mrb[0].mxu0 %v1128
    %v1211 = vpop.f32.mrb[0].mxu0
    %v1212 = vadd.f32 %v1115, %v1211
    %v1213 = vpop.f32.mrb[0].mxu0
    %1214 = vdwg.mxu0
    %v1215 = vlaneseq
    %v1216 = vshrl.u32 %v1215, 7
    %v1217 = vsub.s32 6, %v1216
    %v1218 = vrot.slane %v39, %v1217
    %v1219 = vadd.f32 %v1197, %v1218
    %v1220 = vadd.f32 %v1202, %v1218
    %v1221 = vadd.f32 %v1207, %v1218
    %v1222 = vadd.f32 %v1212, %v1218
    %v1223 = vadd.f32 %v1219, %v27
    %v1224 = vadd.f32 %v1220, %v28
    %v1225 = vadd.f32 %v1221, %v29
    %v1226 = vadd.f32 %v1222, %v30
    %v1227 = vsel %vm53, %v1223, 0.0
    %1228 = vadd.xlane.f32.xlu0 %v1227
    %v1229 = vpop.xlane.xlu0 %1228
    %v1230 = vsel %vm53, %v1224, 0.0
    %1231 = vadd.xlane.f32.xlu0 %v1230
    %v1232 = vpop.xlane.xlu0 %1231
    %v1233 = vsel %vm53, %v1225, 0.0
    %1234 = vadd.xlane.f32.xlu0 %v1233
    %v1235 = vpop.xlane.xlu0 %1234
    %v1236 = vsel %vm53, %v1226, 0.0
    %1237 = vadd.xlane.f32.xlu0 %v1236
    %v1238 = vpop.xlane.xlu0 %1237
    %v1239 = vrcp.pop 64.0
    %v1240 = vmul.f32 %v1229, %v1239
    %v1241 = vmul.f32 %v1232, %v1239
    %v1242 = vmul.f32 %v1235, %v1239
    %v1243 = vmul.f32 %v1238, %v1239
    %v1244 = vmul.f32 %v1223, %v1223
    %v1245 = vmul.f32 %v1224, %v1224
    %v1246 = vmul.f32 %v1225, %v1225
    %v1247 = vmul.f32 %v1226, %v1226
    %v1248 = vsel %vm53, %v1244, 0.0
    %1249 = vadd.xlane.f32.xlu0 %v1248
    %v1250 = vpop.xlane.xlu0 %1249
    %v1251 = vsel %vm53, %v1245, 0.0
    %1252 = vadd.xlane.f32.xlu0 %v1251
    %v1253 = vpop.xlane.xlu0 %1252
    %v1254 = vsel %vm53, %v1246, 0.0
    %1255 = vadd.xlane.f32.xlu0 %v1254
    %v1256 = vpop.xlane.xlu0 %1255
    %v1257 = vsel %vm53, %v1247, 0.0
    %1258 = vadd.xlane.f32.xlu0 %v1257
    %v1259 = vpop.xlane.xlu0 %1258
    %v1260 = vmul.f32 %v1250, %v1239
    %v1261 = vmul.f32 %v1253, %v1239
    %v1262 = vmul.f32 %v1256, %v1239
    %v1263 = vmul.f32 %v1259, %v1239
    %v1264 = vmul.f32 %v1240, %v1240
    %v1265 = vmul.f32 %v1241, %v1241
    %v1266 = vmul.f32 %v1242, %v1242
    %v1267 = vmul.f32 %v1243, %v1243
    %v1268 = vsub.f32 %v1260, %v1264
    %v1269 = vsub.f32 %v1261, %v1265
    %v1270 = vsub.f32 %v1262, %v1266
    %v1271 = vsub.f32 %v1263, %v1267
    %v1272 = vmax.f32 %v1268, 0.0
    %v1273 = vmax.f32 %v1269, 0.0
    %v1274 = vmax.f32 %v1270, 0.0
    %v1275 = vmax.f32 %v1271, 0.0
    %v1276 = vsub.f32 %v1223, %v1240
    %v1277 = vsub.f32 %v1224, %v1241
    %v1278 = vsub.f32 %v1225, %v1242
    %v1279 = vsub.f32 %v1226, %v1243
    %v1280 = vadd.f32 %v1272, 1e-12
    %v1281 = vadd.f32 %v1273, 1e-12
    %v1282 = vadd.f32 %v1274, 1e-12
    %v1283 = vadd.f32 %v1275, 1e-12
    %v1284 = vrsqrt.pop %v1280
    %v1285 = vrsqrt.pop %v1281
    %v1286 = vrsqrt.pop %v1282
    %v1287 = vrsqrt.pop %v1283
    %v1288 = vmul.f32 %v1276, %v1284
    %v1289 = vmul.f32 %v1277, %v1285
    %v1290 = vmul.f32 %v1278, %v1286
    %v1291 = vmul.f32 %v1279, %v1287
    %v1292 = vlaneseq
    %v1293 = vshrl.u32 %v1292, 7
    %v1294 = vsub.s32 7, %v1293
    %v1295 = vrot.slane %v39, %v1294
    %v1296 = vmul.f32 %v1288, %v1295
    %v1297 = vmul.f32 %v1289, %v1295
    %v1298 = vmul.f32 %v1290, %v1295
    %v1299 = vmul.f32 %v1291, %v1295
    %v1300 = vlaneseq
    %v1301 = vshrl.u32 %v1300, 7
    %v1302 = vsub.s32 0, %v1301
    %v1303 = vrot.slane %v40, %v1302
    %v1304 = vadd.f32 %v1296, %v1303
    %v1305 = vadd.f32 %v1297, %v1303
    %v1306 = vadd.f32 %v1298, %v1303
    %v1307 = vadd.f32 %v1299, %v1303
    %v1308 = vld [vmem:[%s4] sm:$0xff]
    %v1309 = vld [vmem:[%s4 + $0x8] sm:$0xff]
    %v1310 = vld [vmem:[%s4 + $0x10] sm:$0xff]
    %v1311 = vld [vmem:[%s4 + $0x18] sm:$0xff]
    %v1312 = vld [vmem:[%s4 + $0x20] sm:$0xff]
    %v1313 = vld [vmem:[%s4 + $0x28] sm:$0xff]
    %v1314 = vld [vmem:[%s4 + $0x30] sm:$0xff]
    %v1315 = vld [vmem:[%s4 + $0x38] sm:$0xff]
    %v1316 = vlaneseq
    %v1317 = vshrl.u32 %v1316, 7
    %v1318 = vsub.s32 1, %v1317
    %v1319 = vrot.slane %v40, %v1318
    %v1321 = vsel %vm53, %v1304, 0
    %v1324 = vsel %vm53, %v1305, 0
    %v1327 = vsel %vm53, %v1306, 0
    %v1330 = vsel %vm53, %v1307, 0
    %1332 = vmatprep.subr.mxu0 0.0
    %1333 = vmatpush1.msra.mxu0 %v1308
    %1334 = vmatprep.subr.mxu0 0.0
    %1335 = vmatpush1.msra.mxu0 %v1309
    %1336 = vmatprep.subr.mxu0 0.0
    %1337 = vmatpush1.msra.mxu0 %v1310
    %1338 = vmatprep.subr.mxu0 0.0
    %1339 = vmatpush1.msra.mxu0 %v1311
    %1340 = vmatprep.subr.mxu0 0.0
    %1341 = vmatpush1.msra.mxu0 %v1312
    %1342 = vmatprep.subr.mxu0 0.0
    %1343 = vmatpush1.msra.mxu0 %v1313
    %1344 = vmatprep.subr.mxu0 0.0
    %1345 = vmatpush1.msra.mxu0 %v1314
    %1346 = vmatprep.subr.mxu0 0.0
    %1347 = vmatpush1.msra.mxu0 %v1315
    %1348 = vmatprep.subr.mxu0 0.0
    %1349 = vmatpush1.msra.mxu0 0.0
    %1350 = vmatprep.subr.mxu0 0.0
    %1351 = vmatpush1.msra.mxu0 0.0
    %1352 = vmatprep.subr.mxu0 0.0
    %1353 = vmatpush1.msra.mxu0 0.0
    %1354 = vmatprep.subr.mxu0 0.0
    %1355 = vmatpush1.msra.mxu0 0.0
    %1356 = vmatprep.subr.mxu0 0.0
    %1357 = vmatpush1.msra.mxu0 0.0
    %1358 = vmatprep.subr.mxu0 0.0
    %1359 = vmatpush1.msra.mxu0 0.0
    %1360 = vmatprep.subr.mxu0 0.0
    %1361 = vmatpush1.msra.mxu0 0.0
    %1362 = vmatprep.subr.mxu0 0.0
    %1363 = vmatpush1.msra.mxu0 0.0
    %1364 = vmatprep.subr.mxu0 0.0
    %1365 = vmatpush1.msra.mxu0 0.0
    %1366 = vmatprep.subr.mxu0 0.0
    %1367 = vmatpush1.msra.mxu0 0.0
    %1368 = vmatprep.subr.mxu0 0.0
    %1369 = vmatpush1.msra.mxu0 0.0
    %1370 = vmatprep.subr.mxu0 0.0
    %1371 = vmatpush1.msra.mxu0 0.0
    %1372 = vmatprep.subr.mxu0 0.0
    %1373 = vmatpush1.msra.mxu0 0.0
    %1374 = vmatprep.subr.mxu0 0.0
    %1375 = vmatpush1.msra.mxu0 0.0
    %1376 = vmatprep.subr.mxu0 0.0
    %1377 = vmatpush1.msra.mxu0 0.0
    %1378 = vmatprep.subr.mxu0 0.0
    %1379 = vmatpush1.msra.mxu0 0.0
    %1380 = vmatprep.subr.mxu0 0.0
    %1381 = vmatpush1.msra.mxu0 0.0
    %1382 = vmatprep.subr.mxu0 0.0
    %1383 = vmatpush1.msra.mxu0 0.0
    %1384 = vmatprep.subr.mxu0 0.0
    %1385 = vmatpush1.msra.mxu0 0.0
    %1386 = vmatprep.subr.mxu0 0.0
    %1387 = vmatpush1.msra.mxu0 0.0
    %1388 = vmatprep.subr.mxu0 0.0
    %1389 = vmatpush1.msra.mxu0 0.0
    %1390 = vmatprep.subr.mxu0 0.0
    %1391 = vmatpush1.msra.mxu0 0.0
    %1392 = vmatprep.subr.mxu0 0.0
    %1393 = vmatpush1.msra.mxu0 0.0
    %1394 = vmatprep.subr.mxu0 0.0
    %1395 = vmatpush1.msra.mxu0 0.0
    %1396 = vmatprep.mubr.f32.mxu0 0.0
    %1397 = vmatmul.mubr.f32.gmra.mrb[0].mxu0 %v1321
    %v1398 = vpop.f32.mrb[0].mxu0
    %v1399 = vadd.f32 %v1319, %v1398
    %v1400 = vpop.f32.mrb[0].mxu0
    %1401 = vmatprep.mubr.f32.mxu0 0.0
    %1402 = vmatmul.mubr.f32.gmra.mrb[0].mxu0 %v1324
    %v1403 = vpop.f32.mrb[0].mxu0
    %v1404 = vadd.f32 %v1319, %v1403
    %v1405 = vpop.f32.mrb[0].mxu0
    %1406 = vmatprep.mubr.f32.mxu0 0.0
    %1407 = vmatmul.mubr.f32.gmra.mrb[0].mxu0 %v1327
    %v1408 = vpop.f32.mrb[0].mxu0
    %v1409 = vadd.f32 %v1319, %v1408
    %v1410 = vpop.f32.mrb[0].mxu0
    %1411 = vmatprep.mubr.f32.mxu0 0.0
    %1412 = vmatmul.mubr.f32.gmra.mrb[0].mxu0 %v1330
    %v1413 = vpop.f32.mrb[0].mxu0
    %v1414 = vadd.f32 %v1319, %v1413
    %v1415 = vpop.f32.mrb[0].mxu0
    %1416 = vdwg.mxu0
    %v1417 = vmul.f32 %v1399, 0.5
    %v1418 = vmul.f32 %v1404, 0.5
    %v1419 = vmul.f32 %v1409, 0.5
    %v1420 = vmul.f32 %v1414, 0.5
    %v1421 = vmul.f32 %v1399, 0.044715
    %v1422 = vmul.f32 %v1404, 0.044715
    %v1423 = vmul.f32 %v1409, 0.044715
    %v1424 = vmul.f32 %v1414, 0.044715
    %v1425 = vmul.f32 %v1421, %v1399
    %v1426 = vmul.f32 %v1422, %v1404
    %v1427 = vmul.f32 %v1423, %v1409
    %v1428 = vmul.f32 %v1424, %v1414
    %v1429 = vmul.f32 %v1425, %v1399
    %v1430 = vmul.f32 %v1426, %v1404
    %v1431 = vmul.f32 %v1427, %v1409
    %v1432 = vmul.f32 %v1428, %v1414
    %v1433 = vadd.f32 %v1399, %v1429
    %v1434 = vadd.f32 %v1404, %v1430
    %v1435 = vadd.f32 %v1409, %v1431
    %v1436 = vadd.f32 %v1414, %v1432
    %v1437 = vmul.f32 %v1433, 0.7978846
    %v1438 = vmul.f32 %v1434, 0.7978846
    %v1439 = vmul.f32 %v1435, 0.7978846
    %v1440 = vmul.f32 %v1436, 0.7978846
    %v1441 = vtanh.pop %v1437
    %v1442 = vtanh.pop %v1438
    %v1443 = vtanh.pop %v1439
    %v1444 = vtanh.pop %v1440
    %v1445 = vadd.f32 %v1441, 1.0
    %v1446 = vadd.f32 %v1442, 1.0
    %v1447 = vadd.f32 %v1443, 1.0
    %v1448 = vadd.f32 %v1444, 1.0
    %v1449 = vmul.f32 %v1417, %v1445
    %v1450 = vmul.f32 %v1418, %v1446
    %v1451 = vmul.f32 %v1419, %v1447
    %v1452 = vmul.f32 %v1420, %v1448
    %v1453 = vld [vmem:[%s5] sm:$0xff]
    %v1454 = vld [vmem:[%s5 + $0x8] sm:$0xff]
    %v1455 = vld [vmem:[%s5 + $0x10] sm:$0xff]
    %v1456 = vld [vmem:[%s5 + $0x18] sm:$0xff]
    %v1457 = vld [vmem:[%s5 + $0x20] sm:$0xff]
    %v1458 = vld [vmem:[%s5 + $0x28] sm:$0xff]
    %v1459 = vld [vmem:[%s5 + $0x30] sm:$0xff]
    %v1460 = vld [vmem:[%s5 + $0x38] sm:$0xff]
    %v1461 = vld [vmem:[%s5 + $0x40] sm:$0xff]
    %v1462 = vld [vmem:[%s5 + $0x48] sm:$0xff]
    %v1463 = vld [vmem:[%s5 + $0x50] sm:$0xff]
    %v1464 = vld [vmem:[%s5 + $0x58] sm:$0xff]
    %v1465 = vld [vmem:[%s5 + $0x60] sm:$0xff]
    %v1466 = vld [vmem:[%s5 + $0x68] sm:$0xff]
    %v1467 = vld [vmem:[%s5 + $0x70] sm:$0xff]
    %v1468 = vld [vmem:[%s5 + $0x78] sm:$0xff]
    %v1469 = vlaneseq
    %v1470 = vshrl.u32 %v1469, 7
    %v1471 = vsub.s32 2, %v1470
    %v1472 = vrot.slane %v40, %v1471
    %1473 = vmatprep.subr.mxu0 0.0
    %1474 = vmatpush1.msra.mxu0 %v1453
    %1475 = vmatprep.subr.mxu0 0.0
    %1476 = vmatpush1.msra.mxu0 %v1454
    %1477 = vmatprep.subr.mxu0 0.0
    %1478 = vmatpush1.msra.mxu0 %v1455
    %1479 = vmatprep.subr.mxu0 0.0
    %1480 = vmatpush1.msra.mxu0 %v1456
    %1481 = vmatprep.subr.mxu0 0.0
    %1482 = vmatpush1.msra.mxu0 %v1457
    %1483 = vmatprep.subr.mxu0 0.0
    %1484 = vmatpush1.msra.mxu0 %v1458
    %1485 = vmatprep.subr.mxu0 0.0
    %1486 = vmatpush1.msra.mxu0 %v1459
    %1487 = vmatprep.subr.mxu0 0.0
    %1488 = vmatpush1.msra.mxu0 %v1460
    %1489 = vmatprep.subr.mxu0 0.0
    %1490 = vmatpush1.msra.mxu0 %v1461
    %1491 = vmatprep.subr.mxu0 0.0
    %1492 = vmatpush1.msra.mxu0 %v1462
    %1493 = vmatprep.subr.mxu0 0.0
    %1494 = vmatpush1.msra.mxu0 %v1463
    %1495 = vmatprep.subr.mxu0 0.0
    %1496 = vmatpush1.msra.mxu0 %v1464
    %1497 = vmatprep.subr.mxu0 0.0
    %1498 = vmatpush1.msra.mxu0 %v1465
    %1499 = vmatprep.subr.mxu0 0.0
    %1500 = vmatpush1.msra.mxu0 %v1466
    %1501 = vmatprep.subr.mxu0 0.0
    %1502 = vmatpush1.msra.mxu0 %v1467
    %1503 = vmatprep.subr.mxu0 0.0
    %1504 = vmatpush1.msra.mxu0 %v1468
    %1505 = vmatprep.subr.mxu0 0.0
    %1506 = vmatpush1.msra.mxu0 0.0
    %1507 = vmatprep.subr.mxu0 0.0
    %1508 = vmatpush1.msra.mxu0 0.0
    %1509 = vmatprep.subr.mxu0 0.0
    %1510 = vmatpush1.msra.mxu0 0.0
    %1511 = vmatprep.subr.mxu0 0.0
    %1512 = vmatpush1.msra.mxu0 0.0
    %1513 = vmatprep.subr.mxu0 0.0
    %1514 = vmatpush1.msra.mxu0 0.0
    %1515 = vmatprep.subr.mxu0 0.0
    %1516 = vmatpush1.msra.mxu0 0.0
    %1517 = vmatprep.subr.mxu0 0.0
    %1518 = vmatpush1.msra.mxu0 0.0
    %1519 = vmatprep.subr.mxu0 0.0
    %1520 = vmatpush1.msra.mxu0 0.0
    %1521 = vmatprep.subr.mxu0 0.0
    %1522 = vmatpush1.msra.mxu0 0.0
    %1523 = vmatprep.subr.mxu0 0.0
    %1524 = vmatpush1.msra.mxu0 0.0
    %1525 = vmatprep.subr.mxu0 0.0
    %1526 = vmatpush1.msra.mxu0 0.0
    %1527 = vmatprep.subr.mxu0 0.0
    %1528 = vmatpush1.msra.mxu0 0.0
    %1529 = vmatprep.subr.mxu0 0.0
    %1530 = vmatpush1.msra.mxu0 0.0
    %1531 = vmatprep.subr.mxu0 0.0
    %1532 = vmatpush1.msra.mxu0 0.0
    %1533 = vmatprep.subr.mxu0 0.0
    %1534 = vmatpush1.msra.mxu0 0.0
    %1535 = vmatprep.subr.mxu0 0.0
    %1536 = vmatpush1.msra.mxu0 0.0
    %1537 = vmatprep.mubr.f32.mxu0 0.0
    %1538 = vmatmul.mubr.f32.gmra.mrb[0].mxu0 %v1449
    %v1539 = vpop.f32.mrb[0].mxu0
    %v1540 = vadd.f32 %v1472, %v1539
    %v1541 = vpop.f32.mrb[0].mxu0
    %1542 = vmatprep.mubr.f32.mxu0 0.0
    %1543 = vmatmul.mubr.f32.gmra.mrb[0].mxu0 %v1450
    %v1544 = vpop.f32.mrb[0].mxu0
    %v1545 = vadd.f32 %v1472, %v1544
    %v1546 = vpop.f32.mrb[0].mxu0
    %1547 = vmatprep.mubr.f32.mxu0 0.0
    %1548 = vmatmul.mubr.f32.gmra.mrb[0].mxu0 %v1451
    %v1549 = vpop.f32.mrb[0].mxu0
    %v1550 = vadd.f32 %v1472, %v1549
    %v1551 = vpop.f32.mrb[0].mxu0
    %1552 = vmatprep.mubr.f32.mxu0 0.0
    %1553 = vmatmul.mubr.f32.gmra.mrb[0].mxu0 %v1452
    %v1554 = vpop.f32.mrb[0].mxu0
    %v1555 = vadd.f32 %v1472, %v1554
    %v1556 = vpop.f32.mrb[0].mxu0
    %1557 = vdwg.mxu0
    %v1558 = vadd.f32 %v1540, %v1304
    %v1559 = vadd.f32 %v1545, %v1305
    %v1560 = vadd.f32 %v1550, %v1306
    %v1561 = vadd.f32 %v1555, %v1307
    %v1562 = vsel %vm53, %v1558, 0.0
    %1563 = vadd.xlane.f32.xlu0 %v1562
    %v1564 = vpop.xlane.xlu0 %1563
    %v1565 = vsel %vm53, %v1559, 0.0
    %1566 = vadd.xlane.f32.xlu0 %v1565
    %v1567 = vpop.xlane.xlu0 %1566
    %v1568 = vsel %vm53, %v1560, 0.0
    %1569 = vadd.xlane.f32.xlu0 %v1568
    %v1570 = vpop.xlane.xlu0 %1569
    %v1571 = vsel %vm53, %v1561, 0.0
    %1572 = vadd.xlane.f32.xlu0 %v1571
    %v1573 = vpop.xlane.xlu0 %1572
    %v1574 = vmul.f32 %v1564, %v1239
    %v1575 = vmul.f32 %v1567, %v1239
    %v1576 = vmul.f32 %v1570, %v1239
    %v1577 = vmul.f32 %v1573, %v1239
    %v1578 = vmul.f32 %v1558, %v1558
    %v1579 = vmul.f32 %v1559, %v1559
    %v1580 = vmul.f32 %v1560, %v1560
    %v1581 = vmul.f32 %v1561, %v1561
    %v1582 = vsel %vm53, %v1578, 0.0
    %1583 = vadd.xlane.f32.xlu0 %v1582
    %v1584 = vpop.xlane.xlu0 %1583
    %v1585 = vsel %vm53, %v1579, 0.0
    %1586 = vadd.xlane.f32.xlu0 %v1585
    %v1587 = vpop.xlane.xlu0 %1586
    %v1588 = vsel %vm53, %v1580, 0.0
    %1589 = vadd.xlane.f32.xlu0 %v1588
    %v1590 = vpop.xlane.xlu0 %1589
    %v1591 = vsel %vm53, %v1581, 0.0
    %1592 = vadd.xlane.f32.xlu0 %v1591
    %v1593 = vpop.xlane.xlu0 %1592
    %v1594 = vmul.f32 %v1584, %v1239
    %v1595 = vmul.f32 %v1587, %v1239
    %v1596 = vmul.f32 %v1590, %v1239
    %v1597 = vmul.f32 %v1593, %v1239
    %v1598 = vmul.f32 %v1574, %v1574
    %v1599 = vmul.f32 %v1575, %v1575
    %v1600 = vmul.f32 %v1576, %v1576
    %v1601 = vmul.f32 %v1577, %v1577
    %v1602 = vsub.f32 %v1594, %v1598
    %v1603 = vsub.f32 %v1595, %v1599
    %v1604 = vsub.f32 %v1596, %v1600
    %v1605 = vsub.f32 %v1597, %v1601
    %v1606 = vmax.f32 %v1602, 0.0
    %v1607 = vmax.f32 %v1603, 0.0
    %v1608 = vmax.f32 %v1604, 0.0
    %v1609 = vmax.f32 %v1605, 0.0
    %v1610 = vsub.f32 %v1558, %v1574
    %v1611 = vsub.f32 %v1559, %v1575
    %v1612 = vsub.f32 %v1560, %v1576
    %v1613 = vsub.f32 %v1561, %v1577
    %v1614 = vadd.f32 %v1606, 1e-12
    %v1615 = vadd.f32 %v1607, 1e-12
    %v1616 = vadd.f32 %v1608, 1e-12
    %v1617 = vadd.f32 %v1609, 1e-12
    %v1618 = vrsqrt.pop %v1614
    %v1619 = vrsqrt.pop %v1615
    %v1620 = vrsqrt.pop %v1616
    %v1621 = vrsqrt.pop %v1617
    %v1622 = vmul.f32 %v1610, %v1618
    %v1623 = vmul.f32 %v1611, %v1619
    %v1624 = vmul.f32 %v1612, %v1620
    %v1625 = vmul.f32 %v1613, %v1621
    %v1626 = vlaneseq
    %v1627 = vshrl.u32 %v1626, 7
    %v1628 = vsub.s32 3, %v1627
    %v1629 = vrot.slane %v40, %v1628
    %v1630 = vmul.f32 %v1622, %v1629
    %v1631 = vmul.f32 %v1623, %v1629
    %v1632 = vmul.f32 %v1624, %v1629
    %v1633 = vmul.f32 %v1625, %v1629
    %v1634 = vlaneseq
    %v1635 = vshrl.u32 %v1634, 7
    %v1636 = vsub.s32 4, %v1635
    %v1637 = vrot.slane %v40, %v1636
    %v1638 = vadd.f32 %v1630, %v1637
    %v1639 = vadd.f32 %v1631, %v1637
    %v1640 = vadd.f32 %v1632, %v1637
    %v1641 = vadd.f32 %v1633, %v1637
    %s1642 = scalar_lea.vmem %s6, 16
    %v1643 = vld [vmem:[%s1642] sm:$0xff]
    %v1644 = vld [vmem:[%s1642 + $0x8] sm:$0xff]
    %s1645 = scalar_lea.vmem %s2, 384
    %v1646 = vld [vmem:[%s1645] sm:$0xff]
    %v1647 = vld [vmem:[%s1645 + $0x8] sm:$0xff]
    %v1648 = vld [vmem:[%s1645 + $0x10] sm:$0xff]
    %v1649 = vld [vmem:[%s1645 + $0x18] sm:$0xff]
    %v1650 = vld [vmem:[%s1645 + $0x20] sm:$0xff]
    %v1651 = vld [vmem:[%s1645 + $0x28] sm:$0xff]
    %v1652 = vld [vmem:[%s1645 + $0x30] sm:$0xff]
    %v1653 = vld [vmem:[%s1645 + $0x38] sm:$0xff]
    %v1654 = vlaneseq
    %v1655 = vshrl.u32 %v1654, 7
    %v1656 = vsub.s32 0, %v1655
    %v1657 = vrot.slane %v1643, %v1656
    %v1659 = vsel %vm53, %v1638, 0
    %v1662 = vsel %vm53, %v1639, 0
    %v1665 = vsel %vm53, %v1640, 0
    %v1668 = vsel %vm53, %v1641, 0
    %1670 = vmatprep.subr.mxu0 0.0
    %1671 = vmatpush1.msra.mxu0 %v1646
    %1672 = vmatprep.subr.mxu0 0.0
    %1673 = vmatpush1.msra.mxu0 %v1647
    %1674 = vmatprep.subr.mxu0 0.0
    %1675 = vmatpush1.msra.mxu0 %v1648
    %1676 = vmatprep.subr.mxu0 0.0
    %1677 = vmatpush1.msra.mxu0 %v1649
    %1678 = vmatprep.subr.mxu0 0.0
    %1679 = vmatpush1.msra.mxu0 %v1650
    %1680 = vmatprep.subr.mxu0 0.0
    %1681 = vmatpush1.msra.mxu0 %v1651
    %1682 = vmatprep.subr.mxu0 0.0
    %1683 = vmatpush1.msra.mxu0 %v1652
    %1684 = vmatprep.subr.mxu0 0.0
    %1685 = vmatpush1.msra.mxu0 %v1653
    %1686 = vmatprep.subr.mxu0 0.0
    %1687 = vmatpush1.msra.mxu0 0.0
    %1688 = vmatprep.subr.mxu0 0.0
    %1689 = vmatpush1.msra.mxu0 0.0
    %1690 = vmatprep.subr.mxu0 0.0
    %1691 = vmatpush1.msra.mxu0 0.0
    %1692 = vmatprep.subr.mxu0 0.0
    %1693 = vmatpush1.msra.mxu0 0.0
    %1694 = vmatprep.subr.mxu0 0.0
    %1695 = vmatpush1.msra.mxu0 0.0
    %1696 = vmatprep.subr.mxu0 0.0
    %1697 = vmatpush1.msra.mxu0 0.0
    %1698 = vmatprep.subr.mxu0 0.0
    %1699 = vmatpush1.msra.mxu0 0.0
    %1700 = vmatprep.subr.mxu0 0.0
    %1701 = vmatpush1.msra.mxu0 0.0
    %1702 = vmatprep.subr.mxu0 0.0
    %1703 = vmatpush1.msra.mxu0 0.0
    %1704 = vmatprep.subr.mxu0 0.0
    %1705 = vmatpush1.msra.mxu0 0.0
    %1706 = vmatprep.subr.mxu0 0.0
    %1707 = vmatpush1.msra.mxu0 0.0
    %1708 = vmatprep.subr.mxu0 0.0
    %1709 = vmatpush1.msra.mxu0 0.0
    %1710 = vmatprep.subr.mxu0 0.0
    %1711 = vmatpush1.msra.mxu0 0.0
    %1712 = vmatprep.subr.mxu0 0.0
    %1713 = vmatpush1.msra.mxu0 0.0
    %1714 = vmatprep.subr.mxu0 0.0
    %1715 = vmatpush1.msra.mxu0 0.0
    %1716 = vmatprep.subr.mxu0 0.0
    %1717 = vmatpush1.msra.mxu0 0.0
    %1718 = vmatprep.subr.mxu0 0.0
    %1719 = vmatpush1.msra.mxu0 0.0
    %1720 = vmatprep.subr.mxu0 0.0
    %1721 = vmatpush1.msra.mxu0 0.0
    %1722 = vmatprep.subr.mxu0 0.0
    %1723 = vmatpush1.msra.mxu0 0.0
    %1724 = vmatprep.subr.mxu0 0.0
    %1725 = vmatpush1.msra.mxu0 0.0
    %1726 = vmatprep.subr.mxu0 0.0
    %1727 = vmatpush1.msra.mxu0 0.0
    %1728 = vmatprep.subr.mxu0 0.0
    %1729 = vmatpush1.msra.mxu0 0.0
    %1730 = vmatprep.subr.mxu0 0.0
    %1731 = vmatpush1.msra.mxu0 0.0
    %1732 = vmatprep.subr.mxu0 0.0
    %1733 = vmatpush1.msra.mxu0 0.0
    %1734 = vmatprep.mubr.f32.mxu0 0.0
    %1735 = vmatmul.mubr.f32.gmra.mrb[0].mxu0 %v1659
    %v1736 = vpop.f32.mrb[0].mxu0
    %v1737 = vadd.f32 %v1657, %v1736
    %v1738 = vpop.f32.mrb[0].mxu0
    %1739 = vmatprep.mubr.f32.mxu0 0.0
    %1740 = vmatmul.mubr.f32.gmra.mrb[0].mxu0 %v1662
    %v1741 = vpop.f32.mrb[0].mxu0
    %v1742 = vadd.f32 %v1657, %v1741
    %v1743 = vpop.f32.mrb[0].mxu0
    %1744 = vmatprep.mubr.f32.mxu0 0.0
    %1745 = vmatmul.mubr.f32.gmra.mrb[0].mxu0 %v1665
    %v1746 = vpop.f32.mrb[0].mxu0
    %v1747 = vadd.f32 %v1657, %v1746
    %v1748 = vpop.f32.mrb[0].mxu0
    %1749 = vmatprep.mubr.f32.mxu0 0.0
    %1750 = vmatmul.mubr.f32.gmra.mrb[0].mxu0 %v1668
    %v1751 = vpop.f32.mrb[0].mxu0
    %v1752 = vadd.f32 %v1657, %v1751
    %v1753 = vpop.f32.mrb[0].mxu0
    %1754 = vdwg.mxu0
    %s1755 = scalar_lea.vmem %s2, 448
    %v1756 = vld [vmem:[%s1755] sm:$0xff]
    %v1757 = vld [vmem:[%s1755 + $0x8] sm:$0xff]
    %v1758 = vld [vmem:[%s1755 + $0x10] sm:$0xff]
    %v1759 = vld [vmem:[%s1755 + $0x18] sm:$0xff]
    %v1760 = vld [vmem:[%s1755 + $0x20] sm:$0xff]
    %v1761 = vld [vmem:[%s1755 + $0x28] sm:$0xff]
    %v1762 = vld [vmem:[%s1755 + $0x30] sm:$0xff]
    %v1763 = vld [vmem:[%s1755 + $0x38] sm:$0xff]
    %v1764 = vlaneseq
    %v1765 = vshrl.u32 %v1764, 7
    %v1766 = vsub.s32 1, %v1765
    %v1767 = vrot.slane %v1643, %v1766
    %1768 = vmatprep.subr.mxu0 0.0
    %1769 = vmatpush1.msra.mxu0 %v1756
    %1770 = vmatprep.subr.mxu0 0.0
    %1771 = vmatpush1.msra.mxu0 %v1757
    %1772 = vmatprep.subr.mxu0 0.0
    %1773 = vmatpush1.msra.mxu0 %v1758
    %1774 = vmatprep.subr.mxu0 0.0
    %1775 = vmatpush1.msra.mxu0 %v1759
    %1776 = vmatprep.subr.mxu0 0.0
    %1777 = vmatpush1.msra.mxu0 %v1760
    %1778 = vmatprep.subr.mxu0 0.0
    %1779 = vmatpush1.msra.mxu0 %v1761
    %1780 = vmatprep.subr.mxu0 0.0
    %1781 = vmatpush1.msra.mxu0 %v1762
    %1782 = vmatprep.subr.mxu0 0.0
    %1783 = vmatpush1.msra.mxu0 %v1763
    %1784 = vmatprep.subr.mxu0 0.0
    %1785 = vmatpush1.msra.mxu0 0.0
    %1786 = vmatprep.subr.mxu0 0.0
    %1787 = vmatpush1.msra.mxu0 0.0
    %1788 = vmatprep.subr.mxu0 0.0
    %1789 = vmatpush1.msra.mxu0 0.0
    %1790 = vmatprep.subr.mxu0 0.0
    %1791 = vmatpush1.msra.mxu0 0.0
    %1792 = vmatprep.subr.mxu0 0.0
    %1793 = vmatpush1.msra.mxu0 0.0
    %1794 = vmatprep.subr.mxu0 0.0
    %1795 = vmatpush1.msra.mxu0 0.0
    %1796 = vmatprep.subr.mxu0 0.0
    %1797 = vmatpush1.msra.mxu0 0.0
    %1798 = vmatprep.subr.mxu0 0.0
    %1799 = vmatpush1.msra.mxu0 0.0
    %1800 = vmatprep.subr.mxu0 0.0
    %1801 = vmatpush1.msra.mxu0 0.0
    %1802 = vmatprep.subr.mxu0 0.0
    %1803 = vmatpush1.msra.mxu0 0.0
    %1804 = vmatprep.subr.mxu0 0.0
    %1805 = vmatpush1.msra.mxu0 0.0
    %1806 = vmatprep.subr.mxu0 0.0
    %1807 = vmatpush1.msra.mxu0 0.0
    %1808 = vmatprep.subr.mxu0 0.0
    %1809 = vmatpush1.msra.mxu0 0.0
    %1810 = vmatprep.subr.mxu0 0.0
    %1811 = vmatpush1.msra.mxu0 0.0
    %1812 = vmatprep.subr.mxu0 0.0
    %1813 = vmatpush1.msra.mxu0 0.0
    %1814 = vmatprep.subr.mxu0 0.0
    %1815 = vmatpush1.msra.mxu0 0.0
    %1816 = vmatprep.subr.mxu0 0.0
    %1817 = vmatpush1.msra.mxu0 0.0
    %1818 = vmatprep.subr.mxu0 0.0
    %1819 = vmatpush1.msra.mxu0 0.0
    %1820 = vmatprep.subr.mxu0 0.0
    %1821 = vmatpush1.msra.mxu0 0.0
    %1822 = vmatprep.subr.mxu0 0.0
    %1823 = vmatpush1.msra.mxu0 0.0
    %1824 = vmatprep.subr.mxu0 0.0
    %1825 = vmatpush1.msra.mxu0 0.0
    %1826 = vmatprep.subr.mxu0 0.0
    %1827 = vmatpush1.msra.mxu0 0.0
    %1828 = vmatprep.subr.mxu0 0.0
    %1829 = vmatpush1.msra.mxu0 0.0
    %1830 = vmatprep.subr.mxu0 0.0
    %1831 = vmatpush1.msra.mxu0 0.0
    %1832 = vmatprep.mubr.f32.mxu0 0.0
    %1833 = vmatmul.mubr.f32.gmra.mrb[0].mxu0 %v1659
    %v1834 = vpop.f32.mrb[0].mxu0
    %v1835 = vadd.f32 %v1767, %v1834
    %v1836 = vpop.f32.mrb[0].mxu0
    %1837 = vmatprep.mubr.f32.mxu0 0.0
    %1838 = vmatmul.mubr.f32.gmra.mrb[0].mxu0 %v1662
    %v1839 = vpop.f32.mrb[0].mxu0
    %v1840 = vadd.f32 %v1767, %v1839
    %v1841 = vpop.f32.mrb[0].mxu0
    %1842 = vmatprep.mubr.f32.mxu0 0.0
    %1843 = vmatmul.mubr.f32.gmra.mrb[0].mxu0 %v1665
    %v1844 = vpop.f32.mrb[0].mxu0
    %v1845 = vadd.f32 %v1767, %v1844
    %v1846 = vpop.f32.mrb[0].mxu0
    %1847 = vmatprep.mubr.f32.mxu0 0.0
    %1848 = vmatmul.mubr.f32.gmra.mrb[0].mxu0 %v1668
    %v1849 = vpop.f32.mrb[0].mxu0
    %v1850 = vadd.f32 %v1767, %v1849
    %v1851 = vpop.f32.mrb[0].mxu0
    %1852 = vdwg.mxu0
    %s1853 = scalar_lea.vmem %s2, 512
    %v1854 = vld [vmem:[%s1853] sm:$0xff]
    %v1855 = vld [vmem:[%s1853 + $0x8] sm:$0xff]
    %v1856 = vld [vmem:[%s1853 + $0x10] sm:$0xff]
    %v1857 = vld [vmem:[%s1853 + $0x18] sm:$0xff]
    %v1858 = vld [vmem:[%s1853 + $0x20] sm:$0xff]
    %v1859 = vld [vmem:[%s1853 + $0x28] sm:$0xff]
    %v1860 = vld [vmem:[%s1853 + $0x30] sm:$0xff]
    %v1861 = vld [vmem:[%s1853 + $0x38] sm:$0xff]
    %v1862 = vlaneseq
    %v1863 = vshrl.u32 %v1862, 7
    %v1864 = vsub.s32 2, %v1863
    %v1865 = vrot.slane %v1643, %v1864
    %1866 = vmatprep.subr.mxu0 0.0
    %1867 = vmatpush1.msra.mxu0 %v1854
    %1868 = vmatprep.subr.mxu0 0.0
    %1869 = vmatpush1.msra.mxu0 %v1855
    %1870 = vmatprep.subr.mxu0 0.0
    %1871 = vmatpush1.msra.mxu0 %v1856
    %1872 = vmatprep.subr.mxu0 0.0
    %1873 = vmatpush1.msra.mxu0 %v1857
    %1874 = vmatprep.subr.mxu0 0.0
    %1875 = vmatpush1.msra.mxu0 %v1858
    %1876 = vmatprep.subr.mxu0 0.0
    %1877 = vmatpush1.msra.mxu0 %v1859
    %1878 = vmatprep.subr.mxu0 0.0
    %1879 = vmatpush1.msra.mxu0 %v1860
    %1880 = vmatprep.subr.mxu0 0.0
    %1881 = vmatpush1.msra.mxu0 %v1861
    %1882 = vmatprep.subr.mxu0 0.0
    %1883 = vmatpush1.msra.mxu0 0.0
    %1884 = vmatprep.subr.mxu0 0.0
    %1885 = vmatpush1.msra.mxu0 0.0
    %1886 = vmatprep.subr.mxu0 0.0
    %1887 = vmatpush1.msra.mxu0 0.0
    %1888 = vmatprep.subr.mxu0 0.0
    %1889 = vmatpush1.msra.mxu0 0.0
    %1890 = vmatprep.subr.mxu0 0.0
    %1891 = vmatpush1.msra.mxu0 0.0
    %1892 = vmatprep.subr.mxu0 0.0
    %1893 = vmatpush1.msra.mxu0 0.0
    %1894 = vmatprep.subr.mxu0 0.0
    %1895 = vmatpush1.msra.mxu0 0.0
    %1896 = vmatprep.subr.mxu0 0.0
    %1897 = vmatpush1.msra.mxu0 0.0
    %1898 = vmatprep.subr.mxu0 0.0
    %1899 = vmatpush1.msra.mxu0 0.0
    %1900 = vmatprep.subr.mxu0 0.0
    %1901 = vmatpush1.msra.mxu0 0.0
    %1902 = vmatprep.subr.mxu0 0.0
    %1903 = vmatpush1.msra.mxu0 0.0
    %1904 = vmatprep.subr.mxu0 0.0
    %1905 = vmatpush1.msra.mxu0 0.0
    %1906 = vmatprep.subr.mxu0 0.0
    %1907 = vmatpush1.msra.mxu0 0.0
    %1908 = vmatprep.subr.mxu0 0.0
    %1909 = vmatpush1.msra.mxu0 0.0
    %1910 = vmatprep.subr.mxu0 0.0
    %1911 = vmatpush1.msra.mxu0 0.0
    %1912 = vmatprep.subr.mxu0 0.0
    %1913 = vmatpush1.msra.mxu0 0.0
    %1914 = vmatprep.subr.mxu0 0.0
    %1915 = vmatpush1.msra.mxu0 0.0
    %1916 = vmatprep.subr.mxu0 0.0
    %1917 = vmatpush1.msra.mxu0 0.0
    %1918 = vmatprep.subr.mxu0 0.0
    %1919 = vmatpush1.msra.mxu0 0.0
    %1920 = vmatprep.subr.mxu0 0.0
    %1921 = vmatpush1.msra.mxu0 0.0
    %1922 = vmatprep.subr.mxu0 0.0
    %1923 = vmatpush1.msra.mxu0 0.0
    %1924 = vmatprep.subr.mxu0 0.0
    %1925 = vmatpush1.msra.mxu0 0.0
    %1926 = vmatprep.subr.mxu0 0.0
    %1927 = vmatpush1.msra.mxu0 0.0
    %1928 = vmatprep.subr.mxu0 0.0
    %1929 = vmatpush1.msra.mxu0 0.0
    %1930 = vmatprep.mubr.f32.mxu0 0.0
    %1931 = vmatmul.mubr.f32.gmra.mrb[0].mxu0 %v1659
    %v1932 = vpop.f32.mrb[0].mxu0
    %v1933 = vadd.f32 %v1865, %v1932
    %v1934 = vpop.f32.mrb[0].mxu0
    %1935 = vmatprep.mubr.f32.mxu0 0.0
    %1936 = vmatmul.mubr.f32.gmra.mrb[0].mxu0 %v1662
    %v1937 = vpop.f32.mrb[0].mxu0
    %v1938 = vadd.f32 %v1865, %v1937
    %v1939 = vpop.f32.mrb[0].mxu0
    %1940 = vmatprep.mubr.f32.mxu0 0.0
    %1941 = vmatmul.mubr.f32.gmra.mrb[0].mxu0 %v1665
    %v1942 = vpop.f32.mrb[0].mxu0
    %v1943 = vadd.f32 %v1865, %v1942
    %v1944 = vpop.f32.mrb[0].mxu0
    %1945 = vmatprep.mubr.f32.mxu0 0.0
    %1946 = vmatmul.mubr.f32.gmra.mrb[0].mxu0 %v1668
    %v1947 = vpop.f32.mrb[0].mxu0
    %v1948 = vadd.f32 %v1865, %v1947
    %v1949 = vpop.f32.mrb[0].mxu0
    %1950 = vdwg.mxu0
    %s1951 = scalar_lea.vmem %s2, 576
    %v1952 = vld [vmem:[%s1951] sm:$0xff]
    %v1953 = vld [vmem:[%s1951 + $0x8] sm:$0xff]
    %v1954 = vld [vmem:[%s1951 + $0x10] sm:$0xff]
    %v1955 = vld [vmem:[%s1951 + $0x18] sm:$0xff]
    %v1956 = vld [vmem:[%s1951 + $0x20] sm:$0xff]
    %v1957 = vld [vmem:[%s1951 + $0x28] sm:$0xff]
    %v1958 = vld [vmem:[%s1951 + $0x30] sm:$0xff]
    %v1959 = vld [vmem:[%s1951 + $0x38] sm:$0xff]
    %v1960 = vlaneseq
    %v1961 = vshrl.u32 %v1960, 7
    %v1962 = vsub.s32 3, %v1961
    %v1963 = vrot.slane %v1643, %v1962
    %1964 = vmatprep.subr.mxu0 0.0
    %1965 = vmatpush1.msra.mxu0 %v1952
    %1966 = vmatprep.subr.mxu0 0.0
    %1967 = vmatpush1.msra.mxu0 %v1953
    %1968 = vmatprep.subr.mxu0 0.0
    %1969 = vmatpush1.msra.mxu0 %v1954
    %1970 = vmatprep.subr.mxu0 0.0
    %1971 = vmatpush1.msra.mxu0 %v1955
    %1972 = vmatprep.subr.mxu0 0.0
    %1973 = vmatpush1.msra.mxu0 %v1956
    %1974 = vmatprep.subr.mxu0 0.0
    %1975 = vmatpush1.msra.mxu0 %v1957
    %1976 = vmatprep.subr.mxu0 0.0
    %1977 = vmatpush1.msra.mxu0 %v1958
    %1978 = vmatprep.subr.mxu0 0.0
    %1979 = vmatpush1.msra.mxu0 %v1959
    %1980 = vmatprep.subr.mxu0 0.0
    %1981 = vmatpush1.msra.mxu0 0.0
    %1982 = vmatprep.subr.mxu0 0.0
    %1983 = vmatpush1.msra.mxu0 0.0
    %1984 = vmatprep.subr.mxu0 0.0
    %1985 = vmatpush1.msra.mxu0 0.0
    %1986 = vmatprep.subr.mxu0 0.0
    %1987 = vmatpush1.msra.mxu0 0.0
    %1988 = vmatprep.subr.mxu0 0.0
    %1989 = vmatpush1.msra.mxu0 0.0
    %1990 = vmatprep.subr.mxu0 0.0
    %1991 = vmatpush1.msra.mxu0 0.0
    %1992 = vmatprep.subr.mxu0 0.0
    %1993 = vmatpush1.msra.mxu0 0.0
    %1994 = vmatprep.subr.mxu0 0.0
    %1995 = vmatpush1.msra.mxu0 0.0
    %1996 = vmatprep.subr.mxu0 0.0
    %1997 = vmatpush1.msra.mxu0 0.0
    %1998 = vmatprep.subr.mxu0 0.0
    %1999 = vmatpush1.msra.mxu0 0.0
    %2000 = vmatprep.subr.mxu0 0.0
    %2001 = vmatpush1.msra.mxu0 0.0
    %2002 = vmatprep.subr.mxu0 0.0
    %2003 = vmatpush1.msra.mxu0 0.0
    %2004 = vmatprep.subr.mxu0 0.0
    %2005 = vmatpush1.msra.mxu0 0.0
    %2006 = vmatprep.subr.mxu0 0.0
    %2007 = vmatpush1.msra.mxu0 0.0
    %2008 = vmatprep.subr.mxu0 0.0
    %2009 = vmatpush1.msra.mxu0 0.0
    %2010 = vmatprep.subr.mxu0 0.0
    %2011 = vmatpush1.msra.mxu0 0.0
    %2012 = vmatprep.subr.mxu0 0.0
    %2013 = vmatpush1.msra.mxu0 0.0
    %2014 = vmatprep.subr.mxu0 0.0
    %2015 = vmatpush1.msra.mxu0 0.0
    %2016 = vmatprep.subr.mxu0 0.0
    %2017 = vmatpush1.msra.mxu0 0.0
    %2018 = vmatprep.subr.mxu0 0.0
    %2019 = vmatpush1.msra.mxu0 0.0
    %2020 = vmatprep.subr.mxu0 0.0
    %2021 = vmatpush1.msra.mxu0 0.0
    %2022 = vmatprep.subr.mxu0 0.0
    %2023 = vmatpush1.msra.mxu0 0.0
    %2024 = vmatprep.subr.mxu0 0.0
    %2025 = vmatpush1.msra.mxu0 0.0
    %2026 = vmatprep.subr.mxu0 0.0
    %2027 = vmatpush1.msra.mxu0 0.0
    %2028 = vmatprep.mubr.f32.mxu0 0.0
    %2029 = vmatmul.mubr.f32.gmra.mrb[0].mxu0 %v1659
    %v2030 = vpop.f32.mrb[0].mxu0
    %v2031 = vadd.f32 %v1963, %v2030
    %v2032 = vpop.f32.mrb[0].mxu0
    %2033 = vmatprep.mubr.f32.mxu0 0.0
    %2034 = vmatmul.mubr.f32.gmra.mrb[0].mxu0 %v1662
    %v2035 = vpop.f32.mrb[0].mxu0
    %v2036 = vadd.f32 %v1963, %v2035
    %v2037 = vpop.f32.mrb[0].mxu0
    %2038 = vmatprep.mubr.f32.mxu0 0.0
    %2039 = vmatmul.mubr.f32.gmra.mrb[0].mxu0 %v1665
    %v2040 = vpop.f32.mrb[0].mxu0
    %v2041 = vadd.f32 %v1963, %v2040
    %v2042 = vpop.f32.mrb[0].mxu0
    %2043 = vmatprep.mubr.f32.mxu0 0.0
    %2044 = vmatmul.mubr.f32.gmra.mrb[0].mxu0 %v1668
    %v2045 = vpop.f32.mrb[0].mxu0
    %v2046 = vadd.f32 %v1963, %v2045
    %v2047 = vpop.f32.mrb[0].mxu0
    %2048 = vdwg.mxu0
    %s2049 = scalar_lea.vmem %s2, 640
    %v2050 = vld [vmem:[%s2049] sm:$0xff]
    %v2051 = vld [vmem:[%s2049 + $0x8] sm:$0xff]
    %v2052 = vld [vmem:[%s2049 + $0x10] sm:$0xff]
    %v2053 = vld [vmem:[%s2049 + $0x18] sm:$0xff]
    %v2054 = vld [vmem:[%s2049 + $0x20] sm:$0xff]
    %v2055 = vld [vmem:[%s2049 + $0x28] sm:$0xff]
    %v2056 = vld [vmem:[%s2049 + $0x30] sm:$0xff]
    %v2057 = vld [vmem:[%s2049 + $0x38] sm:$0xff]
    %v2058 = vlaneseq
    %v2059 = vshrl.u32 %v2058, 7
    %v2060 = vsub.s32 4, %v2059
    %v2061 = vrot.slane %v1643, %v2060
    %2062 = vmatprep.subr.mxu0 0.0
    %2063 = vmatpush1.msra.mxu0 %v2050
    %2064 = vmatprep.subr.mxu0 0.0
    %2065 = vmatpush1.msra.mxu0 %v2051
    %2066 = vmatprep.subr.mxu0 0.0
    %2067 = vmatpush1.msra.mxu0 %v2052
    %2068 = vmatprep.subr.mxu0 0.0
    %2069 = vmatpush1.msra.mxu0 %v2053
    %2070 = vmatprep.subr.mxu0 0.0
    %2071 = vmatpush1.msra.mxu0 %v2054
    %2072 = vmatprep.subr.mxu0 0.0
    %2073 = vmatpush1.msra.mxu0 %v2055
    %2074 = vmatprep.subr.mxu0 0.0
    %2075 = vmatpush1.msra.mxu0 %v2056
    %2076 = vmatprep.subr.mxu0 0.0
    %2077 = vmatpush1.msra.mxu0 %v2057
    %2078 = vmatprep.subr.mxu0 0.0
    %2079 = vmatpush1.msra.mxu0 0.0
    %2080 = vmatprep.subr.mxu0 0.0
    %2081 = vmatpush1.msra.mxu0 0.0
    %2082 = vmatprep.subr.mxu0 0.0
    %2083 = vmatpush1.msra.mxu0 0.0
    %2084 = vmatprep.subr.mxu0 0.0
    %2085 = vmatpush1.msra.mxu0 0.0
    %2086 = vmatprep.subr.mxu0 0.0
    %2087 = vmatpush1.msra.mxu0 0.0
    %2088 = vmatprep.subr.mxu0 0.0
    %2089 = vmatpush1.msra.mxu0 0.0
    %2090 = vmatprep.subr.mxu0 0.0
    %2091 = vmatpush1.msra.mxu0 0.0
    %2092 = vmatprep.subr.mxu0 0.0
    %2093 = vmatpush1.msra.mxu0 0.0
    %2094 = vmatprep.subr.mxu0 0.0
    %2095 = vmatpush1.msra.mxu0 0.0
    %2096 = vmatprep.subr.mxu0 0.0
    %2097 = vmatpush1.msra.mxu0 0.0
    %2098 = vmatprep.subr.mxu0 0.0
    %2099 = vmatpush1.msra.mxu0 0.0
    %2100 = vmatprep.subr.mxu0 0.0
    %2101 = vmatpush1.msra.mxu0 0.0
    %2102 = vmatprep.subr.mxu0 0.0
    %2103 = vmatpush1.msra.mxu0 0.0
    %2104 = vmatprep.subr.mxu0 0.0
    %2105 = vmatpush1.msra.mxu0 0.0
    %2106 = vmatprep.subr.mxu0 0.0
    %2107 = vmatpush1.msra.mxu0 0.0
    %2108 = vmatprep.subr.mxu0 0.0
    %2109 = vmatpush1.msra.mxu0 0.0
    %2110 = vmatprep.subr.mxu0 0.0
    %2111 = vmatpush1.msra.mxu0 0.0
    %2112 = vmatprep.subr.mxu0 0.0
    %2113 = vmatpush1.msra.mxu0 0.0
    %2114 = vmatprep.subr.mxu0 0.0
    %2115 = vmatpush1.msra.mxu0 0.0
    %2116 = vmatprep.subr.mxu0 0.0
    %2117 = vmatpush1.msra.mxu0 0.0
    %2118 = vmatprep.subr.mxu0 0.0
    %2119 = vmatpush1.msra.mxu0 0.0
    %2120 = vmatprep.subr.mxu0 0.0
    %2121 = vmatpush1.msra.mxu0 0.0
    %2122 = vmatprep.subr.mxu0 0.0
    %2123 = vmatpush1.msra.mxu0 0.0
    %2124 = vmatprep.subr.mxu0 0.0
    %2125 = vmatpush1.msra.mxu0 0.0
    %2126 = vmatprep.mubr.f32.mxu0 0.0
    %2127 = vmatmul.mubr.f32.gmra.mrb[0].mxu0 %v1659
    %v2128 = vpop.f32.mrb[0].mxu0
    %v2129 = vadd.f32 %v2061, %v2128
    %v2130 = vpop.f32.mrb[0].mxu0
    %2131 = vmatprep.mubr.f32.mxu0 0.0
    %2132 = vmatmul.mubr.f32.gmra.mrb[0].mxu0 %v1662
    %v2133 = vpop.f32.mrb[0].mxu0
    %v2134 = vadd.f32 %v2061, %v2133
    %v2135 = vpop.f32.mrb[0].mxu0
    %2136 = vmatprep.mubr.f32.mxu0 0.0
    %2137 = vmatmul.mubr.f32.gmra.mrb[0].mxu0 %v1665
    %v2138 = vpop.f32.mrb[0].mxu0
    %v2139 = vadd.f32 %v2061, %v2138
    %v2140 = vpop.f32.mrb[0].mxu0
    %2141 = vmatprep.mubr.f32.mxu0 0.0
    %2142 = vmatmul.mubr.f32.gmra.mrb[0].mxu0 %v1668
    %v2143 = vpop.f32.mrb[0].mxu0
    %v2144 = vadd.f32 %v2061, %v2143
    %v2145 = vpop.f32.mrb[0].mxu0
    %2146 = vdwg.mxu0
    %s2147 = scalar_lea.vmem %s2, 704
    %v2148 = vld [vmem:[%s2147] sm:$0xff]
    %v2149 = vld [vmem:[%s2147 + $0x8] sm:$0xff]
    %v2150 = vld [vmem:[%s2147 + $0x10] sm:$0xff]
    %v2151 = vld [vmem:[%s2147 + $0x18] sm:$0xff]
    %v2152 = vld [vmem:[%s2147 + $0x20] sm:$0xff]
    %v2153 = vld [vmem:[%s2147 + $0x28] sm:$0xff]
    %v2154 = vld [vmem:[%s2147 + $0x30] sm:$0xff]
    %v2155 = vld [vmem:[%s2147 + $0x38] sm:$0xff]
    %v2156 = vlaneseq
    %v2157 = vshrl.u32 %v2156, 7
    %v2158 = vsub.s32 5, %v2157
    %v2159 = vrot.slane %v1643, %v2158
    %2160 = vmatprep.subr.mxu0 0.0
    %2161 = vmatpush1.msra.mxu0 %v2148
    %2162 = vmatprep.subr.mxu0 0.0
    %2163 = vmatpush1.msra.mxu0 %v2149
    %2164 = vmatprep.subr.mxu0 0.0
    %2165 = vmatpush1.msra.mxu0 %v2150
    %2166 = vmatprep.subr.mxu0 0.0
    %2167 = vmatpush1.msra.mxu0 %v2151
    %2168 = vmatprep.subr.mxu0 0.0
    %2169 = vmatpush1.msra.mxu0 %v2152
    %2170 = vmatprep.subr.mxu0 0.0
    %2171 = vmatpush1.msra.mxu0 %v2153
    %2172 = vmatprep.subr.mxu0 0.0
    %2173 = vmatpush1.msra.mxu0 %v2154
    %2174 = vmatprep.subr.mxu0 0.0
    %2175 = vmatpush1.msra.mxu0 %v2155
    %2176 = vmatprep.subr.mxu0 0.0
    %2177 = vmatpush1.msra.mxu0 0.0
    %2178 = vmatprep.subr.mxu0 0.0
    %2179 = vmatpush1.msra.mxu0 0.0
    %2180 = vmatprep.subr.mxu0 0.0
    %2181 = vmatpush1.msra.mxu0 0.0
    %2182 = vmatprep.subr.mxu0 0.0
    %2183 = vmatpush1.msra.mxu0 0.0
    %2184 = vmatprep.subr.mxu0 0.0
    %2185 = vmatpush1.msra.mxu0 0.0
    %2186 = vmatprep.subr.mxu0 0.0
    %2187 = vmatpush1.msra.mxu0 0.0
    %2188 = vmatprep.subr.mxu0 0.0
    %2189 = vmatpush1.msra.mxu0 0.0
    %2190 = vmatprep.subr.mxu0 0.0
    %2191 = vmatpush1.msra.mxu0 0.0
    %2192 = vmatprep.subr.mxu0 0.0
    %2193 = vmatpush1.msra.mxu0 0.0
    %2194 = vmatprep.subr.mxu0 0.0
    %2195 = vmatpush1.msra.mxu0 0.0
    %2196 = vmatprep.subr.mxu0 0.0
    %2197 = vmatpush1.msra.mxu0 0.0
    %2198 = vmatprep.subr.mxu0 0.0
    %2199 = vmatpush1.msra.mxu0 0.0
    %2200 = vmatprep.subr.mxu0 0.0
    %2201 = vmatpush1.msra.mxu0 0.0
    %2202 = vmatprep.subr.mxu0 0.0
    %2203 = vmatpush1.msra.mxu0 0.0
    %2204 = vmatprep.subr.mxu0 0.0
    %2205 = vmatpush1.msra.mxu0 0.0
    %2206 = vmatprep.subr.mxu0 0.0
    %2207 = vmatpush1.msra.mxu0 0.0
    %2208 = vmatprep.subr.mxu0 0.0
    %2209 = vmatpush1.msra.mxu0 0.0
    %2210 = vmatprep.subr.mxu0 0.0
    %2211 = vmatpush1.msra.mxu0 0.0
    %2212 = vmatprep.subr.mxu0 0.0
    %2213 = vmatpush1.msra.mxu0 0.0
    %2214 = vmatprep.subr.mxu0 0.0
    %2215 = vmatpush1.msra.mxu0 0.0
    %2216 = vmatprep.subr.mxu0 0.0
    %2217 = vmatpush1.msra.mxu0 0.0
    %2218 = vmatprep.subr.mxu0 0.0
    %2219 = vmatpush1.msra.mxu0 0.0
    %2220 = vmatprep.subr.mxu0 0.0
    %2221 = vmatpush1.msra.mxu0 0.0
    %2222 = vmatprep.subr.mxu0 0.0
    %2223 = vmatpush1.msra.mxu0 0.0
    %2224 = vmatprep.mubr.f32.mxu0 0.0
    %2225 = vmatmul.mubr.f32.gmra.mrb[0].mxu0 %v1659
    %v2226 = vpop.f32.mrb[0].mxu0
    %v2227 = vadd.f32 %v2159, %v2226
    %v2228 = vpop.f32.mrb[0].mxu0
    %2229 = vmatprep.mubr.f32.mxu0 0.0
    %2230 = vmatmul.mubr.f32.gmra.mrb[0].mxu0 %v1662
    %v2231 = vpop.f32.mrb[0].mxu0
    %v2232 = vadd.f32 %v2159, %v2231
    %v2233 = vpop.f32.mrb[0].mxu0
    %2234 = vmatprep.mubr.f32.mxu0 0.0
    %2235 = vmatmul.mubr.f32.gmra.mrb[0].mxu0 %v1665
    %v2236 = vpop.f32.mrb[0].mxu0
    %v2237 = vadd.f32 %v2159, %v2236
    %v2238 = vpop.f32.mrb[0].mxu0
    %2239 = vmatprep.mubr.f32.mxu0 0.0
    %2240 = vmatmul.mubr.f32.gmra.mrb[0].mxu0 %v1668
    %v2241 = vpop.f32.mrb[0].mxu0
    %v2242 = vadd.f32 %v2159, %v2241
    %v2243 = vpop.f32.mrb[0].mxu0
    %2244 = vdwg.mxu0
    %v2246 = vsel %vm641, %v1737, 0
    %v2249 = vsel %vm641, %v1742, 0
    %v2252 = vsel %vm641, %v1747, 0
    %v2255 = vsel %vm641, %v1752, 0
    %v2258 = vsel %vm641, %v1835, 0
    %v2261 = vsel %vm641, %v1840, 0
    %v2264 = vsel %vm641, %v1845, 0
    %v2267 = vsel %vm641, %v1850, 0
    %v2270 = vsel %vm641, %v1933, 0
    %v2273 = vsel %vm641, %v1938, 0
    %v2276 = vsel %vm641, %v1943, 0
    %v2279 = vsel %vm641, %v1948, 0
    %v2282 = vsel %vm641, %v2031, 0
    %v2285 = vsel %vm641, %v2036, 0
    %v2288 = vsel %vm641, %v2041, 0
    %v2291 = vsel %vm641, %v2046, 0
    %2293 = vmatprep.subr.mxu0 0.0
    %2294 = vmatpush1.xpose.msra.mxu0 %v2270
    %2295 = vmatprep.subr.mxu0 0.0
    %2296 = vmatpush1.xpose.msra.mxu0 %v2273
    %2297 = vmatprep.subr.mxu0 0.0
    %2298 = vmatpush1.xpose.msra.mxu0 %v2276
    %2299 = vmatprep.subr.mxu0 0.0
    %2300 = vmatpush1.xpose.msra.mxu0 %v2279
    %2301 = vmatprep.subr.mxu0 0.0
    %2302 = vmatpush1.xpose.msra.mxu0 %v2282
    %2303 = vmatprep.subr.mxu0 0.0
    %2304 = vmatpush1.xpose.msra.mxu0 %v2285
    %2305 = vmatprep.subr.mxu0 0.0
    %2306 = vmatpush1.xpose.msra.mxu0 %v2288
    %2307 = vmatprep.subr.mxu0 0.0
    %2308 = vmatpush1.xpose.msra.mxu0 %v2291
    %2309 = vmatprep.subr.mxu0 0.0
    %2310 = vmatpush1.xpose.msra.mxu0 0.0
    %2311 = vmatprep.subr.mxu0 0.0
    %2312 = vmatpush1.xpose.msra.mxu0 0.0
    %2313 = vmatprep.subr.mxu0 0.0
    %2314 = vmatpush1.xpose.msra.mxu0 0.0
    %2315 = vmatprep.subr.mxu0 0.0
    %2316 = vmatpush1.xpose.msra.mxu0 0.0
    %2317 = vmatprep.subr.mxu0 0.0
    %2318 = vmatpush1.xpose.msra.mxu0 0.0
    %2319 = vmatprep.subr.mxu0 0.0
    %2320 = vmatpush1.xpose.msra.mxu0 0.0
    %2321 = vmatprep.subr.mxu0 0.0
    %2322 = vmatpush1.xpose.msra.mxu0 0.0
    %2323 = vmatprep.subr.mxu0 0.0
    %2324 = vmatpush1.xpose.msra.mxu0 0.0
    %2325 = vmatprep.subr.mxu0 0.0
    %2326 = vmatpush1.xpose.msra.mxu0 0.0
    %2327 = vmatprep.subr.mxu0 0.0
    %2328 = vmatpush1.xpose.msra.mxu0 0.0
    %2329 = vmatprep.subr.mxu0 0.0
    %2330 = vmatpush1.xpose.msra.mxu0 0.0
    %2331 = vmatprep.subr.mxu0 0.0
    %2332 = vmatpush1.xpose.msra.mxu0 0.0
    %2333 = vmatprep.subr.mxu0 0.0
    %2334 = vmatpush1.xpose.msra.mxu0 0.0
    %2335 = vmatprep.subr.mxu0 0.0
    %2336 = vmatpush1.xpose.msra.mxu0 0.0
    %2337 = vmatprep.subr.mxu0 0.0
    %2338 = vmatpush1.xpose.msra.mxu0 0.0
    %2339 = vmatprep.subr.mxu0 0.0
    %2340 = vmatpush1.xpose.msra.mxu0 0.0
    %2341 = vmatprep.subr.mxu0 0.0
    %2342 = vmatpush1.xpose.msra.mxu0 0.0
    %2343 = vmatprep.subr.mxu0 0.0
    %2344 = vmatpush1.xpose.msra.mxu0 0.0
    %2345 = vmatprep.subr.mxu0 0.0
    %2346 = vmatpush1.xpose.msra.mxu0 0.0
    %2347 = vmatprep.subr.mxu0 0.0
    %2348 = vmatpush1.xpose.msra.mxu0 0.0
    %2349 = vmatprep.subr.mxu0 0.0
    %2350 = vmatpush1.xpose.msra.mxu0 0.0
    %2351 = vmatprep.subr.mxu0 0.0
    %2352 = vmatpush1.xpose.msra.mxu0 0.0
    %2353 = vmatprep.subr.mxu0 0.0
    %2354 = vmatpush1.xpose.msra.mxu0 0.0
    %2355 = vmatprep.subr.mxu0 0.0
    %2356 = vmatpush1.xpose.msra.mxu0 0.0
    %2357 = vmatprep.mubr.f32.mxu0 0.0
    %2358 = vmatmul.mubr.f32.gmra.mrb[0].mxu0 %v2246
    %v2359 = vpop.f32.mrb[0].mxu0
    %v2360 = vadd.f32 %v31, %v2359
    %v2361 = vpop.f32.mrb[0].mxu0
    %2362 = vmatprep.mubr.f32.mxu0 0.0
    %2363 = vmatmul.mubr.f32.gmra.mrb[0].mxu0 %v2249
    %v2364 = vpop.f32.mrb[0].mxu0
    %v2365 = vadd.f32 %v32, %v2364
    %v2366 = vpop.f32.mrb[0].mxu0
    %2367 = vmatprep.mubr.f32.mxu0 0.0
    %2368 = vmatmul.mubr.f32.gmra.mrb[0].mxu0 %v2252
    %v2369 = vpop.f32.mrb[0].mxu0
    %v2370 = vadd.f32 %v33, %v2369
    %v2371 = vpop.f32.mrb[0].mxu0
    %2372 = vmatprep.mubr.f32.mxu0 0.0
    %2373 = vmatmul.mubr.f32.gmra.mrb[0].mxu0 %v2255
    %v2374 = vpop.f32.mrb[0].mxu0
    %v2375 = vadd.f32 %v34, %v2374
    %v2376 = vpop.f32.mrb[0].mxu0
    %2377 = vmatprep.mubr.f32.mxu0 0.0
    %2378 = vmatmul.mubr.f32.gmra.mrb[0].mxu0 %v2258
    %v2379 = vpop.f32.mrb[0].mxu0
    %v2380 = vadd.f32 %v35, %v2379
    %v2381 = vpop.f32.mrb[0].mxu0
    %2382 = vmatprep.mubr.f32.mxu0 0.0
    %2383 = vmatmul.mubr.f32.gmra.mrb[0].mxu0 %v2261
    %v2384 = vpop.f32.mrb[0].mxu0
    %v2385 = vadd.f32 %v36, %v2384
    %v2386 = vpop.f32.mrb[0].mxu0
    %2387 = vmatprep.mubr.f32.mxu0 0.0
    %2388 = vmatmul.mubr.f32.gmra.mrb[0].mxu0 %v2264
    %v2389 = vpop.f32.mrb[0].mxu0
    %v2390 = vadd.f32 %v37, %v2389
    %v2391 = vpop.f32.mrb[0].mxu0
    %2392 = vmatprep.mubr.f32.mxu0 0.0
    %2393 = vmatmul.mubr.f32.gmra.mrb[0].mxu0 %v2267
    %v2394 = vpop.f32.mrb[0].mxu0
    %v2395 = vadd.f32 %v38, %v2394
    %v2396 = vpop.f32.mrb[0].mxu0
    %2397 = vdwg.mxu0
    %v2398 = vsel %vm53, %v2360, -inf
    %2399 = vmax.xlane.f32.xlu0 %v2398
    %v2400 = vpop.xlane.xlu0 %2399
    %v2401 = vsel %vm53, %v2365, -inf
    %2402 = vmax.xlane.f32.xlu0 %v2401
    %v2403 = vpop.xlane.xlu0 %2402
    %v2404 = vsel %vm53, %v2370, -inf
    %2405 = vmax.xlane.f32.xlu0 %v2404
    %v2406 = vpop.xlane.xlu0 %2405
    %v2407 = vsel %vm53, %v2375, -inf
    %2408 = vmax.xlane.f32.xlu0 %v2407
    %v2409 = vpop.xlane.xlu0 %2408
    %v2410 = vsel %vm53, %v2380, -inf
    %2411 = vmax.xlane.f32.xlu0 %v2410
    %v2412 = vpop.xlane.xlu0 %2411
    %v2413 = vsel %vm53, %v2385, -inf
    %2414 = vmax.xlane.f32.xlu0 %v2413
    %v2415 = vpop.xlane.xlu0 %2414
    %v2416 = vsel %vm53, %v2390, -inf
    %2417 = vmax.xlane.f32.xlu0 %v2416
    %v2418 = vpop.xlane.xlu0 %2417
    %v2419 = vsel %vm53, %v2395, -inf
    %2420 = vmax.xlane.f32.xlu0 %v2419
    %v2421 = vpop.xlane.xlu0 %2420
    %v2422 = vsub.f32 %v2360, %v2400
    %v2423 = vsub.f32 %v2365, %v2403
    %v2424 = vsub.f32 %v2370, %v2406
    %v2425 = vsub.f32 %v2375, %v2409
    %v2426 = vsub.f32 %v2380, %v2412
    %v2427 = vsub.f32 %v2385, %v2415
    %v2428 = vsub.f32 %v2390, %v2418
    %v2429 = vsub.f32 %v2395, %v2421
    %v2430 = vmul.f32 %v2422, 1.442695
    %v2431 = vpow.pop %v2430
    %v2432 = vmul.f32 %v2423, 1.442695
    %v2433 = vpow.pop %v2432
    %v2434 = vmul.f32 %v2424, 1.442695
    %v2435 = vpow.pop %v2434
    %v2436 = vmul.f32 %v2425, 1.442695
    %v2437 = vpow.pop %v2436
    %v2438 = vmul.f32 %v2426, 1.442695
    %v2439 = vpow.pop %v2438
    %v2440 = vmul.f32 %v2427, 1.442695
    %v2441 = vpow.pop %v2440
    %v2442 = vmul.f32 %v2428, 1.442695
    %v2443 = vpow.pop %v2442
    %v2444 = vmul.f32 %v2429, 1.442695
    %v2445 = vpow.pop %v2444
    %v2446 = vsel %vm53, %v2431, 0.0
    %2447 = vadd.xlane.f32.xlu0 %v2446
    %v2448 = vpop.xlane.xlu0 %2447
    %v2449 = vsel %vm53, %v2433, 0.0
    %2450 = vadd.xlane.f32.xlu0 %v2449
    %v2451 = vpop.xlane.xlu0 %2450
    %v2452 = vsel %vm53, %v2435, 0.0
    %2453 = vadd.xlane.f32.xlu0 %v2452
    %v2454 = vpop.xlane.xlu0 %2453
    %v2455 = vsel %vm53, %v2437, 0.0
    %2456 = vadd.xlane.f32.xlu0 %v2455
    %v2457 = vpop.xlane.xlu0 %2456
    %v2458 = vsel %vm53, %v2439, 0.0
    %2459 = vadd.xlane.f32.xlu0 %v2458
    %v2460 = vpop.xlane.xlu0 %2459
    %v2461 = vsel %vm53, %v2441, 0.0
    %2462 = vadd.xlane.f32.xlu0 %v2461
    %v2463 = vpop.xlane.xlu0 %2462
    %v2464 = vsel %vm53, %v2443, 0.0
    %2465 = vadd.xlane.f32.xlu0 %v2464
    %v2466 = vpop.xlane.xlu0 %2465
    %v2467 = vsel %vm53, %v2445, 0.0
    %2468 = vadd.xlane.f32.xlu0 %v2467
    %v2469 = vpop.xlane.xlu0 %2468
    %v2470 = vrcp.pop %v2448
    %v2471 = vrcp.pop %v2451
    %v2472 = vrcp.pop %v2454
    %v2473 = vrcp.pop %v2457
    %v2474 = vrcp.pop %v2460
    %v2475 = vrcp.pop %v2463
    %v2476 = vrcp.pop %v2466
    %v2477 = vrcp.pop %v2469
    %v2478 = vmul.f32 %v2431, %v2470
    %v2479 = vmul.f32 %v2433, %v2471
    %v2480 = vmul.f32 %v2435, %v2472
    %v2481 = vmul.f32 %v2437, %v2473
    %v2482 = vmul.f32 %v2439, %v2474
    %v2483 = vmul.f32 %v2441, %v2475
    %v2484 = vmul.f32 %v2443, %v2476
    %v2485 = vmul.f32 %v2445, %v2477
    %v2487 = vsel %vm53, %v2478, 0
    %v2490 = vsel %vm53, %v2479, 0
    %v2493 = vsel %vm53, %v2480, 0
    %v2496 = vsel %vm53, %v2481, 0
    %v2499 = vsel %vm53, %v2482, 0
    %v2502 = vsel %vm53, %v2483, 0
    %v2505 = vsel %vm53, %v2484, 0
    %v2508 = vsel %vm53, %v2485, 0
    %2510 = vmatprep.subr.mxu0 0.0
    %2511 = vmatpush1.msra.mxu0 %v2129
    %2512 = vmatprep.subr.mxu0 0.0
    %2513 = vmatpush1.msra.mxu0 %v2134
    %2514 = vmatprep.subr.mxu0 0.0
    %2515 = vmatpush1.msra.mxu0 %v2139
    %2516 = vmatprep.subr.mxu0 0.0
    %2517 = vmatpush1.msra.mxu0 %v2144
    %2518 = vmatprep.subr.mxu0 0.0
    %2519 = vmatpush1.msra.mxu0 %v2227
    %2520 = vmatprep.subr.mxu0 0.0
    %2521 = vmatpush1.msra.mxu0 %v2232
    %2522 = vmatprep.subr.mxu0 0.0
    %2523 = vmatpush1.msra.mxu0 %v2237
    %2524 = vmatprep.subr.mxu0 0.0
    %2525 = vmatpush1.msra.mxu0 %v2242
    %2526 = vmatprep.subr.mxu0 0.0
    %2527 = vmatpush1.msra.mxu0 0.0
    %2528 = vmatprep.subr.mxu0 0.0
    %2529 = vmatpush1.msra.mxu0 0.0
    %2530 = vmatprep.subr.mxu0 0.0
    %2531 = vmatpush1.msra.mxu0 0.0
    %2532 = vmatprep.subr.mxu0 0.0
    %2533 = vmatpush1.msra.mxu0 0.0
    %2534 = vmatprep.subr.mxu0 0.0
    %2535 = vmatpush1.msra.mxu0 0.0
    %2536 = vmatprep.subr.mxu0 0.0
    %2537 = vmatpush1.msra.mxu0 0.0
    %2538 = vmatprep.subr.mxu0 0.0
    %2539 = vmatpush1.msra.mxu0 0.0
    %2540 = vmatprep.subr.mxu0 0.0
    %2541 = vmatpush1.msra.mxu0 0.0
    %2542 = vmatprep.subr.mxu0 0.0
    %2543 = vmatpush1.msra.mxu0 0.0
    %2544 = vmatprep.subr.mxu0 0.0
    %2545 = vmatpush1.msra.mxu0 0.0
    %2546 = vmatprep.subr.mxu0 0.0
    %2547 = vmatpush1.msra.mxu0 0.0
    %2548 = vmatprep.subr.mxu0 0.0
    %2549 = vmatpush1.msra.mxu0 0.0
    %2550 = vmatprep.subr.mxu0 0.0
    %2551 = vmatpush1.msra.mxu0 0.0
    %2552 = vmatprep.subr.mxu0 0.0
    %2553 = vmatpush1.msra.mxu0 0.0
    %2554 = vmatprep.subr.mxu0 0.0
    %2555 = vmatpush1.msra.mxu0 0.0
    %2556 = vmatprep.subr.mxu0 0.0
    %2557 = vmatpush1.msra.mxu0 0.0
    %2558 = vmatprep.subr.mxu0 0.0
    %2559 = vmatpush1.msra.mxu0 0.0
    %2560 = vmatprep.subr.mxu0 0.0
    %2561 = vmatpush1.msra.mxu0 0.0
    %2562 = vmatprep.subr.mxu0 0.0
    %2563 = vmatpush1.msra.mxu0 0.0
    %2564 = vmatprep.subr.mxu0 0.0
    %2565 = vmatpush1.msra.mxu0 0.0
    %2566 = vmatprep.subr.mxu0 0.0
    %2567 = vmatpush1.msra.mxu0 0.0
    %2568 = vmatprep.subr.mxu0 0.0
    %2569 = vmatpush1.msra.mxu0 0.0
    %2570 = vmatprep.subr.mxu0 0.0
    %2571 = vmatpush1.msra.mxu0 0.0
    %2572 = vmatprep.subr.mxu0 0.0
    %2573 = vmatpush1.msra.mxu0 0.0
    %2574 = vmatprep.mubr.f32.mxu0 0.0
    %2575 = vmatmul.mubr.f32.gmra.mrb[0].mxu0 %v2487
    %v2576 = vpop.f32.mrb[0].mxu0
    %v2577 = vadd.f32 0.0, %v2576
    %v2578 = vpop.f32.mrb[0].mxu0
    %2579 = vmatprep.mubr.f32.mxu0 0.0
    %2580 = vmatmul.mubr.f32.gmra.mrb[0].mxu0 %v2490
    %v2581 = vpop.f32.mrb[0].mxu0
    %v2582 = vadd.f32 0.0, %v2581
    %v2583 = vpop.f32.mrb[0].mxu0
    %2584 = vmatprep.mubr.f32.mxu0 0.0
    %2585 = vmatmul.mubr.f32.gmra.mrb[0].mxu0 %v2493
    %v2586 = vpop.f32.mrb[0].mxu0
    %v2587 = vadd.f32 0.0, %v2586
    %v2588 = vpop.f32.mrb[0].mxu0
    %2589 = vmatprep.mubr.f32.mxu0 0.0
    %2590 = vmatmul.mubr.f32.gmra.mrb[0].mxu0 %v2496
    %v2591 = vpop.f32.mrb[0].mxu0
    %v2592 = vadd.f32 0.0, %v2591
    %v2593 = vpop.f32.mrb[0].mxu0
    %2594 = vmatprep.mubr.f32.mxu0 0.0
    %2595 = vmatmul.mubr.f32.gmra.mrb[0].mxu0 %v2499
    %v2596 = vpop.f32.mrb[0].mxu0
    %v2597 = vadd.f32 0.0, %v2596
    %v2598 = vpop.f32.mrb[0].mxu0
    %2599 = vmatprep.mubr.f32.mxu0 0.0
    %2600 = vmatmul.mubr.f32.gmra.mrb[0].mxu0 %v2502
    %v2601 = vpop.f32.mrb[0].mxu0
    %v2602 = vadd.f32 0.0, %v2601
    %v2603 = vpop.f32.mrb[0].mxu0
    %2604 = vmatprep.mubr.f32.mxu0 0.0
    %2605 = vmatmul.mubr.f32.gmra.mrb[0].mxu0 %v2505
    %v2606 = vpop.f32.mrb[0].mxu0
    %v2607 = vadd.f32 0.0, %v2606
    %v2608 = vpop.f32.mrb[0].mxu0
    %2609 = vmatprep.mubr.f32.mxu0 0.0
    %2610 = vmatmul.mubr.f32.gmra.mrb[0].mxu0 %v2508
    %v2611 = vpop.f32.mrb[0].mxu0
    %v2612 = vadd.f32 0.0, %v2611
    %v2613 = vpop.f32.mrb[0].mxu0
    %2614 = vdwg.mxu0
    %s2615 = scalar_lea.vmem %s3, 64
    %v2616 = vld [vmem:[%s2615] sm:$0xff]
    %v2617 = vld [vmem:[%s2615 + $0x8] sm:$0xff]
    %v2618 = vld [vmem:[%s2615 + $0x10] sm:$0xff]
    %v2619 = vld [vmem:[%s2615 + $0x18] sm:$0xff]
    %s2620 = scalar_lea.vmem %s3, 96
    %v2621 = vld [vmem:[%s2620] sm:$0xff]
    %v2622 = vld [vmem:[%s2620 + $0x8] sm:$0xff]
    %v2623 = vld [vmem:[%s2620 + $0x10] sm:$0xff]
    %v2624 = vld [vmem:[%s2620 + $0x18] sm:$0xff]
    %v2626 = vsel %vm641, %v2597, 0
    %v2629 = vsel %vm641, %v2602, 0
    %v2632 = vsel %vm641, %v2607, 0
    %v2635 = vsel %vm641, %v2612, 0
    %2637 = vmatprep.subr.mxu0 0.0
    %2638 = vmatpush1.msra.mxu0 %v2621
    %2639 = vmatprep.subr.mxu0 0.0
    %2640 = vmatpush1.msra.mxu0 %v2622
    %2641 = vmatprep.subr.mxu0 0.0
    %2642 = vmatpush1.msra.mxu0 %v2623
    %2643 = vmatprep.subr.mxu0 0.0
    %2644 = vmatpush1.msra.mxu0 %v2624
    %2645 = vmatprep.subr.mxu0 0.0
    %2646 = vmatpush1.msra.mxu0 0.0
    %2647 = vmatprep.subr.mxu0 0.0
    %2648 = vmatpush1.msra.mxu0 0.0
    %2649 = vmatprep.subr.mxu0 0.0
    %2650 = vmatpush1.msra.mxu0 0.0
    %2651 = vmatprep.subr.mxu0 0.0
    %2652 = vmatpush1.msra.mxu0 0.0
    %2653 = vmatprep.subr.mxu0 0.0
    %2654 = vmatpush1.msra.mxu0 0.0
    %2655 = vmatprep.subr.mxu0 0.0
    %2656 = vmatpush1.msra.mxu0 0.0
    %2657 = vmatprep.subr.mxu0 0.0
    %2658 = vmatpush1.msra.mxu0 0.0
    %2659 = vmatprep.subr.mxu0 0.0
    %2660 = vmatpush1.msra.mxu0 0.0
    %2661 = vmatprep.subr.mxu0 0.0
    %2662 = vmatpush1.msra.mxu0 0.0
    %2663 = vmatprep.subr.mxu0 0.0
    %2664 = vmatpush1.msra.mxu0 0.0
    %2665 = vmatprep.subr.mxu0 0.0
    %2666 = vmatpush1.msra.mxu0 0.0
    %2667 = vmatprep.subr.mxu0 0.0
    %2668 = vmatpush1.msra.mxu0 0.0
    %2669 = vmatprep.subr.mxu0 0.0
    %2670 = vmatpush1.msra.mxu0 0.0
    %2671 = vmatprep.subr.mxu0 0.0
    %2672 = vmatpush1.msra.mxu0 0.0
    %2673 = vmatprep.subr.mxu0 0.0
    %2674 = vmatpush1.msra.mxu0 0.0
    %2675 = vmatprep.subr.mxu0 0.0
    %2676 = vmatpush1.msra.mxu0 0.0
    %2677 = vmatprep.subr.mxu0 0.0
    %2678 = vmatpush1.msra.mxu0 0.0
    %2679 = vmatprep.subr.mxu0 0.0
    %2680 = vmatpush1.msra.mxu0 0.0
    %2681 = vmatprep.subr.mxu0 0.0
    %2682 = vmatpush1.msra.mxu0 0.0
    %2683 = vmatprep.subr.mxu0 0.0
    %2684 = vmatpush1.msra.mxu0 0.0
    %2685 = vmatprep.subr.mxu0 0.0
    %2686 = vmatpush1.msra.mxu0 0.0
    %2687 = vmatprep.subr.mxu0 0.0
    %2688 = vmatpush1.msra.mxu0 0.0
    %2689 = vmatprep.subr.mxu0 0.0
    %2690 = vmatpush1.msra.mxu0 0.0
    %2691 = vmatprep.subr.mxu0 0.0
    %2692 = vmatpush1.msra.mxu0 0.0
    %2693 = vmatprep.subr.mxu0 0.0
    %2694 = vmatpush1.msra.mxu0 0.0
    %2695 = vmatprep.subr.mxu0 0.0
    %2696 = vmatpush1.msra.mxu0 0.0
    %2697 = vmatprep.subr.mxu0 0.0
    %2698 = vmatpush1.msra.mxu0 0.0
    %2699 = vmatprep.subr.mxu0 0.0
    %2700 = vmatpush1.msra.mxu0 0.0
    %2701 = vmatprep.mubr.f32.mxu0 0.0
    %2702 = vmatmul.mubr.f32.gmra.mrb[0].mxu0 %v2626
    %v2703 = vpop.f32.mrb[0].mxu0
    %v2704 = vadd.f32 0.0, %v2703
    %v2705 = vpop.f32.mrb[0].mxu0
    %2706 = vmatprep.mubr.f32.mxu0 0.0
    %2707 = vmatmul.mubr.f32.gmra.mrb[0].mxu0 %v2629
    %v2708 = vpop.f32.mrb[0].mxu0
    %v2709 = vadd.f32 0.0, %v2708
    %v2710 = vpop.f32.mrb[0].mxu0
    %2711 = vmatprep.mubr.f32.mxu0 0.0
    %2712 = vmatmul.mubr.f32.gmra.mrb[0].mxu0 %v2632
    %v2713 = vpop.f32.mrb[0].mxu0
    %v2714 = vadd.f32 0.0, %v2713
    %v2715 = vpop.f32.mrb[0].mxu0
    %2716 = vmatprep.mubr.f32.mxu0 0.0
    %2717 = vmatmul.mubr.f32.gmra.mrb[0].mxu0 %v2635
    %v2718 = vpop.f32.mrb[0].mxu0
    %v2719 = vadd.f32 0.0, %v2718
    %v2720 = vpop.f32.mrb[0].mxu0
    %2721 = vdwg.mxu0
    %v2723 = vsel %vm641, %v2577, 0
    %v2726 = vsel %vm641, %v2582, 0
    %v2729 = vsel %vm641, %v2587, 0
    %v2732 = vsel %vm641, %v2592, 0
    %2734 = vmatprep.subr.mxu0 0.0
    %2735 = vmatpush1.msra.mxu0 %v2616
    %2736 = vmatprep.subr.mxu0 0.0
    %2737 = vmatpush1.msra.mxu0 %v2617
    %2738 = vmatprep.subr.mxu0 0.0
    %2739 = vmatpush1.msra.mxu0 %v2618
    %2740 = vmatprep.subr.mxu0 0.0
    %2741 = vmatpush1.msra.mxu0 %v2619
    %2742 = vmatprep.subr.mxu0 0.0
    %2743 = vmatpush1.msra.mxu0 0.0
    %2744 = vmatprep.subr.mxu0 0.0
    %2745 = vmatpush1.msra.mxu0 0.0
    %2746 = vmatprep.subr.mxu0 0.0
    %2747 = vmatpush1.msra.mxu0 0.0
    %2748 = vmatprep.subr.mxu0 0.0
    %2749 = vmatpush1.msra.mxu0 0.0
    %2750 = vmatprep.subr.mxu0 0.0
    %2751 = vmatpush1.msra.mxu0 0.0
    %2752 = vmatprep.subr.mxu0 0.0
    %2753 = vmatpush1.msra.mxu0 0.0
    %2754 = vmatprep.subr.mxu0 0.0
    %2755 = vmatpush1.msra.mxu0 0.0
    %2756 = vmatprep.subr.mxu0 0.0
    %2757 = vmatpush1.msra.mxu0 0.0
    %2758 = vmatprep.subr.mxu0 0.0
    %2759 = vmatpush1.msra.mxu0 0.0
    %2760 = vmatprep.subr.mxu0 0.0
    %2761 = vmatpush1.msra.mxu0 0.0
    %2762 = vmatprep.subr.mxu0 0.0
    %2763 = vmatpush1.msra.mxu0 0.0
    %2764 = vmatprep.subr.mxu0 0.0
    %2765 = vmatpush1.msra.mxu0 0.0
    %2766 = vmatprep.subr.mxu0 0.0
    %2767 = vmatpush1.msra.mxu0 0.0
    %2768 = vmatprep.subr.mxu0 0.0
    %2769 = vmatpush1.msra.mxu0 0.0
    %2770 = vmatprep.subr.mxu0 0.0
    %2771 = vmatpush1.msra.mxu0 0.0
    %2772 = vmatprep.subr.mxu0 0.0
    %2773 = vmatpush1.msra.mxu0 0.0
    %2774 = vmatprep.subr.mxu0 0.0
    %2775 = vmatpush1.msra.mxu0 0.0
    %2776 = vmatprep.subr.mxu0 0.0
    %2777 = vmatpush1.msra.mxu0 0.0
    %2778 = vmatprep.subr.mxu0 0.0
    %2779 = vmatpush1.msra.mxu0 0.0
    %2780 = vmatprep.subr.mxu0 0.0
    %2781 = vmatpush1.msra.mxu0 0.0
    %2782 = vmatprep.subr.mxu0 0.0
    %2783 = vmatpush1.msra.mxu0 0.0
    %2784 = vmatprep.subr.mxu0 0.0
    %2785 = vmatpush1.msra.mxu0 0.0
    %2786 = vmatprep.subr.mxu0 0.0
    %2787 = vmatpush1.msra.mxu0 0.0
    %2788 = vmatprep.subr.mxu0 0.0
    %2789 = vmatpush1.msra.mxu0 0.0
    %2790 = vmatprep.subr.mxu0 0.0
    %2791 = vmatpush1.msra.mxu0 0.0
    %2792 = vmatprep.subr.mxu0 0.0
    %2793 = vmatpush1.msra.mxu0 0.0
    %2794 = vmatprep.subr.mxu0 0.0
    %2795 = vmatpush1.msra.mxu0 0.0
    %2796 = vmatprep.subr.mxu0 0.0
    %2797 = vmatpush1.msra.mxu0 0.0
    %2798 = vmatprep.mubr.f32.mxu0 0.0
    %2799 = vmatmul.mubr.f32.gmra.mrb[0].mxu0 %v2723
    %v2800 = vpop.f32.mrb[0].mxu0
    %v2801 = vadd.f32 %v2704, %v2800
    %v2802 = vpop.f32.mrb[0].mxu0
    %2803 = vmatprep.mubr.f32.mxu0 0.0
    %2804 = vmatmul.mubr.f32.gmra.mrb[0].mxu0 %v2726
    %v2805 = vpop.f32.mrb[0].mxu0
    %v2806 = vadd.f32 %v2709, %v2805
    %v2807 = vpop.f32.mrb[0].mxu0
    %2808 = vmatprep.mubr.f32.mxu0 0.0
    %2809 = vmatmul.mubr.f32.gmra.mrb[0].mxu0 %v2729
    %v2810 = vpop.f32.mrb[0].mxu0
    %v2811 = vadd.f32 %v2714, %v2810
    %v2812 = vpop.f32.mrb[0].mxu0
    %2813 = vmatprep.mubr.f32.mxu0 0.0
    %2814 = vmatmul.mubr.f32.gmra.mrb[0].mxu0 %v2732
    %v2815 = vpop.f32.mrb[0].mxu0
    %v2816 = vadd.f32 %v2719, %v2815
    %v2817 = vpop.f32.mrb[0].mxu0
    %2818 = vdwg.mxu0
    %v2819 = vlaneseq
    %v2820 = vshrl.u32 %v2819, 7
    %v2821 = vsub.s32 6, %v2820
    %v2822 = vrot.slane %v1643, %v2821
    %v2823 = vadd.f32 %v2801, %v2822
    %v2824 = vadd.f32 %v2806, %v2822
    %v2825 = vadd.f32 %v2811, %v2822
    %v2826 = vadd.f32 %v2816, %v2822
    %v2827 = vadd.f32 %v2823, %v1638
    %v2828 = vadd.f32 %v2824, %v1639
    %v2829 = vadd.f32 %v2825, %v1640
    %v2830 = vadd.f32 %v2826, %v1641
    %v2831 = vsel %vm53, %v2827, 0.0
    %2832 = vadd.xlane.f32.xlu0 %v2831
    %v2833 = vpop.xlane.xlu0 %2832
    %v2834 = vsel %vm53, %v2828, 0.0
    %2835 = vadd.xlane.f32.xlu0 %v2834
    %v2836 = vpop.xlane.xlu0 %2835
    %v2837 = vsel %vm53, %v2829, 0.0
    %2838 = vadd.xlane.f32.xlu0 %v2837
    %v2839 = vpop.xlane.xlu0 %2838
    %v2840 = vsel %vm53, %v2830, 0.0
    %2841 = vadd.xlane.f32.xlu0 %v2840
    %v2842 = vpop.xlane.xlu0 %2841
    %v2843 = vmul.f32 %v2833, %v1239
    %v2844 = vmul.f32 %v2836, %v1239
    %v2845 = vmul.f32 %v2839, %v1239
    %v2846 = vmul.f32 %v2842, %v1239
    %v2847 = vmul.f32 %v2827, %v2827
    %v2848 = vmul.f32 %v2828, %v2828
    %v2849 = vmul.f32 %v2829, %v2829
    %v2850 = vmul.f32 %v2830, %v2830
    %v2851 = vsel %vm53, %v2847, 0.0
    %2852 = vadd.xlane.f32.xlu0 %v2851
    %v2853 = vpop.xlane.xlu0 %2852
    %v2854 = vsel %vm53, %v2848, 0.0
    %2855 = vadd.xlane.f32.xlu0 %v2854
    %v2856 = vpop.xlane.xlu0 %2855
    %v2857 = vsel %vm53, %v2849, 0.0
    %2858 = vadd.xlane.f32.xlu0 %v2857
    %v2859 = vpop.xlane.xlu0 %2858
    %v2860 = vsel %vm53, %v2850, 0.0
    %2861 = vadd.xlane.f32.xlu0 %v2860
    %v2862 = vpop.xlane.xlu0 %2861
    %v2863 = vmul.f32 %v2853, %v1239
    %v2864 = vmul.f32 %v2856, %v1239
    %v2865 = vmul.f32 %v2859, %v1239
    %v2866 = vmul.f32 %v2862, %v1239
    %v2867 = vmul.f32 %v2843, %v2843
    %v2868 = vmul.f32 %v2844, %v2844
    %v2869 = vmul.f32 %v2845, %v2845
    %v2870 = vmul.f32 %v2846, %v2846
    %v2871 = vsub.f32 %v2863, %v2867
    %v2872 = vsub.f32 %v2864, %v2868
    %v2873 = vsub.f32 %v2865, %v2869
    %v2874 = vsub.f32 %v2866, %v2870
    %v2875 = vmax.f32 %v2871, 0.0
    %v2876 = vmax.f32 %v2872, 0.0
    %v2877 = vmax.f32 %v2873, 0.0
    %v2878 = vmax.f32 %v2874, 0.0
    %v2879 = vsub.f32 %v2827, %v2843
    %v2880 = vsub.f32 %v2828, %v2844
    %v2881 = vsub.f32 %v2829, %v2845
    %v2882 = vsub.f32 %v2830, %v2846
    %v2883 = vadd.f32 %v2875, 1e-12
    %v2884 = vadd.f32 %v2876, 1e-12
    %v2885 = vadd.f32 %v2877, 1e-12
    %v2886 = vadd.f32 %v2878, 1e-12
    %v2887 = vrsqrt.pop %v2883
    %v2888 = vrsqrt.pop %v2884
    %v2889 = vrsqrt.pop %v2885
    %v2890 = vrsqrt.pop %v2886
    %v2891 = vmul.f32 %v2879, %v2887
    %v2892 = vmul.f32 %v2880, %v2888
    %v2893 = vmul.f32 %v2881, %v2889
    %v2894 = vmul.f32 %v2882, %v2890
    %v2895 = vlaneseq
    %v2896 = vshrl.u32 %v2895, 7
    %v2897 = vsub.s32 7, %v2896
    %v2898 = vrot.slane %v1643, %v2897
    %v2899 = vmul.f32 %v2891, %v2898
    %v2900 = vmul.f32 %v2892, %v2898
    %v2901 = vmul.f32 %v2893, %v2898
    %v2902 = vmul.f32 %v2894, %v2898
    %v2903 = vlaneseq
    %v2904 = vshrl.u32 %v2903, 7
    %v2905 = vsub.s32 0, %v2904
    %v2906 = vrot.slane %v1644, %v2905
    %v2907 = vadd.f32 %v2899, %v2906
    %v2908 = vadd.f32 %v2900, %v2906
    %v2909 = vadd.f32 %v2901, %v2906
    %v2910 = vadd.f32 %v2902, %v2906
    %s2911 = scalar_lea.vmem %s4, 64
    %v2912 = vld [vmem:[%s2911] sm:$0xff]
    %v2913 = vld [vmem:[%s2911 + $0x8] sm:$0xff]
    %v2914 = vld [vmem:[%s2911 + $0x10] sm:$0xff]
    %v2915 = vld [vmem:[%s2911 + $0x18] sm:$0xff]
    %v2916 = vld [vmem:[%s2911 + $0x20] sm:$0xff]
    %v2917 = vld [vmem:[%s2911 + $0x28] sm:$0xff]
    %v2918 = vld [vmem:[%s2911 + $0x30] sm:$0xff]
    %v2919 = vld [vmem:[%s2911 + $0x38] sm:$0xff]
    %v2920 = vlaneseq
    %v2921 = vshrl.u32 %v2920, 7
    %v2922 = vsub.s32 1, %v2921
    %v2923 = vrot.slane %v1644, %v2922
    %v2925 = vsel %vm53, %v2907, 0
    %v2928 = vsel %vm53, %v2908, 0
    %v2931 = vsel %vm53, %v2909, 0
    %v2934 = vsel %vm53, %v2910, 0
    %2936 = vmatprep.subr.mxu0 0.0
    %2937 = vmatpush1.msra.mxu0 %v2912
    %2938 = vmatprep.subr.mxu0 0.0
    %2939 = vmatpush1.msra.mxu0 %v2913
    %2940 = vmatprep.subr.mxu0 0.0
    %2941 = vmatpush1.msra.mxu0 %v2914
    %2942 = vmatprep.subr.mxu0 0.0
    %2943 = vmatpush1.msra.mxu0 %v2915
    %2944 = vmatprep.subr.mxu0 0.0
    %2945 = vmatpush1.msra.mxu0 %v2916
    %2946 = vmatprep.subr.mxu0 0.0
    %2947 = vmatpush1.msra.mxu0 %v2917
    %2948 = vmatprep.subr.mxu0 0.0
    %2949 = vmatpush1.msra.mxu0 %v2918
    %2950 = vmatprep.subr.mxu0 0.0
    %2951 = vmatpush1.msra.mxu0 %v2919
    %2952 = vmatprep.subr.mxu0 0.0
    %2953 = vmatpush1.msra.mxu0 0.0
    %2954 = vmatprep.subr.mxu0 0.0
    %2955 = vmatpush1.msra.mxu0 0.0
    %2956 = vmatprep.subr.mxu0 0.0
    %2957 = vmatpush1.msra.mxu0 0.0
    %2958 = vmatprep.subr.mxu0 0.0
    %2959 = vmatpush1.msra.mxu0 0.0
    %2960 = vmatprep.subr.mxu0 0.0
    %2961 = vmatpush1.msra.mxu0 0.0
    %2962 = vmatprep.subr.mxu0 0.0
    %2963 = vmatpush1.msra.mxu0 0.0
    %2964 = vmatprep.subr.mxu0 0.0
    %2965 = vmatpush1.msra.mxu0 0.0
    %2966 = vmatprep.subr.mxu0 0.0
    %2967 = vmatpush1.msra.mxu0 0.0
    %2968 = vmatprep.subr.mxu0 0.0
    %2969 = vmatpush1.msra.mxu0 0.0
    %2970 = vmatprep.subr.mxu0 0.0
    %2971 = vmatpush1.msra.mxu0 0.0
    %2972 = vmatprep.subr.mxu0 0.0
    %2973 = vmatpush1.msra.mxu0 0.0
    %2974 = vmatprep.subr.mxu0 0.0
    %2975 = vmatpush1.msra.mxu0 0.0
    %2976 = vmatprep.subr.mxu0 0.0
    %2977 = vmatpush1.msra.mxu0 0.0
    %2978 = vmatprep.subr.mxu0 0.0
    %2979 = vmatpush1.msra.mxu0 0.0
    %2980 = vmatprep.subr.mxu0 0.0
    %2981 = vmatpush1.msra.mxu0 0.0
    %2982 = vmatprep.subr.mxu0 0.0
    %2983 = vmatpush1.msra.mxu0 0.0
    %2984 = vmatprep.subr.mxu0 0.0
    %2985 = vmatpush1.msra.mxu0 0.0
    %2986 = vmatprep.subr.mxu0 0.0
    %2987 = vmatpush1.msra.mxu0 0.0
    %2988 = vmatprep.subr.mxu0 0.0
    %2989 = vmatpush1.msra.mxu0 0.0
    %2990 = vmatprep.subr.mxu0 0.0
    %2991 = vmatpush1.msra.mxu0 0.0
    %2992 = vmatprep.subr.mxu0 0.0
    %2993 = vmatpush1.msra.mxu0 0.0
    %2994 = vmatprep.subr.mxu0 0.0
    %2995 = vmatpush1.msra.mxu0 0.0
    %2996 = vmatprep.subr.mxu0 0.0
    %2997 = vmatpush1.msra.mxu0 0.0
    %2998 = vmatprep.subr.mxu0 0.0
    %2999 = vmatpush1.msra.mxu0 0.0
    %3000 = vmatprep.mubr.f32.mxu0 0.0
    %3001 = vmatmul.mubr.f32.gmra.mrb[0].mxu0 %v2925
    %v3002 = vpop.f32.mrb[0].mxu0
    %v3003 = vadd.f32 %v2923, %v3002
    %v3004 = vpop.f32.mrb[0].mxu0
    %3005 = vmatprep.mubr.f32.mxu0 0.0
    %3006 = vmatmul.mubr.f32.gmra.mrb[0].mxu0 %v2928
    %v3007 = vpop.f32.mrb[0].mxu0
    %v3008 = vadd.f32 %v2923, %v3007
    %v3009 = vpop.f32.mrb[0].mxu0
    %3010 = vmatprep.mubr.f32.mxu0 0.0
    %3011 = vmatmul.mubr.f32.gmra.mrb[0].mxu0 %v2931
    %v3012 = vpop.f32.mrb[0].mxu0
    %v3013 = vadd.f32 %v2923, %v3012
    %v3014 = vpop.f32.mrb[0].mxu0
    %3015 = vmatprep.mubr.f32.mxu0 0.0
    %3016 = vmatmul.mubr.f32.gmra.mrb[0].mxu0 %v2934
    %v3017 = vpop.f32.mrb[0].mxu0
    %v3018 = vadd.f32 %v2923, %v3017
    %v3019 = vpop.f32.mrb[0].mxu0
    %3020 = vdwg.mxu0
    %v3021 = vmul.f32 %v3003, 0.5
    %v3022 = vmul.f32 %v3008, 0.5
    %v3023 = vmul.f32 %v3013, 0.5
    %v3024 = vmul.f32 %v3018, 0.5
    %v3025 = vmul.f32 %v3003, 0.044715
    %v3026 = vmul.f32 %v3008, 0.044715
    %v3027 = vmul.f32 %v3013, 0.044715
    %v3028 = vmul.f32 %v3018, 0.044715
    %v3029 = vmul.f32 %v3025, %v3003
    %v3030 = vmul.f32 %v3026, %v3008
    %v3031 = vmul.f32 %v3027, %v3013
    %v3032 = vmul.f32 %v3028, %v3018
    %v3033 = vmul.f32 %v3029, %v3003
    %v3034 = vmul.f32 %v3030, %v3008
    %v3035 = vmul.f32 %v3031, %v3013
    %v3036 = vmul.f32 %v3032, %v3018
    %v3037 = vadd.f32 %v3003, %v3033
    %v3038 = vadd.f32 %v3008, %v3034
    %v3039 = vadd.f32 %v3013, %v3035
    %v3040 = vadd.f32 %v3018, %v3036
    %v3041 = vmul.f32 %v3037, 0.7978846
    %v3042 = vmul.f32 %v3038, 0.7978846
    %v3043 = vmul.f32 %v3039, 0.7978846
    %v3044 = vmul.f32 %v3040, 0.7978846
    %v3045 = vtanh.pop %v3041
    %v3046 = vtanh.pop %v3042
    %v3047 = vtanh.pop %v3043
    %v3048 = vtanh.pop %v3044
    %v3049 = vadd.f32 %v3045, 1.0
    %v3050 = vadd.f32 %v3046, 1.0
    %v3051 = vadd.f32 %v3047, 1.0
    %v3052 = vadd.f32 %v3048, 1.0
    %v3053 = vmul.f32 %v3021, %v3049
    %v3054 = vmul.f32 %v3022, %v3050
    %v3055 = vmul.f32 %v3023, %v3051
    %v3056 = vmul.f32 %v3024, %v3052
    %s3057 = scalar_lea.vmem %s5, 128
    %v3058 = vld [vmem:[%s3057] sm:$0xff]
    %v3059 = vld [vmem:[%s3057 + $0x8] sm:$0xff]
    %v3060 = vld [vmem:[%s3057 + $0x10] sm:$0xff]
    %v3061 = vld [vmem:[%s3057 + $0x18] sm:$0xff]
    %v3062 = vld [vmem:[%s3057 + $0x20] sm:$0xff]
    %v3063 = vld [vmem:[%s3057 + $0x28] sm:$0xff]
    %v3064 = vld [vmem:[%s3057 + $0x30] sm:$0xff]
    %v3065 = vld [vmem:[%s3057 + $0x38] sm:$0xff]
    %v3066 = vld [vmem:[%s3057 + $0x40] sm:$0xff]
    %v3067 = vld [vmem:[%s3057 + $0x48] sm:$0xff]
    %v3068 = vld [vmem:[%s3057 + $0x50] sm:$0xff]
    %v3069 = vld [vmem:[%s3057 + $0x58] sm:$0xff]
    %v3070 = vld [vmem:[%s3057 + $0x60] sm:$0xff]
    %v3071 = vld [vmem:[%s3057 + $0x68] sm:$0xff]
    %v3072 = vld [vmem:[%s3057 + $0x70] sm:$0xff]
    %v3073 = vld [vmem:[%s3057 + $0x78] sm:$0xff]
    %v3074 = vlaneseq
    %v3075 = vshrl.u32 %v3074, 7
    %v3076 = vsub.s32 2, %v3075
    %v3077 = vrot.slane %v1644, %v3076
    %3078 = vmatprep.subr.mxu0 0.0
    %3079 = vmatpush1.msra.mxu0 %v3058
    %3080 = vmatprep.subr.mxu0 0.0
    %3081 = vmatpush1.msra.mxu0 %v3059
    %3082 = vmatprep.subr.mxu0 0.0
    %3083 = vmatpush1.msra.mxu0 %v3060
    %3084 = vmatprep.subr.mxu0 0.0
    %3085 = vmatpush1.msra.mxu0 %v3061
    %3086 = vmatprep.subr.mxu0 0.0
    %3087 = vmatpush1.msra.mxu0 %v3062
    %3088 = vmatprep.subr.mxu0 0.0
    %3089 = vmatpush1.msra.mxu0 %v3063
    %3090 = vmatprep.subr.mxu0 0.0
    %3091 = vmatpush1.msra.mxu0 %v3064
    %3092 = vmatprep.subr.mxu0 0.0
    %3093 = vmatpush1.msra.mxu0 %v3065
    %3094 = vmatprep.subr.mxu0 0.0
    %3095 = vmatpush1.msra.mxu0 %v3066
    %3096 = vmatprep.subr.mxu0 0.0
    %3097 = vmatpush1.msra.mxu0 %v3067
    %3098 = vmatprep.subr.mxu0 0.0
    %3099 = vmatpush1.msra.mxu0 %v3068
    %3100 = vmatprep.subr.mxu0 0.0
    %3101 = vmatpush1.msra.mxu0 %v3069
    %3102 = vmatprep.subr.mxu0 0.0
    %3103 = vmatpush1.msra.mxu0 %v3070
    %3104 = vmatprep.subr.mxu0 0.0
    %3105 = vmatpush1.msra.mxu0 %v3071
    %3106 = vmatprep.subr.mxu0 0.0
    %3107 = vmatpush1.msra.mxu0 %v3072
    %3108 = vmatprep.subr.mxu0 0.0
    %3109 = vmatpush1.msra.mxu0 %v3073
    %3110 = vmatprep.subr.mxu0 0.0
    %3111 = vmatpush1.msra.mxu0 0.0
    %3112 = vmatprep.subr.mxu0 0.0
    %3113 = vmatpush1.msra.mxu0 0.0
    %3114 = vmatprep.subr.mxu0 0.0
    %3115 = vmatpush1.msra.mxu0 0.0
    %3116 = vmatprep.subr.mxu0 0.0
    %3117 = vmatpush1.msra.mxu0 0.0
    %3118 = vmatprep.subr.mxu0 0.0
    %3119 = vmatpush1.msra.mxu0 0.0
    %3120 = vmatprep.subr.mxu0 0.0
    %3121 = vmatpush1.msra.mxu0 0.0
    %3122 = vmatprep.subr.mxu0 0.0
    %3123 = vmatpush1.msra.mxu0 0.0
    %3124 = vmatprep.subr.mxu0 0.0
    %3125 = vmatpush1.msra.mxu0 0.0
    %3126 = vmatprep.subr.mxu0 0.0
    %3127 = vmatpush1.msra.mxu0 0.0
    %3128 = vmatprep.subr.mxu0 0.0
    %3129 = vmatpush1.msra.mxu0 0.0
    %3130 = vmatprep.subr.mxu0 0.0
    %3131 = vmatpush1.msra.mxu0 0.0
    %3132 = vmatprep.subr.mxu0 0.0
    %3133 = vmatpush1.msra.mxu0 0.0
    %3134 = vmatprep.subr.mxu0 0.0
    %3135 = vmatpush1.msra.mxu0 0.0
    %3136 = vmatprep.subr.mxu0 0.0
    %3137 = vmatpush1.msra.mxu0 0.0
    %3138 = vmatprep.subr.mxu0 0.0
    %3139 = vmatpush1.msra.mxu0 0.0
    %3140 = vmatprep.subr.mxu0 0.0
    %3141 = vmatpush1.msra.mxu0 0.0
    %3142 = vmatprep.mubr.f32.mxu0 0.0
    %3143 = vmatmul.mubr.f32.gmra.mrb[0].mxu0 %v3053
    %v3144 = vpop.f32.mrb[0].mxu0
    %v3145 = vadd.f32 %v3077, %v3144
    %v3146 = vpop.f32.mrb[0].mxu0
    %3147 = vmatprep.mubr.f32.mxu0 0.0
    %3148 = vmatmul.mubr.f32.gmra.mrb[0].mxu0 %v3054
    %v3149 = vpop.f32.mrb[0].mxu0
    %v3150 = vadd.f32 %v3077, %v3149
    %v3151 = vpop.f32.mrb[0].mxu0
    %3152 = vmatprep.mubr.f32.mxu0 0.0
    %3153 = vmatmul.mubr.f32.gmra.mrb[0].mxu0 %v3055
    %v3154 = vpop.f32.mrb[0].mxu0
    %v3155 = vadd.f32 %v3077, %v3154
    %v3156 = vpop.f32.mrb[0].mxu0
    %3157 = vmatprep.mubr.f32.mxu0 0.0
    %3158 = vmatmul.mubr.f32.gmra.mrb[0].mxu0 %v3056
    %v3159 = vpop.f32.mrb[0].mxu0
    %v3160 = vadd.f32 %v3077, %v3159
    %v3161 = vpop.f32.mrb[0].mxu0
    %3162 = vdwg.mxu0
    %v3163 = vadd.f32 %v3145, %v2907
    %v3164 = vadd.f32 %v3150, %v2908
    %v3165 = vadd.f32 %v3155, %v2909
    %v3166 = vadd.f32 %v3160, %v2910
    %v3167 = vsel %vm53, %v3163, 0.0
    %3168 = vadd.xlane.f32.xlu0 %v3167
    %v3169 = vpop.xlane.xlu0 %3168
    %v3170 = vsel %vm53, %v3164, 0.0
    %3171 = vadd.xlane.f32.xlu0 %v3170
    %v3172 = vpop.xlane.xlu0 %3171
    %v3173 = vsel %vm53, %v3165, 0.0
    %3174 = vadd.xlane.f32.xlu0 %v3173
    %v3175 = vpop.xlane.xlu0 %3174
    %v3176 = vsel %vm53, %v3166, 0.0
    %3177 = vadd.xlane.f32.xlu0 %v3176
    %v3178 = vpop.xlane.xlu0 %3177
    %v3179 = vmul.f32 %v3169, %v1239
    %v3180 = vmul.f32 %v3172, %v1239
    %v3181 = vmul.f32 %v3175, %v1239
    %v3182 = vmul.f32 %v3178, %v1239
    %v3183 = vmul.f32 %v3163, %v3163
    %v3184 = vmul.f32 %v3164, %v3164
    %v3185 = vmul.f32 %v3165, %v3165
    %v3186 = vmul.f32 %v3166, %v3166
    %v3187 = vsel %vm53, %v3183, 0.0
    %3188 = vadd.xlane.f32.xlu0 %v3187
    %v3189 = vpop.xlane.xlu0 %3188
    %v3190 = vsel %vm53, %v3184, 0.0
    %3191 = vadd.xlane.f32.xlu0 %v3190
    %v3192 = vpop.xlane.xlu0 %3191
    %v3193 = vsel %vm53, %v3185, 0.0
    %3194 = vadd.xlane.f32.xlu0 %v3193
    %v3195 = vpop.xlane.xlu0 %3194
    %v3196 = vsel %vm53, %v3186, 0.0
    %3197 = vadd.xlane.f32.xlu0 %v3196
    %v3198 = vpop.xlane.xlu0 %3197
    %v3199 = vmul.f32 %v3189, %v1239
    %v3200 = vmul.f32 %v3192, %v1239
    %v3201 = vmul.f32 %v3195, %v1239
    %v3202 = vmul.f32 %v3198, %v1239
    %v3203 = vmul.f32 %v3179, %v3179
    %v3204 = vmul.f32 %v3180, %v3180
    %v3205 = vmul.f32 %v3181, %v3181
    %v3206 = vmul.f32 %v3182, %v3182
    %v3207 = vsub.f32 %v3199, %v3203
    %v3208 = vsub.f32 %v3200, %v3204
    %v3209 = vsub.f32 %v3201, %v3205
    %v3210 = vsub.f32 %v3202, %v3206
    %v3211 = vmax.f32 %v3207, 0.0
    %v3212 = vmax.f32 %v3208, 0.0
    %v3213 = vmax.f32 %v3209, 0.0
    %v3214 = vmax.f32 %v3210, 0.0
    %v3215 = vsub.f32 %v3163, %v3179
    %v3216 = vsub.f32 %v3164, %v3180
    %v3217 = vsub.f32 %v3165, %v3181
    %v3218 = vsub.f32 %v3166, %v3182
    %v3219 = vadd.f32 %v3211, 1e-12
    %v3220 = vadd.f32 %v3212, 1e-12
    %v3221 = vadd.f32 %v3213, 1e-12
    %v3222 = vadd.f32 %v3214, 1e-12
    %v3223 = vrsqrt.pop %v3219
    %v3224 = vrsqrt.pop %v3220
    %v3225 = vrsqrt.pop %v3221
    %v3226 = vrsqrt.pop %v3222
    %v3227 = vmul.f32 %v3215, %v3223
    %v3228 = vmul.f32 %v3216, %v3224
    %v3229 = vmul.f32 %v3217, %v3225
    %v3230 = vmul.f32 %v3218, %v3226
    %v3231 = vlaneseq
    %v3232 = vshrl.u32 %v3231, 7
    %v3233 = vsub.s32 3, %v3232
    %v3234 = vrot.slane %v1644, %v3233
    %v3235 = vmul.f32 %v3227, %v3234
    %v3236 = vmul.f32 %v3228, %v3234
    %v3237 = vmul.f32 %v3229, %v3234
    %v3238 = vmul.f32 %v3230, %v3234
    %v3239 = vlaneseq
    %v3240 = vshrl.u32 %v3239, 7
    %v3241 = vsub.s32 4, %v3240
    %v3242 = vrot.slane %v1644, %v3241
    %v3243 = vadd.f32 %v3235, %v3242
    %v3244 = vadd.f32 %v3236, %v3242
    %v3245 = vadd.f32 %v3237, %v3242
    %v3246 = vadd.f32 %v3238, %v3242
    %3247 = vst.msk [vmem:[#allocation2] sm:$0xff] %vm53, %v3243
    %3248 = vst.msk [vmem:[#allocation2 + $0x8] sm:$0xff] %vm53, %v3244
    %3249 = vst.msk [vmem:[#allocation2 + $0x10] sm:$0xff] %vm53, %v3245
    %3250 = vst.msk [vmem:[#allocation2 + $0x18] sm:$0xff] %vm53, %v3246
    // Predicated region
    $region30: #{cadirec_forward.1} parent=1 // pred_check
      _
    $region31: #{cadirec_forward.1} parent=1 // pred_check_branch
      %3252 = sbr.rel (0) target = $region33
    $region32: #{cadirec_forward.1} parent=1 // pred_region
      %s3254 = ssub.s32 512, 512
      %3255 = vsyncadd [#allocation3], %s3254
      %s3256 = sshll.u32 [#allocation2], 4
      %s3257 = int_to_ptr.vmem [resolvable:$true] %s3256
      %3262 = dma.vmem_to_hbm [thread:$0]  %s3257, 512, %s7, [#allocation3], 128, 128, 8
    $region33: #{cadirec_forward.1} parent=1 // pred_fallthru
      _
    // Predicated region
    $region34: #{cadirec_forward.1} parent=1 // pred_check
      _
    $region35: #{cadirec_forward.1} parent=1 // pred_check_branch
      %3264 = sbr.rel (0) target = $region37
    $region36: #{cadirec_forward.1} parent=1 // pred_region
      %3265 = dma.done [#allocation3], 512
    $region37: #{cadirec_forward.1} parent=1 // pred_fallthru
      _
    %3266 = vsyncpa [#allocation3], 1

</llo_original>
